<compile_context>
chip_gen: v6e
topology: v6e:2x2x1
jax: 0.10.0
libtpu: 0.0.40
codegen_flags: <defaults>
</compile_context>

<pallas_src>
import functools

import jax
import jax.numpy as jnp
from jax import lax
from jax.experimental import pallas as pl
from jax.experimental.pallas import tpu as pltpu

_INV_SQRT2 = 0.7071067811865476
_LANE = 128
_MIB = 1024 * 1024


def _round_up(x, m):
    return (x + m - 1) // m * m


@functools.lru_cache(maxsize=None)
def _vmem_budget():
    """Physical VMEM per core minus headroom for Mosaic-internal scratch.

    v5e/v6e: 128 MiB -> ~112 MiB budget; v7x: 64 MiB -> ~48 MiB budget.
    Falls back to a conservative (v7x-sized) figure if the query is unavailable.
    """
    cap = 64 * _MIB
    try:
        cap = int(getattr(pltpu.get_tpu_info(), "vmem_capacity_bytes", cap))
    except Exception:
        pass
    return int(max(cap - 16 * _MIB, 24 * _MIB))


def _erf(x, *, refine=True):
    # Abramowitz & Stegun 7.1.26 polynomial (|err| < 1.5e-7 ~ f32 eps).
    a1, a2, a3, a4, a5 = (0.254829592, -0.284496736, 1.421413741,
                          -1.453152027, 1.061405429)
    p = 0.3275911
    s = jnp.where(x < 0.0, -1.0, 1.0)
    ax = jnp.abs(x)
    d = 1.0 + p * ax
    # EUP reciprocal estimate; one Newton step only when f32 accuracy is needed
    # (for bf16 outputs the raw ~12-bit estimate is already below bf16 rounding).
    t = pl.reciprocal(d, approx=True)
    if refine:
        t = t * (2.0 - d * t)
    poly = ((((a5 * t + a4) * t + a3) * t + a2) * t + a1) * t
    return s * (1.0 - poly * jnp.exp(-ax * ax))


def _gelu(x, *, refine=True):
    # exact (erf-based) GELU, matching torch.nn.GELU() default
    return 0.5 * x * (1.0 + _erf(x * _INV_SQRT2, refine=refine))


# ----------------------------------------------------------------------------
# Kernel 1: GEMM + (bias, GELU, BN-affine) — used for the patch-embed conv.
# ----------------------------------------------------------------------------
def _matmul_gelu_bn_kernel(x_ref, w_ref, aff_ref, o_ref, *, refine):
    y = jnp.dot(x_ref[...], w_ref[...], preferred_element_type=jnp.float32)
    y = _gelu(y + aff_ref[0], refine=refine)       # aff rows: [bias, scale, shift]
    o_ref[...] = (y * aff_ref[1] + aff_ref[2]).astype(o_ref.dtype)


def _pick_tile_m(M, target):
    """Prefer a divisor of M (multiple of 8, <= target) so no pad+slice copy is
    needed; otherwise pad M up to a multiple of an 8-aligned tile."""
    best = None
    d = 8
    while d <= min(M, target):
        if M % d == 0:
            best = d
        d += 8
    if best is not None:
        return best, M
    tm = max(_round_up(min(target, M), 8), 8)
    return tm, _round_up(M, tm)


def matmul_gelu_bn(x, w, aff, *, out_dtype=None):
    """y = gelu(x @ w + aff[0]) * aff[1] + aff[2];  aff packed as [3, N] (f32)."""
    M, K = x.shape
    _, N = w.shape
    assert N % _LANE == 0, "output channels must be a multiple of 128"
    out_dtype = out_dtype or x.dtype
    budget = _vmem_budget()
    elt = jnp.dtype(x.dtype).itemsize

    # N (output-channel) tile so the weight block never needs full (K, N) residency.
    if N % 512 == 0 and N >= 512:
        tn = 512
    elif N % 256 == 0 and N >= 256:
        tn = 256
    else:
        tn = _LANE

    # Large M tile (K is tiny for patch-embed so the MXU is K-underfilled; the
    # available lever is amortizing the ~0.35us/step overhead with fewer steps).
    target_m = 2048 if budget > 80 * _MIB else 1024

    def blocks_bytes(tm_):
        return (2 * ((tm_ * K + K * tn + tm_ * tn) * elt + 3 * tn * 4)
                + 2 * tm_ * tn * 4          # f32 GEMM result + epilogue temporaries
                + 8 * _MIB)                 # Mosaic-internal slack

    tm, m_pad = _pick_tile_m(M, target_m)
    while tm > 8 and blocks_bytes(tm) > budget:
        tm, m_pad = _pick_tile_m(M, max(tm // 2, 8))
    if m_pad != M:
        x = jnp.pad(x, ((0, m_pad - M), (0, 0)))
    vmem = int(min(max(blocks_bytes(tm), 32 * _MIB), budget))
    refine = jnp.dtype(out_dtype) != jnp.dtype(jnp.bfloat16)

    out = pl.pallas_call(
        functools.partial(_matmul_gelu_bn_kernel, refine=refine),
        out_shape=jax.ShapeDtypeStruct((m_pad, N), out_dtype),
        grid_spec=pltpu.PrefetchScalarGridSpec(
            num_scalar_prefetch=0,
            grid=(m_pad // tm, N // tn),
            in_specs=[
                pl.BlockSpec((tm, K), lambda i, j: (i, 0)),
                pl.BlockSpec((K, tn), lambda i, j: (0, j)),
                pl.BlockSpec((3, tn), lambda i, j: (0, j)),
            ],
            out_specs=pl.BlockSpec((tm, tn), lambda i, j: (i, j)),
        ),
        compiler_params=pltpu.CompilerParams(
            dimension_semantics=("parallel", "parallel"),
            vmem_limit_bytes=vmem),
    )(x, w, aff)
    return out[:M] if m_pad != M else out


# ----------------------------------------------------------------------------
# Kernel 2: fused mixer layer
#   depthwise KxK 'same' conv + bias + GELU + BN + residual
#   -> 1x1 pointwise GEMM + bias + GELU + BN
# Grid: (batch, H row-bands).  Halo rows arrive via thin clamped BlockSpecs.
# ----------------------------------------------------------------------------
def _mixer_layer_kernel(x_ref, top_ref, bot_ref, dww_ref, dwa_ref,
                        pww_ref, pwa_ref, o_ref, xpad_ref, *,
                        ksize, band_h, width, refine):
    khalf = (ksize - 1) // 2
    band = pl.program_id(1)
    nbands = pl.num_programs(1)

    x = x_ref[0]                                          # [band_h, W, C], act dtype

    # Assemble the vertically padded band in a VMEM scratch kept in the activation
    # dtype (halves scratch bytes and vld/vst traffic vs f32).  Border bands get
    # zero halos via pl.when instead of multiplying DMA'd data by 0/1.
    xpad_ref[khalf:khalf + band_h] = x
    zero_halo = jnp.zeros((khalf,) + x.shape[1:], x.dtype)

    @pl.when(band > 0)
    def _():
        xpad_ref[0:khalf] = top_ref[0]

    @pl.when(band == 0)
    def _():
        xpad_ref[0:khalf] = zero_halo

    @pl.when(band < nbands - 1)
    def _():
        xpad_ref[khalf + band_h:khalf + band_h + khalf] = bot_ref[0]

    @pl.when(band == nbands - 1)
    def _():
        # Also covers nbands == 1 with H % khalf != 0, where the bottom-halo
        # BlockSpec addresses a partially out-of-range block (padded by Pallas):
        # its contents are never read because this branch overwrites with zeros.
        xpad_ref[khalf + band_h:khalf + band_h + khalf] = zero_halo

    # Depthwise KxK 'same' conv, column-major over taps: for each kernel column kx
    # sum the K vertical taps (aligned dynamic row slices of the padded band,
    # fori_loop-bounded live ranges), then apply the W shift ONCE per column on the
    # XLU and mask the image edge with a (1, W, 1) iota mask (the compares are
    # W-sized; only the select stays band-sized).
    def col_sum(kx):
        def body(ky, a):
            tap = dww_ref[ky][kx]                         # (C,) f32
            return a + xpad_ref[pl.ds(ky, band_h)].astype(jnp.float32) * tap
        init = xpad_ref[pl.ds(0, band_h)].astype(jnp.float32) * dww_ref[0][kx]
        return lax.fori_loop(1, ksize, body, init, unroll=True)

    col = lax.broadcasted_iota(jnp.int32, (1, width, 1), 1)
    acc = col_sum(khalf)                                  # center column: no shift/mask
    for kx in range(ksize):                               # static -> roll shift static
        if kx == khalf:
            continue
        dx = kx - khalf
        s = pltpu.roll(col_sum(kx), shift=(-dx) % width, axis=1)
        edge = (col + dx >= 0) & (col + dx < width)
        acc = acc + jnp.where(edge, s, 0.0)

    # depthwise epilogue: bias + GELU + BN-affine + residual
    t = _gelu(acc + dwa_ref[0], refine=refine) * dwa_ref[1] + dwa_ref[2]
    y = t + x.astype(jnp.float32)

    # fused 1x1 pointwise conv (+ bias + GELU + BN-affine) on the MXU.
    # NOTE: W is expected to be a multiple of 8 so these reshapes stay layout-free.
    w_pw = pww_ref[...]
    z = jnp.dot(y.reshape(band_h * width, -1).astype(w_pw.dtype), w_pw,
                preferred_element_type=jnp.float32)
    z = _gelu(z + pwa_ref[0], refine=refine) * pwa_ref[1] + pwa_ref[2]
    o_ref[0] = z.reshape(band_h, width, -1).astype(o_ref.dtype)


def _pick_band_height(H, khalf, max_rows, min_bands=1):
    """Largest divisor of H that is <= max_rows, gives >= min_bands bands, and
    (when multi-band) is a multiple of khalf so halo blocks stay aligned.
    Falls back to the smallest feasible divisor, then to H (single band)."""
    def feasible(d):
        return (H % d == 0 and H // d >= min_bands
                and (d == H or d % khalf == 0))
    cands = [d for d in range(1, H + 1) if feasible(d) and d <= max_rows]
    if cands:
        return max(cands)
    cands = [d for d in range(1, H + 1) if feasible(d)]
    if cands:
        return min(cands)
    return H


def mixer_layer(x, dw_taps, dw_aff, pw_w, pw_aff, *, ksize, band_rows=None):
    N, H, W, C = x.shape
    assert C % _LANE == 0, "hidden_dim must be a multiple of 128 (lane-dense)"
    assert ksize % 2 == 1 and ksize >= 3, "depthwise kernel must be odd and >= 3"
    khalf = (ksize - 1) // 2
    budget = _vmem_budget()
    elt = jnp.dtype(x.dtype).itemsize

    if band_rows is None:
        # Band height bounded by (a) a pointwise-GEMM row target, (b) the
        # per-generation VMEM budget, and (c) >= 2 parallel grid units when
        # batch == 1 so both TensorCores of a 2-TC part stay busy.
        fixed = 2 * C * C * elt + 2 * (ksize + 2) * 8 * C * 4 + 12 * _MIB
        per_row = (5 * elt + 16) * W * C      # act blocks (dbl-buf) + scratch + f32 temps
        rows_cap = max(int((budget - fixed) // max(per_row, 1)), khalf)
        target_rows = 1024 if budget > 80 * _MIB else 512
        max_rows = max(min(rows_cap, max(target_rows // max(W, 1), khalf)), 1)
        min_bands = 2 if N == 1 else 1
        band_rows = _pick_band_height(H, khalf, max_rows, min_bands=min_bands)

    assert H % band_rows == 0
    nbands = H // band_rows
    if nbands > 1:
        assert band_rows % khalf == 0, "band height must be a multiple of the halo"
    nbh = max(band_rows // khalf, 1)          # halo blocks (height khalf) per band
    last_halo_blk = pl.cdiv(H, khalf) - 1

    refine = jnp.dtype(x.dtype) != jnp.dtype(jnp.bfloat16)
    kernel = functools.partial(_mixer_layer_kernel, ksize=ksize,
                               band_h=band_rows, width=W, refine=refine)

    def mid_map(n, i):
        return (n, i, 0, 0)

    def top_map(n, i):
        return (n, jnp.maximum(i * nbh - 1, 0), 0, 0)

    def bot_map(n, i):
        return (n, jnp.minimum((i + 1) * nbh, last_halo_blk), 0, 0)

    band_e = band_rows * W * C
    est = (2 * (2 * band_e + 2 * khalf * W * C) * elt   # x/out bands + halos, dbl-buffered
           + 2 * C * C * elt                            # 1x1 weights (dbl-buffered)
           + 2 * (ksize + 2) * 8 * C * 4                # dw taps + two affine packs
           + (band_rows + 2 * khalf) * W * C * elt      # xpad scratch (act dtype)
           + 4 * band_e * 4                             # f32 temporaries (acc/colsum/y/z)
           + 8 * _MIB)                                  # Mosaic-internal slack
    vmem = int(min(max(est, 32 * _MIB), budget))

    # TODO(synk): on v7x, single-buffering the grid-invariant (C, C) pointwise
    # weight block would free a few more MiB of VMEM for larger bands.
    return pl.pallas_call(
        kernel,
        out_shape=jax.ShapeDtypeStruct((N, H, W, C), x.dtype),
        grid_spec=pltpu.PrefetchScalarGridSpec(
            num_scalar_prefetch=0,
            grid=(N, nbands),
            in_specs=[
                pl.BlockSpec((1, band_rows, W, C), mid_map),     # band (also residual)
                pl.BlockSpec((1, khalf, W, C), top_map),         # top halo rows
                pl.BlockSpec((1, khalf, W, C), bot_map),         # bottom halo rows
                pl.BlockSpec((ksize, ksize, C), lambda n, i: (0, 0, 0)),
                pl.BlockSpec((3, C), lambda n, i: (0, 0)),       # dw bias/scale/shift
                pl.BlockSpec((C, C), lambda n, i: (0, 0)),       # pointwise weights
                pl.BlockSpec((3, C), lambda n, i: (0, 0)),       # pw bias/scale/shift
            ],
            out_specs=pl.BlockSpec((1, band_rows, W, C), mid_map),
            scratch_shapes=[
                pltpu.VMEM((band_rows + 2 * khalf, W, C), x.dtype)],
        ),
        compiler_params=pltpu.CompilerParams(
            dimension_semantics=("parallel", "parallel"),
            vmem_limit_bytes=vmem),
    )(x, x, x, dw_taps, dw_aff, pw_w, pw_aff)


# ----------------------------------------------------------------------------
# Kernel 3: batched global average pool + Linear head (padded classes)
# ----------------------------------------------------------------------------
def _pool_head_kernel(x_ref, w_ref, b_ref, o_ref, *, inv_s):
    # pool in f32 so the 1/S scale stays exact even with bf16 activations
    pooled = jnp.sum(x_ref[...].astype(jnp.float32), axis=1) * inv_s     # [Nb, C]
    w = w_ref[...]
    logits = jnp.dot(pooled.astype(w.dtype), w, preferred_element_type=jnp.float32)
    o_ref[...] = (logits + b_ref[...]).astype(o_ref.dtype)


def pool_head(x_nsc, w, b, *, batch_block=8):
    N, S, C = x_nsc.shape
    ncls = w.shape[1]
    nc_pad = _round_up(ncls, _LANE)                          # lane-dense head output
    if nc_pad != ncls:
        w = jnp.pad(w, ((0, 0), (0, nc_pad - ncls)))
        b = jnp.pad(b, (0, nc_pad - ncls))
    w = w.astype(x_nsc.dtype)
    b2 = b.reshape(1, nc_pad).astype(jnp.float32)

    nb = min(batch_block, N)                                 # batch-blocked grid
    n_pad = _round_up(N, nb)
    if n_pad != N:
        x_nsc = jnp.pad(x_nsc, ((0, n_pad - N), (0, 0), (0, 0)))

    kernel = functools.partial(_pool_head_kernel, inv_s=1.0 / S)
    out = pl.pallas_call(
        kernel,
        out_shape=jax.ShapeDtypeStruct((n_pad, nc_pad), jnp.float32),
        grid_spec=pltpu.PrefetchScalarGridSpec(
            num_scalar_prefetch=0,
            grid=(n_pad // nb,),
            in_specs=[
                pl.BlockSpec((nb, S, C), lambda n: (n, 0, 0)),
                pl.BlockSpec((C, nc_pad), lambda n: (0, 0)),
                pl.BlockSpec((1, nc_pad), lambda n: (0, 0)),
            ],
            out_specs=pl.BlockSpec((nb, nc_pad), lambda n: (n, 0)),
        ),
        compiler_params=pltpu.CompilerParams(
            dimension_semantics=("parallel",)),
    )(x_nsc, w, b2)
    return out[:N, :ncls]


# ----------------------------------------------------------------------------
# Parameter init (deterministic, synthetic) + forward
# ----------------------------------------------------------------------------
def _fold_bn(gamma, beta, mean, var, eps=1e-5):
    scale = gamma / jnp.sqrt(var + eps)
    shift = beta - mean * scale
    return scale, shift


def init_params(key, *, hidden_dim, kernel_size, patch_size, num_layers,
                num_classes, in_ch=3):
    assert hidden_dim % _LANE == 0, "hidden_dim must be a multiple of 128"
    keys = iter(jax.random.split(key, 8 + 12 * num_layers))

    def nrm(shape, s=0.05):
        return s * jax.random.normal(next(keys), shape, jnp.float32)

    def bn_affine(c):
        gamma = 1.0 + 0.1 * jax.random.normal(next(keys), (c,), jnp.float32)
        beta = 0.1 * jax.random.normal(next(keys), (c,), jnp.float32)
        mean = 0.1 * jax.random.normal(next(keys), (c,), jnp.float32)
        var = 1.0 + 0.1 * jax.random.uniform(next(keys), (c,), jnp.float32)
        return _fold_bn(gamma, beta, mean, var)

    def pack(bias, scale, shift):
        return jnp.stack([bias, scale, shift]).astype(jnp.float32)   # [3, C]

    p = {}
    # patch-embed conv expressed as a GEMM over flattened (py, px, cin) patches
    p["embed_w"] = nrm((patch_size * patch_size * in_ch, hidden_dim), 0.1)
    eb = nrm((hidden_dim,))
    es, esh = bn_affine(hidden_dim)
    p["embed_aff"] = pack(eb, es, esh)

    layers = []
    for _ in range(num_layers):
        dw_w = nrm((kernel_size, kernel_size, hidden_dim), 0.1)
        dw_b = nrm((hidden_dim,))
        dw_s, dw_sh = bn_affine(hidden_dim)
        pw_w = nrm((hidden_dim, hidden_dim), 0.1)
        pw_b = nrm((hidden_dim,))
        pw_s, pw_sh = bn_affine(hidden_dim)
        layers.append(dict(
            dw_taps=dw_w,                                  # [K, K, C], f32
            dw_aff=pack(dw_b, dw_s, dw_sh),
            pw_w=pw_w,
            pw_aff=pack(pw_b, pw_s, pw_sh)))
    p["layers"] = layers

    p["head_w"] = nrm((hidden_dim, num_classes), 0.1)
    p["head_b"] = nrm((num_classes,))
    return p


def conv_mixer_forward(x_nchw, params, *, patch_size, kernel_size,
                       act_dtype=jnp.float32, band_rows=None):
    N, Cin, H, W = x_nchw.shape
    x = jnp.transpose(x_nchw, (0, 2, 3, 1))                 # NCHW -> NHWC
    Ho, Wo = H // patch_size, W // patch_size

    # embed: strided conv == per-patch GEMM (glue reshape, Pallas GEMM)
    patches = x.reshape(N, Ho, patch_size, Wo, patch_size, Cin)
    patches = patches.transpose(0, 1, 3, 2, 4, 5).reshape(
        N * Ho * Wo, patch_size * patch_size * Cin).astype(act_dtype)
    y = matmul_gelu_bn(patches, params["embed_w"].astype(act_dtype),
                       params["embed_aff"])
    C = y.shape[-1]
    y = y.reshape(N, Ho, Wo, C)

    # mixer layers: one fused Pallas kernel each
    for layer in params["layers"]:
        y = mixer_layer(y, layer["dw_taps"], layer["dw_aff"],
                        layer["pw_w"].astype(act_dtype), layer["pw_aff"],
                        ksize=kernel_size, band_rows=band_rows)

    # head: batched global avg pool + linear with lane-padded classes
    return pool_head(y.reshape(N, Ho * Wo, C), params["head_w"], params["head_b"])


# ----------------------------------------------------------------------------
# Pure-JAX reference (same math; depthwise conv via lax.conv) for sanity check
# ----------------------------------------------------------------------------
def reference_forward(x_nchw, params, *, patch_size, kernel_size):
    def gelu(v):
        return 0.5 * v * (1.0 + lax.erf(v * _INV_SQRT2))

    N, Cin, H, W = x_nchw.shape
    x = jnp.transpose(x_nchw, (0, 2, 3, 1))
    Ho, Wo = H // patch_size, W // patch_size
    patches = x.reshape(N, Ho, patch_size, Wo, patch_size, Cin)
    patches = patches.transpose(0, 1, 3, 2, 4, 5).reshape(
        N * Ho * Wo, patch_size * patch_size * Cin)
    aff = params["embed_aff"]
    y = gelu(patches @ params["embed_w"] + aff[0]) * aff[1] + aff[2]
    C = y.shape[-1]
    y = y.reshape(N, Ho, Wo, C)
    pad = (kernel_size - 1) // 2
    for layer in params["layers"]:
        dw_w = layer["dw_taps"].reshape(kernel_size, kernel_size, 1, C)
        conv = lax.conv_general_dilated(
            y, dw_w, window_strides=(1, 1), padding=((pad, pad), (pad, pad)),
            dimension_numbers=("NHWC", "HWIO", "NHWC"), feature_group_count=C)
        da = layer["dw_aff"]
        y = gelu(conv + da[0]) * da[1] + da[2] + y
        pa = layer["pw_aff"]
        z = gelu(y.reshape(-1, C) @ layer["pw_w"] + pa[0]) * pa[1] + pa[2]
        y = z.reshape(N, Ho, Wo, C)
    pooled = jnp.mean(y.reshape(N, Ho * Wo, C), axis=1)
    return pooled @ params["head_w"] + params["head_b"]


if __name__ == "__main__":
    import numpy as np

    hidden_dim, kernel_size, patch_size = 128, 5, 4    # C=128 -> lane-dense
    num_layers, num_classes = 2, 10

    key = jax.random.PRNGKey(0)
    k_x, k_p = jax.random.split(key)
    x = jax.random.normal(k_x, (2, 3, 32, 32), jnp.float32)   # NCHW like PyTorch
    params = init_params(k_p, hidden_dim=hidden_dim, kernel_size=kernel_size,
                         patch_size=patch_size, num_layers=num_layers,
                         num_classes=num_classes)

    ref = reference_forward(x, params, patch_size=patch_size,
                            kernel_size=kernel_size)

    # f32 path, auto band height
    fwd = jax.jit(functools.partial(conv_mixer_forward, patch_size=patch_size,
                                    kernel_size=kernel_size))
    out = fwd(x, params)
    jax.block_until_ready(out)
    assert out.shape == (2, num_classes)
    np.testing.assert_allclose(np.asarray(out), np.asarray(ref),
                               rtol=2e-3, atol=2e-3)

    # f32 path with forced 4-row bands: exercises the multi-band halo path
    fwd_bands = jax.jit(functools.partial(conv_mixer_forward,
                                          patch_size=patch_size,
                                          kernel_size=kernel_size,
                                          band_rows=4))
    out_b = fwd_bands(x, params)
    jax.block_until_ready(out_b)
    np.testing.assert_allclose(np.asarray(out_b), np.asarray(ref),
                               rtol=2e-3, atol=2e-3)

    # bf16 activations/weights (f32 accumulation & elementwise math), loose check
    fwd_bf16 = jax.jit(functools.partial(conv_mixer_forward,
                                         patch_size=patch_size,
                                         kernel_size=kernel_size,
                                         act_dtype=jnp.bfloat16))
    out_bf16 = fwd_bf16(x, params)
    jax.block_until_ready(out_bf16)
    np.testing.assert_allclose(np.asarray(out_bf16, dtype=np.float32),
                               np.asarray(ref), rtol=0.1, atol=0.1)

    print("KERNEL_OK")
</pallas_src>

<mosaic_0001>
module attributes {stable_mosaic.version = 11 : i64} {
  func.func @_matmul_gelu_bn_kernel(%arg0: i32, %arg1: i32, %arg2: memref<128x48xf32, #tpu.memory_space<vmem>>, %arg3: memref<48x128xf32, #tpu.memory_space<vmem>>, %arg4: memref<3x128xf32, #tpu.memory_space<vmem>>, %arg5: memref<128x128xf32, #tpu.memory_space<vmem>>) attributes {dimension_semantics = [#tpu.dimension_semantics<parallel>, #tpu.dimension_semantics<parallel>], iteration_bounds = array<i64: 1, 1>, scalar_prefetch = 0 : i64, scratch_operands = 0 : i64, tpu.core_type = #tpu.core_type<tc>, window_params = [{transform_indices = @transform_0, window_bounds = array<i64: 128, 48>}, {transform_indices = @transform_1, window_bounds = array<i64: 48, 128>}, {transform_indices = @transform_2, window_bounds = array<i64: 3, 128>}, {transform_indices = @transform_3, window_bounds = array<i64: 128, 128>}]} {
    %c0 = arith.constant 0 : index
    %c0_0 = arith.constant 0 : index
    %0 = vector.load %arg2[%c0, %c0_0] : memref<128x48xf32, #tpu.memory_space<vmem>>, vector<128x48xf32>
    %c0_1 = arith.constant 0 : index
    %c0_2 = arith.constant 0 : index
    %1 = vector.load %arg3[%c0_1, %c0_2] : memref<48x128xf32, #tpu.memory_space<vmem>>, vector<48x128xf32>
    %cst = arith.constant dense<0.000000e+00> : vector<128x128xf32>
    %2 = tpu.matmul %0, %1, %cst {dimension_numbers = #tpu.dot_dimension_numbers<[1], [0], [0], [1], [0, 0, 1, 1], [], []>} : vector<128x48xf32>, vector<48x128xf32>, vector<128x128xf32> -> vector<128x128xf32>
    %c0_3 = arith.constant 0 : index
    %c0_4 = arith.constant 0 : index
    %3 = vector.load %arg4[%c0_3, %c0_4] : memref<3x128xf32, #tpu.memory_space<vmem>>, vector<1x128xf32>
    %4 = vector.shape_cast %3 : vector<1x128xf32> to vector<128xf32>
    %5 = vector.shape_cast %4 : vector<128xf32> to vector<1x128xf32>
    %6 = vector.broadcast %5 : vector<1x128xf32> to vector<128x128xf32>
    %7 = arith.addf %2, %6 : vector<128x128xf32>
    %cst_5 = arith.constant 5.000000e-01 : f32
    %8 = vector.broadcast %cst_5 : f32 to vector<128x128xf32>
    %9 = arith.mulf %8, %7 : vector<128x128xf32>
    %cst_6 = arith.constant 0.707106769 : f32
    %10 = vector.broadcast %cst_6 : f32 to vector<128x128xf32>
    %11 = arith.mulf %7, %10 : vector<128x128xf32>
    %cst_7 = arith.constant 0.000000e+00 : f32
    %12 = vector.broadcast %cst_7 : f32 to vector<128x128xf32>
    %13 = arith.cmpf olt, %11, %12 : vector<128x128xf32>
    %cst_8 = arith.constant -1.000000e+00 : f32
    %cst_9 = arith.constant 1.000000e+00 : f32
    %14 = vector.broadcast %cst_8 : f32 to vector<128x128xf32>
    %15 = vector.broadcast %cst_9 : f32 to vector<128x128xf32>
    %16 = arith.select %13, %14, %15 : vector<128x128xi1>, vector<128x128xf32>
    %17 = math.absf %11 : vector<128x128xf32>
    %cst_10 = arith.constant 0.327591091 : f32
    %18 = vector.broadcast %cst_10 : f32 to vector<128x128xf32>
    %19 = arith.mulf %18, %17 : vector<128x128xf32>
    %cst_11 = arith.constant 1.000000e+00 : f32
    %20 = vector.broadcast %cst_11 : f32 to vector<128x128xf32>
    %21 = arith.addf %20, %19 : vector<128x128xf32>
    %22 = tpu.reciprocal %21 {approx = true} : vector<128x128xf32> -> vector<128x128xf32>
    %23 = arith.mulf %21, %22 : vector<128x128xf32>
    %cst_12 = arith.constant 2.000000e+00 : f32
    %24 = vector.broadcast %cst_12 : f32 to vector<128x128xf32>
    %25 = arith.subf %24, %23 : vector<128x128xf32>
    %26 = arith.mulf %22, %25 : vector<128x128xf32>
    %cst_13 = arith.constant 1.06140542 : f32
    %27 = vector.broadcast %cst_13 : f32 to vector<128x128xf32>
    %28 = arith.mulf %27, %26 : vector<128x128xf32>
    %cst_14 = arith.constant -1.45315206 : f32
    %29 = vector.broadcast %cst_14 : f32 to vector<128x128xf32>
    %30 = arith.addf %28, %29 : vector<128x128xf32>
    %31 = arith.mulf %30, %26 : vector<128x128xf32>
    %cst_15 = arith.constant 1.42141378 : f32
    %32 = vector.broadcast %cst_15 : f32 to vector<128x128xf32>
    %33 = arith.addf %31, %32 : vector<128x128xf32>
    %34 = arith.mulf %33, %26 : vector<128x128xf32>
    %cst_16 = arith.constant -0.284496725 : f32
    %35 = vector.broadcast %cst_16 : f32 to vector<128x128xf32>
    %36 = arith.addf %34, %35 : vector<128x128xf32>
    %37 = arith.mulf %36, %26 : vector<128x128xf32>
    %cst_17 = arith.constant 0.254829586 : f32
    %38 = vector.broadcast %cst_17 : f32 to vector<128x128xf32>
    %39 = arith.addf %37, %38 : vector<128x128xf32>
    %40 = arith.mulf %39, %26 : vector<128x128xf32>
    %cst_18 = arith.constant 0.000000e+00 : f32
    %41 = vector.broadcast %cst_18 : f32 to vector<128x128xf32>
    %42 = arith.subf %41, %17 : vector<128x128xf32>
    %43 = arith.mulf %42, %17 : vector<128x128xf32>
    %44 = math.exp %43 : vector<128x128xf32>
    %45 = arith.mulf %40, %44 : vector<128x128xf32>
    %cst_19 = arith.constant 1.000000e+00 : f32
    %46 = vector.broadcast %cst_19 : f32 to vector<128x128xf32>
    %47 = arith.subf %46, %45 : vector<128x128xf32>
    %48 = arith.mulf %16, %47 : vector<128x128xf32>
    %cst_20 = arith.constant 1.000000e+00 : f32
    %49 = vector.broadcast %cst_20 : f32 to vector<128x128xf32>
    %50 = arith.addf %49, %48 : vector<128x128xf32>
    %51 = arith.mulf %9, %50 : vector<128x128xf32>
    %c1 = arith.constant 1 : index
    %c0_21 = arith.constant 0 : index
    %52 = vector.load %arg4[%c1, %c0_21] : memref<3x128xf32, #tpu.memory_space<vmem>>, vector<1x128xf32>
    %53 = vector.shape_cast %52 : vector<1x128xf32> to vector<128xf32>
    %54 = vector.shape_cast %53 : vector<128xf32> to vector<1x128xf32>
    %55 = vector.broadcast %54 : vector<1x128xf32> to vector<128x128xf32>
    %56 = arith.mulf %51, %55 : vector<128x128xf32>
    %c2 = arith.constant 2 : index
    %c0_22 = arith.constant 0 : index
    %57 = vector.load %arg4[%c2, %c0_22] : memref<3x128xf32, #tpu.memory_space<vmem>>, vector<1x128xf32>
    %58 = vector.shape_cast %57 : vector<1x128xf32> to vector<128xf32>
    %59 = vector.shape_cast %58 : vector<128xf32> to vector<1x128xf32>
    %60 = vector.broadcast %59 : vector<1x128xf32> to vector<128x128xf32>
    %61 = arith.addf %56, %60 : vector<128x128xf32>
    %c0_23 = arith.constant 0 : index
    %c0_24 = arith.constant 0 : index
    %62 = vector.load %arg5[%c0_23, %c0_24] : memref<128x128xf32, #tpu.memory_space<vmem>>, vector<128x128xf32>
    tpu.vector_store %arg5[%c0_23, %c0_24], %61 {strides = array<i32>} : memref<128x128xf32, #tpu.memory_space<vmem>>, vector<128x128xf32>,
    return
  }
  func.func @transform_0(%arg0: i32, %arg1: i32) -> (i32, i32) {
    %c0_i32 = arith.constant 0 : i32
    %c0_i32_0 = arith.constant 0 : i32
    return %arg0, %c0_i32 : i32, i32
  }
  func.func @transform_1(%arg0: i32, %arg1: i32) -> (i32, i32) {
    %c0_i32 = arith.constant 0 : i32
    %c0_i32_0 = arith.constant 0 : i32
    return %c0_i32, %arg1 : i32, i32
  }
  func.func @transform_2(%arg0: i32, %arg1: i32) -> (i32, i32) {
    %c0_i32 = arith.constant 0 : i32
    %c0_i32_0 = arith.constant 0 : i32
    return %c0_i32, %arg1 : i32, i32
  }
  func.func @transform_3(%arg0: i32, %arg1: i32) -> (i32, i32) {
    %c0_i32 = arith.constant 0 : i32
    return %arg0, %arg1 : i32, i32
  }
}

module attributes {stable_mosaic.version = 11 : i64} {
  func.func @_mixer_layer_kernel(%arg0: i32, %arg1: i32, %arg2: memref<1x8x8x128xf32, #tpu.memory_space<vmem>>, %arg3: memref<1x2x8x128xf32, #tpu.memory_space<vmem>>, %arg4: memref<1x2x8x128xf32, #tpu.memory_space<vmem>>, %arg5: memref<5x5x128xf32, #tpu.memory_space<vmem>>, %arg6: memref<3x128xf32, #tpu.memory_space<vmem>>, %arg7: memref<128x128xf32, #tpu.memory_space<vmem>>, %arg8: memref<3x128xf32, #tpu.memory_space<vmem>>, %arg9: memref<1x8x8x128xf32, #tpu.memory_space<vmem>>, %arg10: memref<12x8x128xf32, #tpu.memory_space<vmem>>) attributes {dimension_semantics = [#tpu.dimension_semantics<parallel>, #tpu.dimension_semantics<parallel>], iteration_bounds = array<i64: 2, 1>, scalar_prefetch = 0 : i64, scratch_operands = 1 : i64, tpu.core_type = #tpu.core_type<tc>, window_params = [{transform_indices = @transform_0, window_bounds = array<i64: 1, 8, 8, 128>}, {transform_indices = @transform_1, window_bounds = array<i64: 1, 2, 8, 128>}, {transform_indices = @transform_2, window_bounds = array<i64: 1, 2, 8, 128>}, {pipeline_mode = #tpu.pipeline_mode<synchronous>, transform_indices = @transform_3, window_bounds = array<i64: 5, 5, 128>}, {pipeline_mode = #tpu.pipeline_mode<synchronous>, transform_indices = @transform_4, window_bounds = array<i64: 3, 128>}, {pipeline_mode = #tpu.pipeline_mode<synchronous>, transform_indices = @transform_5, window_bounds = array<i64: 128, 128>}, {pipeline_mode = #tpu.pipeline_mode<synchronous>, transform_indices = @transform_6, window_bounds = array<i64: 3, 128>}, {transform_indices = @transform_7, window_bounds = array<i64: 1, 8, 8, 128>}]} {
    %c0 = arith.constant 0 : index
    %c0_0 = arith.constant 0 : index
    %c0_1 = arith.constant 0 : index
    %c0_2 = arith.constant 0 : index
    %0 = vector.load %arg2[%c0, %c0_0, %c0_1, %c0_2] : memref<1x8x8x128xf32, #tpu.memory_space<vmem>>, vector<1x8x8x128xf32>
    %1 = vector.shape_cast %0 : vector<1x8x8x128xf32> to vector<8x8x128xf32>
    %c2 = arith.constant 2 : index
    %c0_3 = arith.constant 0 : index
    %c0_4 = arith.constant 0 : index
    %2 = vector.load %arg10[%c2, %c0_3, %c0_4] : memref<12x8x128xf32, #tpu.memory_space<vmem>>, vector<8x8x128xf32>
    tpu.vector_store %arg10[%c2, %c0_3, %c0_4], %1 {strides = array<i32>} : memref<12x8x128xf32, #tpu.memory_space<vmem>>, vector<8x8x128xf32>,
    %cst = arith.constant 0.000000e+00 : f32
    %3 = vector.broadcast %cst : f32 to vector<2x8x128xf32>
    %c0_i32 = arith.constant 0 : i32
    %4 = arith.cmpi sgt, %arg1, %c0_i32 : i32
    %5 = arith.extui %4 : i1 to i32
    %c0_i32_5 = arith.constant 0 : i32
    %6 = arith.cmpi ne, %5, %c0_i32_5 : i32
    scf.if %6 {
      %c0_212 = arith.constant 0 : index
      %c0_213 = arith.constant 0 : index
      %c0_214 = arith.constant 0 : index
      %c0_215 = arith.constant 0 : index
      %463 = vector.load %arg3[%c0_212, %c0_213, %c0_214, %c0_215] : memref<1x2x8x128xf32, #tpu.memory_space<vmem>>, vector<1x2x8x128xf32>
      %464 = vector.shape_cast %463 : vector<1x2x8x128xf32> to vector<2x8x128xf32>
      %c0_216 = arith.constant 0 : index
      %c0_217 = arith.constant 0 : index
      %c0_218 = arith.constant 0 : index
      %465 = vector.load %arg10[%c0_216, %c0_217, %c0_218] : memref<12x8x128xf32, #tpu.memory_space<vmem>>, vector<2x8x128xf32>
      tpu.vector_store %arg10[%c0_216, %c0_217, %c0_218], %464 {strides = array<i32>} : memref<12x8x128xf32, #tpu.memory_space<vmem>>, vector<2x8x128xf32>,
    } else {
    }
    %c0_i32_6 = arith.constant 0 : i32
    %7 = arith.cmpi eq, %arg1, %c0_i32_6 : i32
    %8 = arith.extui %7 : i1 to i32
    %c0_i32_7 = arith.constant 0 : i32
    %9 = arith.cmpi ne, %8, %c0_i32_7 : i32
    scf.if %9 {
      %c0_212 = arith.constant 0 : index
      %c0_213 = arith.constant 0 : index
      %c0_214 = arith.constant 0 : index
      %463 = vector.load %arg10[%c0_212, %c0_213, %c0_214] : memref<12x8x128xf32, #tpu.memory_space<vmem>>, vector<2x8x128xf32>
      tpu.vector_store %arg10[%c0_212, %c0_213, %c0_214], %3 {strides = array<i32>} : memref<12x8x128xf32, #tpu.memory_space<vmem>>, vector<2x8x128xf32>,
    } else {
    }
    %c0_i32_8 = arith.constant 0 : i32
    %10 = arith.cmpi slt, %arg1, %c0_i32_8 : i32
    %11 = arith.extui %10 : i1 to i32
    %c0_i32_9 = arith.constant 0 : i32
    %12 = arith.cmpi ne, %11, %c0_i32_9 : i32
    scf.if %12 {
      %c0_212 = arith.constant 0 : index
      %c0_213 = arith.constant 0 : index
      %c0_214 = arith.constant 0 : index
      %c0_215 = arith.constant 0 : index
      %463 = vector.load %arg4[%c0_212, %c0_213, %c0_214, %c0_215] : memref<1x2x8x128xf32, #tpu.memory_space<vmem>>, vector<1x2x8x128xf32>
      %464 = vector.shape_cast %463 : vector<1x2x8x128xf32> to vector<2x8x128xf32>
      %c10 = arith.constant 10 : index
      %c0_216 = arith.constant 0 : index
      %c0_217 = arith.constant 0 : index
      %465 = vector.load %arg10[%c10, %c0_216, %c0_217] : memref<12x8x128xf32, #tpu.memory_space<vmem>>, vector<2x8x128xf32>
      tpu.vector_store %arg10[%c10, %c0_216, %c0_217], %464 {strides = array<i32>} : memref<12x8x128xf32, #tpu.memory_space<vmem>>, vector<2x8x128xf32>,
    } else {
    }
    %c0_i32_10 = arith.constant 0 : i32
    %13 = arith.cmpi eq, %arg1, %c0_i32_10 : i32
    %14 = arith.extui %13 : i1 to i32
    %c0_i32_11 = arith.constant 0 : i32
    %15 = arith.cmpi ne, %14, %c0_i32_11 : i32
    scf.if %15 {
      %c10 = arith.constant 10 : index
      %c0_212 = arith.constant 0 : index
      %c0_213 = arith.constant 0 : index
      %463 = vector.load %arg10[%c10, %c0_212, %c0_213] : memref<12x8x128xf32, #tpu.memory_space<vmem>>, vector<2x8x128xf32>
      tpu.vector_store %arg10[%c10, %c0_212, %c0_213], %3 {strides = array<i32>} : memref<12x8x128xf32, #tpu.memory_space<vmem>>, vector<2x8x128xf32>,
    } else {
    }
    %16 = tpu.iota {dimensions = array<i32: 1>} : vector<1x8x1xi32>
    %c0_12 = arith.constant 0 : index
    %c0_13 = arith.constant 0 : index
    %c0_14 = arith.constant 0 : index
    %17 = vector.load %arg10[%c0_12, %c0_13, %c0_14] : memref<12x8x128xf32, #tpu.memory_space<vmem>>, vector<8x8x128xf32>
    %c0_15 = arith.constant 0 : index
    %c0_16 = arith.constant 0 : index
    %c0_17 = arith.constant 0 : index
    %18 = vector.load %arg5[%c0_15, %c0_16, %c0_17] : memref<5x5x128xf32, #tpu.memory_space<vmem>>, vector<1x5x128xf32>
    %19 = vector.shape_cast %18 : vector<1x5x128xf32> to vector<5x128xf32>
    %20 = vector.extract_strided_slice %19 {offsets = [2, 0], sizes = [1, 128], strides = [1, 1]} : vector<5x128xf32> to vector<1x128xf32>
    %21 = vector.shape_cast %20 : vector<1x128xf32> to vector<128xf32>
    %22 = vector.shape_cast %21 : vector<128xf32> to vector<1x1x128xf32>
    %23 = vector.broadcast %22 : vector<1x1x128xf32> to vector<8x8x128xf32>
    %24 = arith.mulf %17, %23 : vector<8x8x128xf32>
    %c1_i32 = arith.constant 1 : i32
    %25 = arith.index_cast %c1_i32 : i32 to index
    %c0_18 = arith.constant 0 : index
    %c0_19 = arith.constant 0 : index
    %26 = vector.load %arg5[%25, %c0_18, %c0_19] : memref<5x5x128xf32, #tpu.memory_space<vmem>>, vector<1x5x128xf32>
    %27 = vector.shape_cast %26 : vector<1x5x128xf32> to vector<5x128xf32>
    %28 = vector.extract_strided_slice %27 {offsets = [2, 0], sizes = [1, 128], strides = [1, 1]} : vector<5x128xf32> to vector<1x128xf32>
    %29 = vector.shape_cast %28 : vector<1x128xf32> to vector<128xf32>
    %30 = arith.index_cast %c1_i32 : i32 to index
    %c0_20 = arith.constant 0 : index
    %c0_21 = arith.constant 0 : index
    %31 = vector.load %arg10[%30, %c0_20, %c0_21] : memref<12x8x128xf32, #tpu.memory_space<vmem>>, vector<8x8x128xf32>
    %32 = vector.shape_cast %29 : vector<128xf32> to vector<1x1x128xf32>
    %33 = vector.broadcast %32 : vector<1x1x128xf32> to vector<8x8x128xf32>
    %34 = arith.mulf %31, %33 : vector<8x8x128xf32>
    %35 = arith.addf %24, %34 : vector<8x8x128xf32>
    %c2_i32 = arith.constant 2 : i32
    %36 = arith.index_cast %c2_i32 : i32 to index
    %c0_22 = arith.constant 0 : index
    %c0_23 = arith.constant 0 : index
    %37 = vector.load %arg5[%36, %c0_22, %c0_23] : memref<5x5x128xf32, #tpu.memory_space<vmem>>, vector<1x5x128xf32>
    %38 = vector.shape_cast %37 : vector<1x5x128xf32> to vector<5x128xf32>
    %39 = vector.extract_strided_slice %38 {offsets = [2, 0], sizes = [1, 128], strides = [1, 1]} : vector<5x128xf32> to vector<1x128xf32>
    %40 = vector.shape_cast %39 : vector<1x128xf32> to vector<128xf32>
    %41 = arith.index_cast %c2_i32 : i32 to index
    %c0_24 = arith.constant 0 : index
    %c0_25 = arith.constant 0 : index
    %42 = vector.load %arg10[%41, %c0_24, %c0_25] : memref<12x8x128xf32, #tpu.memory_space<vmem>>, vector<8x8x128xf32>
    %43 = vector.shape_cast %40 : vector<128xf32> to vector<1x1x128xf32>
    %44 = vector.broadcast %43 : vector<1x1x128xf32> to vector<8x8x128xf32>
    %45 = arith.mulf %42, %44 : vector<8x8x128xf32>
    %46 = arith.addf %35, %45 : vector<8x8x128xf32>
    %c3_i32 = arith.constant 3 : i32
    %47 = arith.index_cast %c3_i32 : i32 to index
    %c0_26 = arith.constant 0 : index
    %c0_27 = arith.constant 0 : index
    %48 = vector.load %arg5[%47, %c0_26, %c0_27] : memref<5x5x128xf32, #tpu.memory_space<vmem>>, vector<1x5x128xf32>
    %49 = vector.shape_cast %48 : vector<1x5x128xf32> to vector<5x128xf32>
    %50 = vector.extract_strided_slice %49 {offsets = [2, 0], sizes = [1, 128], strides = [1, 1]} : vector<5x128xf32> to vector<1x128xf32>
    %51 = vector.shape_cast %50 : vector<1x128xf32> to vector<128xf32>
    %52 = arith.index_cast %c3_i32 : i32 to index
    %c0_28 = arith.constant 0 : index
    %c0_29 = arith.constant 0 : index
    %53 = vector.load %arg10[%52, %c0_28, %c0_29] : memref<12x8x128xf32, #tpu.memory_space<vmem>>, vector<8x8x128xf32>
    %54 = vector.shape_cast %51 : vector<128xf32> to vector<1x1x128xf32>
    %55 = vector.broadcast %54 : vector<1x1x128xf32> to vector<8x8x128xf32>
    %56 = arith.mulf %53, %55 : vector<8x8x128xf32>
    %57 = arith.addf %46, %56 : vector<8x8x128xf32>
    %c4_i32 = arith.constant 4 : i32
    %58 = arith.index_cast %c4_i32 : i32 to index
    %c0_30 = arith.constant 0 : index
    %c0_31 = arith.constant 0 : index
    %59 = vector.load %arg5[%58, %c0_30, %c0_31] : memref<5x5x128xf32, #tpu.memory_space<vmem>>, vector<1x5x128xf32>
    %60 = vector.shape_cast %59 : vector<1x5x128xf32> to vector<5x128xf32>
    %61 = vector.extract_strided_slice %60 {offsets = [2, 0], sizes = [1, 128], strides = [1, 1]} : vector<5x128xf32> to vector<1x128xf32>
    %62 = vector.shape_cast %61 : vector<1x128xf32> to vector<128xf32>
    %63 = arith.index_cast %c4_i32 : i32 to index
    %c0_32 = arith.constant 0 : index
    %c0_33 = arith.constant 0 : index
    %64 = vector.load %arg10[%63, %c0_32, %c0_33] : memref<12x8x128xf32, #tpu.memory_space<vmem>>, vector<8x8x128xf32>
    %65 = vector.shape_cast %62 : vector<128xf32> to vector<1x1x128xf32>
    %66 = vector.broadcast %65 : vector<1x1x128xf32> to vector<8x8x128xf32>
    %67 = arith.mulf %64, %66 : vector<8x8x128xf32>
    %68 = arith.addf %57, %67 : vector<8x8x128xf32>
    %c4_i32_34 = arith.constant 4 : i32
    %c0_35 = arith.constant 0 : index
    %c0_36 = arith.constant 0 : index
    %c0_37 = arith.constant 0 : index
    %69 = vector.load %arg10[%c0_35, %c0_36, %c0_37] : memref<12x8x128xf32, #tpu.memory_space<vmem>>, vector<8x8x128xf32>
    %c0_38 = arith.constant 0 : index
    %c0_39 = arith.constant 0 : index
    %c0_40 = arith.constant 0 : index
    %70 = vector.load %arg5[%c0_38, %c0_39, %c0_40] : memref<5x5x128xf32, #tpu.memory_space<vmem>>, vector<1x5x128xf32>
    %71 = vector.shape_cast %70 : vector<1x5x128xf32> to vector<5x128xf32>
    %72 = vector.extract_strided_slice %71 {offsets = [0, 0], sizes = [1, 128], strides = [1, 1]} : vector<5x128xf32> to vector<1x128xf32>
    %73 = vector.shape_cast %72 : vector<1x128xf32> to vector<128xf32>
    %74 = vector.shape_cast %73 : vector<128xf32> to vector<1x1x128xf32>
    %75 = vector.broadcast %74 : vector<1x1x128xf32> to vector<8x8x128xf32>
    %76 = arith.mulf %69, %75 : vector<8x8x128xf32>
    %c1_i32_41 = arith.constant 1 : i32
    %77 = arith.index_cast %c1_i32_41 : i32 to index
    %c0_42 = arith.constant 0 : index
    %c0_43 = arith.constant 0 : index
    %78 = vector.load %arg5[%77, %c0_42, %c0_43] : memref<5x5x128xf32, #tpu.memory_space<vmem>>, vector<1x5x128xf32>
    %79 = vector.shape_cast %78 : vector<1x5x128xf32> to vector<5x128xf32>
    %80 = vector.extract_strided_slice %79 {offsets = [0, 0], sizes = [1, 128], strides = [1, 1]} : vector<5x128xf32> to vector<1x128xf32>
    %81 = vector.shape_cast %80 : vector<1x128xf32> to vector<128xf32>
    %82 = arith.index_cast %c1_i32_41 : i32 to index
    %c0_44 = arith.constant 0 : index
    %c0_45 = arith.constant 0 : index
    %83 = vector.load %arg10[%82, %c0_44, %c0_45] : memref<12x8x128xf32, #tpu.memory_space<vmem>>, vector<8x8x128xf32>
    %84 = vector.shape_cast %81 : vector<128xf32> to vector<1x1x128xf32>
    %85 = vector.broadcast %84 : vector<1x1x128xf32> to vector<8x8x128xf32>
    %86 = arith.mulf %83, %85 : vector<8x8x128xf32>
    %87 = arith.addf %76, %86 : vector<8x8x128xf32>
    %c2_i32_46 = arith.constant 2 : i32
    %88 = arith.index_cast %c2_i32_46 : i32 to index
    %c0_47 = arith.constant 0 : index
    %c0_48 = arith.constant 0 : index
    %89 = vector.load %arg5[%88, %c0_47, %c0_48] : memref<5x5x128xf32, #tpu.memory_space<vmem>>, vector<1x5x128xf32>
    %90 = vector.shape_cast %89 : vector<1x5x128xf32> to vector<5x128xf32>
    %91 = vector.extract_strided_slice %90 {offsets = [0, 0], sizes = [1, 128], strides = [1, 1]} : vector<5x128xf32> to vector<1x128xf32>
    %92 = vector.shape_cast %91 : vector<1x128xf32> to vector<128xf32>
    %93 = arith.index_cast %c2_i32_46 : i32 to index
    %c0_49 = arith.constant 0 : index
    %c0_50 = arith.constant 0 : index
    %94 = vector.load %arg10[%93, %c0_49, %c0_50] : memref<12x8x128xf32, #tpu.memory_space<vmem>>, vector<8x8x128xf32>
    %95 = vector.shape_cast %92 : vector<128xf32> to vector<1x1x128xf32>
    %96 = vector.broadcast %95 : vector<1x1x128xf32> to vector<8x8x128xf32>
    %97 = arith.mulf %94, %96 : vector<8x8x128xf32>
    %98 = arith.addf %87, %97 : vector<8x8x128xf32>
    %c3_i32_51 = arith.constant 3 : i32
    %99 = arith.index_cast %c3_i32_51 : i32 to index
    %c0_52 = arith.constant 0 : index
    %c0_53 = arith.constant 0 : index
    %100 = vector.load %arg5[%99, %c0_52, %c0_53] : memref<5x5x128xf32, #tpu.memory_space<vmem>>, vector<1x5x128xf32>
    %101 = vector.shape_cast %100 : vector<1x5x128xf32> to vector<5x128xf32>
    %102 = vector.extract_strided_slice %101 {offsets = [0, 0], sizes = [1, 128], strides = [1, 1]} : vector<5x128xf32> to vector<1x128xf32>
    %103 = vector.shape_cast %102 : vector<1x128xf32> to vector<128xf32>
    %104 = arith.index_cast %c3_i32_51 : i32 to index
    %c0_54 = arith.constant 0 : index
    %c0_55 = arith.constant 0 : index
    %105 = vector.load %arg10[%104, %c0_54, %c0_55] : memref<12x8x128xf32, #tpu.memory_space<vmem>>, vector<8x8x128xf32>
    %106 = vector.shape_cast %103 : vector<128xf32> to vector<1x1x128xf32>
    %107 = vector.broadcast %106 : vector<1x1x128xf32> to vector<8x8x128xf32>
    %108 = arith.mulf %105, %107 : vector<8x8x128xf32>
    %109 = arith.addf %98, %108 : vector<8x8x128xf32>
    %c4_i32_56 = arith.constant 4 : i32
    %110 = arith.index_cast %c4_i32_56 : i32 to index
    %c0_57 = arith.constant 0 : index
    %c0_58 = arith.constant 0 : index
    %111 = vector.load %arg5[%110, %c0_57, %c0_58] : memref<5x5x128xf32, #tpu.memory_space<vmem>>, vector<1x5x128xf32>
    %112 = vector.shape_cast %111 : vector<1x5x128xf32> to vector<5x128xf32>
    %113 = vector.extract_strided_slice %112 {offsets = [0, 0], sizes = [1, 128], strides = [1, 1]} : vector<5x128xf32> to vector<1x128xf32>
    %114 = vector.shape_cast %113 : vector<1x128xf32> to vector<128xf32>
    %115 = arith.index_cast %c4_i32_56 : i32 to index
    %c0_59 = arith.constant 0 : index
    %c0_60 = arith.constant 0 : index
    %116 = vector.load %arg10[%115, %c0_59, %c0_60] : memref<12x8x128xf32, #tpu.memory_space<vmem>>, vector<8x8x128xf32>
    %117 = vector.shape_cast %114 : vector<128xf32> to vector<1x1x128xf32>
    %118 = vector.broadcast %117 : vector<1x1x128xf32> to vector<8x8x128xf32>
    %119 = arith.mulf %116, %118 : vector<8x8x128xf32>
    %120 = arith.addf %109, %119 : vector<8x8x128xf32>
    %c4_i32_61 = arith.constant 4 : i32
    %c2_i32_62 = arith.constant 2 : i32
    %121 = tpu.dynamic_rotate %120 by %c2_i32_62 dim 1 : vector<8x8x128xf32>, i32 -> vector<8x8x128xf32>
    %c-2_i32 = arith.constant -2 : i32
    %122 = vector.broadcast %c-2_i32 : i32 to vector<1x8x1xi32>
    %123 = arith.addi %16, %122 : vector<1x8x1xi32>
    %c0_i32_63 = arith.constant 0 : i32
    %124 = vector.broadcast %c0_i32_63 : i32 to vector<1x8x1xi32>
    %125 = arith.cmpi sge, %123, %124 : vector<1x8x1xi32>
    %c-2_i32_64 = arith.constant -2 : i32
    %126 = vector.broadcast %c-2_i32_64 : i32 to vector<1x8x1xi32>
    %127 = arith.addi %16, %126 : vector<1x8x1xi32>
    %c8_i32 = arith.constant 8 : i32
    %128 = vector.broadcast %c8_i32 : i32 to vector<1x8x1xi32>
    %129 = arith.cmpi slt, %127, %128 : vector<1x8x1xi32>
    %130 = arith.andi %125, %129 : vector<1x8x1xi1>
    %cst_65 = arith.constant 0.000000e+00 : f32
    %131 = vector.shape_cast %130 : vector<1x8x1xi1> to vector<1x8x1xi1>
    %132 = vector.broadcast %131 : vector<1x8x1xi1> to vector<8x8x128xi1>
    %133 = vector.broadcast %cst_65 : f32 to vector<8x8x128xf32>
    %134 = arith.select %132, %121, %133 : vector<8x8x128xi1>, vector<8x8x128xf32>
    %135 = arith.addf %68, %134 : vector<8x8x128xf32>
    %c0_66 = arith.constant 0 : index
    %c0_67 = arith.constant 0 : index
    %c0_68 = arith.constant 0 : index
    %136 = vector.load %arg10[%c0_66, %c0_67, %c0_68] : memref<12x8x128xf32, #tpu.memory_space<vmem>>, vector<8x8x128xf32>
    %c0_69 = arith.constant 0 : index
    %c0_70 = arith.constant 0 : index
    %c0_71 = arith.constant 0 : index
    %137 = vector.load %arg5[%c0_69, %c0_70, %c0_71] : memref<5x5x128xf32, #tpu.memory_space<vmem>>, vector<1x5x128xf32>
    %138 = vector.shape_cast %137 : vector<1x5x128xf32> to vector<5x128xf32>
    %139 = vector.extract_strided_slice %138 {offsets = [1, 0], sizes = [1, 128], strides = [1, 1]} : vector<5x128xf32> to vector<1x128xf32>
    %140 = vector.shape_cast %139 : vector<1x128xf32> to vector<128xf32>
    %141 = vector.shape_cast %140 : vector<128xf32> to vector<1x1x128xf32>
    %142 = vector.broadcast %141 : vector<1x1x128xf32> to vector<8x8x128xf32>
    %143 = arith.mulf %136, %142 : vector<8x8x128xf32>
    %c1_i32_72 = arith.constant 1 : i32
    %144 = arith.index_cast %c1_i32_72 : i32 to index
    %c0_73 = arith.constant 0 : index
    %c0_74 = arith.constant 0 : index
    %145 = vector.load %arg5[%144, %c0_73, %c0_74] : memref<5x5x128xf32, #tpu.memory_space<vmem>>, vector<1x5x128xf32>
    %146 = vector.shape_cast %145 : vector<1x5x128xf32> to vector<5x128xf32>
    %147 = vector.extract_strided_slice %146 {offsets = [1, 0], sizes = [1, 128], strides = [1, 1]} : vector<5x128xf32> to vector<1x128xf32>
    %148 = vector.shape_cast %147 : vector<1x128xf32> to vector<128xf32>
    %149 = arith.index_cast %c1_i32_72 : i32 to index
    %c0_75 = arith.constant 0 : index
    %c0_76 = arith.constant 0 : index
    %150 = vector.load %arg10[%149, %c0_75, %c0_76] : memref<12x8x128xf32, #tpu.memory_space<vmem>>, vector<8x8x128xf32>
    %151 = vector.shape_cast %148 : vector<128xf32> to vector<1x1x128xf32>
    %152 = vector.broadcast %151 : vector<1x1x128xf32> to vector<8x8x128xf32>
    %153 = arith.mulf %150, %152 : vector<8x8x128xf32>
    %154 = arith.addf %143, %153 : vector<8x8x128xf32>
    %c2_i32_77 = arith.constant 2 : i32
    %155 = arith.index_cast %c2_i32_77 : i32 to index
    %c0_78 = arith.constant 0 : index
    %c0_79 = arith.constant 0 : index
    %156 = vector.load %arg5[%155, %c0_78, %c0_79] : memref<5x5x128xf32, #tpu.memory_space<vmem>>, vector<1x5x128xf32>
    %157 = vector.shape_cast %156 : vector<1x5x128xf32> to vector<5x128xf32>
    %158 = vector.extract_strided_slice %157 {offsets = [1, 0], sizes = [1, 128], strides = [1, 1]} : vector<5x128xf32> to vector<1x128xf32>
    %159 = vector.shape_cast %158 : vector<1x128xf32> to vector<128xf32>
    %160 = arith.index_cast %c2_i32_77 : i32 to index
    %c0_80 = arith.constant 0 : index
    %c0_81 = arith.constant 0 : index
    %161 = vector.load %arg10[%160, %c0_80, %c0_81] : memref<12x8x128xf32, #tpu.memory_space<vmem>>, vector<8x8x128xf32>
    %162 = vector.shape_cast %159 : vector<128xf32> to vector<1x1x128xf32>
    %163 = vector.broadcast %162 : vector<1x1x128xf32> to vector<8x8x128xf32>
    %164 = arith.mulf %161, %163 : vector<8x8x128xf32>
    %165 = arith.addf %154, %164 : vector<8x8x128xf32>
    %c3_i32_82 = arith.constant 3 : i32
    %166 = arith.index_cast %c3_i32_82 : i32 to index
    %c0_83 = arith.constant 0 : index
    %c0_84 = arith.constant 0 : index
    %167 = vector.load %arg5[%166, %c0_83, %c0_84] : memref<5x5x128xf32, #tpu.memory_space<vmem>>, vector<1x5x128xf32>
    %168 = vector.shape_cast %167 : vector<1x5x128xf32> to vector<5x128xf32>
    %169 = vector.extract_strided_slice %168 {offsets = [1, 0], sizes = [1, 128], strides = [1, 1]} : vector<5x128xf32> to vector<1x128xf32>
    %170 = vector.shape_cast %169 : vector<1x128xf32> to vector<128xf32>
    %171 = arith.index_cast %c3_i32_82 : i32 to index
    %c0_85 = arith.constant 0 : index
    %c0_86 = arith.constant 0 : index
    %172 = vector.load %arg10[%171, %c0_85, %c0_86] : memref<12x8x128xf32, #tpu.memory_space<vmem>>, vector<8x8x128xf32>
    %173 = vector.shape_cast %170 : vector<128xf32> to vector<1x1x128xf32>
    %174 = vector.broadcast %173 : vector<1x1x128xf32> to vector<8x8x128xf32>
    %175 = arith.mulf %172, %174 : vector<8x8x128xf32>
    %176 = arith.addf %165, %175 : vector<8x8x128xf32>
    %c4_i32_87 = arith.constant 4 : i32
    %177 = arith.index_cast %c4_i32_87 : i32 to index
    %c0_88 = arith.constant 0 : index
    %c0_89 = arith.constant 0 : index
    %178 = vector.load %arg5[%177, %c0_88, %c0_89] : memref<5x5x128xf32, #tpu.memory_space<vmem>>, vector<1x5x128xf32>
    %179 = vector.shape_cast %178 : vector<1x5x128xf32> to vector<5x128xf32>
    %180 = vector.extract_strided_slice %179 {offsets = [1, 0], sizes = [1, 128], strides = [1, 1]} : vector<5x128xf32> to vector<1x128xf32>
    %181 = vector.shape_cast %180 : vector<1x128xf32> to vector<128xf32>
    %182 = arith.index_cast %c4_i32_87 : i32 to index
    %c0_90 = arith.constant 0 : index
    %c0_91 = arith.constant 0 : index
    %183 = vector.load %arg10[%182, %c0_90, %c0_91] : memref<12x8x128xf32, #tpu.memory_space<vmem>>, vector<8x8x128xf32>
    %184 = vector.shape_cast %181 : vector<128xf32> to vector<1x1x128xf32>
    %185 = vector.broadcast %184 : vector<1x1x128xf32> to vector<8x8x128xf32>
    %186 = arith.mulf %183, %185 : vector<8x8x128xf32>
    %187 = arith.addf %176, %186 : vector<8x8x128xf32>
    %c4_i32_92 = arith.constant 4 : i32
    %c1_i32_93 = arith.constant 1 : i32
    %188 = tpu.dynamic_rotate %187 by %c1_i32_93 dim 1 : vector<8x8x128xf32>, i32 -> vector<8x8x128xf32>
    %c-1_i32 = arith.constant -1 : i32
    %189 = vector.broadcast %c-1_i32 : i32 to vector<1x8x1xi32>
    %190 = arith.addi %16, %189 : vector<1x8x1xi32>
    %c0_i32_94 = arith.constant 0 : i32
    %191 = vector.broadcast %c0_i32_94 : i32 to vector<1x8x1xi32>
    %192 = arith.cmpi sge, %190, %191 : vector<1x8x1xi32>
    %c-1_i32_95 = arith.constant -1 : i32
    %193 = vector.broadcast %c-1_i32_95 : i32 to vector<1x8x1xi32>
    %194 = arith.addi %16, %193 : vector<1x8x1xi32>
    %c8_i32_96 = arith.constant 8 : i32
    %195 = vector.broadcast %c8_i32_96 : i32 to vector<1x8x1xi32>
    %196 = arith.cmpi slt, %194, %195 : vector<1x8x1xi32>
    %197 = arith.andi %192, %196 : vector<1x8x1xi1>
    %cst_97 = arith.constant 0.000000e+00 : f32
    %198 = vector.shape_cast %197 : vector<1x8x1xi1> to vector<1x8x1xi1>
    %199 = vector.broadcast %198 : vector<1x8x1xi1> to vector<8x8x128xi1>
    %200 = vector.broadcast %cst_97 : f32 to vector<8x8x128xf32>
    %201 = arith.select %199, %188, %200 : vector<8x8x128xi1>, vector<8x8x128xf32>
    %202 = arith.addf %135, %201 : vector<8x8x128xf32>
    %c0_98 = arith.constant 0 : index
    %c0_99 = arith.constant 0 : index
    %c0_100 = arith.constant 0 : index
    %203 = vector.load %arg10[%c0_98, %c0_99, %c0_100] : memref<12x8x128xf32, #tpu.memory_space<vmem>>, vector<8x8x128xf32>
    %c0_101 = arith.constant 0 : index
    %c0_102 = arith.constant 0 : index
    %c0_103 = arith.constant 0 : index
    %204 = vector.load %arg5[%c0_101, %c0_102, %c0_103] : memref<5x5x128xf32, #tpu.memory_space<vmem>>, vector<1x5x128xf32>
    %205 = vector.shape_cast %204 : vector<1x5x128xf32> to vector<5x128xf32>
    %206 = vector.extract_strided_slice %205 {offsets = [3, 0], sizes = [1, 128], strides = [1, 1]} : vector<5x128xf32> to vector<1x128xf32>
    %207 = vector.shape_cast %206 : vector<1x128xf32> to vector<128xf32>
    %208 = vector.shape_cast %207 : vector<128xf32> to vector<1x1x128xf32>
    %209 = vector.broadcast %208 : vector<1x1x128xf32> to vector<8x8x128xf32>
    %210 = arith.mulf %203, %209 : vector<8x8x128xf32>
    %c1_i32_104 = arith.constant 1 : i32
    %211 = arith.index_cast %c1_i32_104 : i32 to index
    %c0_105 = arith.constant 0 : index
    %c0_106 = arith.constant 0 : index
    %212 = vector.load %arg5[%211, %c0_105, %c0_106] : memref<5x5x128xf32, #tpu.memory_space<vmem>>, vector<1x5x128xf32>
    %213 = vector.shape_cast %212 : vector<1x5x128xf32> to vector<5x128xf32>
    %214 = vector.extract_strided_slice %213 {offsets = [3, 0], sizes = [1, 128], strides = [1, 1]} : vector<5x128xf32> to vector<1x128xf32>
    %215 = vector.shape_cast %214 : vector<1x128xf32> to vector<128xf32>
    %216 = arith.index_cast %c1_i32_104 : i32 to index
    %c0_107 = arith.constant 0 : index
    %c0_108 = arith.constant 0 : index
    %217 = vector.load %arg10[%216, %c0_107, %c0_108] : memref<12x8x128xf32, #tpu.memory_space<vmem>>, vector<8x8x128xf32>
    %218 = vector.shape_cast %215 : vector<128xf32> to vector<1x1x128xf32>
    %219 = vector.broadcast %218 : vector<1x1x128xf32> to vector<8x8x128xf32>
    %220 = arith.mulf %217, %219 : vector<8x8x128xf32>
    %221 = arith.addf %210, %220 : vector<8x8x128xf32>
    %c2_i32_109 = arith.constant 2 : i32
    %222 = arith.index_cast %c2_i32_109 : i32 to index
    %c0_110 = arith.constant 0 : index
    %c0_111 = arith.constant 0 : index
    %223 = vector.load %arg5[%222, %c0_110, %c0_111] : memref<5x5x128xf32, #tpu.memory_space<vmem>>, vector<1x5x128xf32>
    %224 = vector.shape_cast %223 : vector<1x5x128xf32> to vector<5x128xf32>
    %225 = vector.extract_strided_slice %224 {offsets = [3, 0], sizes = [1, 128], strides = [1, 1]} : vector<5x128xf32> to vector<1x128xf32>
    %226 = vector.shape_cast %225 : vector<1x128xf32> to vector<128xf32>
    %227 = arith.index_cast %c2_i32_109 : i32 to index
    %c0_112 = arith.constant 0 : index
    %c0_113 = arith.constant 0 : index
    %228 = vector.load %arg10[%227, %c0_112, %c0_113] : memref<12x8x128xf32, #tpu.memory_space<vmem>>, vector<8x8x128xf32>
    %229 = vector.shape_cast %226 : vector<128xf32> to vector<1x1x128xf32>
    %230 = vector.broadcast %229 : vector<1x1x128xf32> to vector<8x8x128xf32>
    %231 = arith.mulf %228, %230 : vector<8x8x128xf32>
    %232 = arith.addf %221, %231 : vector<8x8x128xf32>
    %c3_i32_114 = arith.constant 3 : i32
    %233 = arith.index_cast %c3_i32_114 : i32 to index
    %c0_115 = arith.constant 0 : index
    %c0_116 = arith.constant 0 : index
    %234 = vector.load %arg5[%233, %c0_115, %c0_116] : memref<5x5x128xf32, #tpu.memory_space<vmem>>, vector<1x5x128xf32>
    %235 = vector.shape_cast %234 : vector<1x5x128xf32> to vector<5x128xf32>
    %236 = vector.extract_strided_slice %235 {offsets = [3, 0], sizes = [1, 128], strides = [1, 1]} : vector<5x128xf32> to vector<1x128xf32>
    %237 = vector.shape_cast %236 : vector<1x128xf32> to vector<128xf32>
    %238 = arith.index_cast %c3_i32_114 : i32 to index
    %c0_117 = arith.constant 0 : index
    %c0_118 = arith.constant 0 : index
    %239 = vector.load %arg10[%238, %c0_117, %c0_118] : memref<12x8x128xf32, #tpu.memory_space<vmem>>, vector<8x8x128xf32>
    %240 = vector.shape_cast %237 : vector<128xf32> to vector<1x1x128xf32>
    %241 = vector.broadcast %240 : vector<1x1x128xf32> to vector<8x8x128xf32>
    %242 = arith.mulf %239, %241 : vector<8x8x128xf32>
    %243 = arith.addf %232, %242 : vector<8x8x128xf32>
    %c4_i32_119 = arith.constant 4 : i32
    %244 = arith.index_cast %c4_i32_119 : i32 to index
    %c0_120 = arith.constant 0 : index
    %c0_121 = arith.constant 0 : index
    %245 = vector.load %arg5[%244, %c0_120, %c0_121] : memref<5x5x128xf32, #tpu.memory_space<vmem>>, vector<1x5x128xf32>
    %246 = vector.shape_cast %245 : vector<1x5x128xf32> to vector<5x128xf32>
    %247 = vector.extract_strided_slice %246 {offsets = [3, 0], sizes = [1, 128], strides = [1, 1]} : vector<5x128xf32> to vector<1x128xf32>
    %248 = vector.shape_cast %247 : vector<1x128xf32> to vector<128xf32>
    %249 = arith.index_cast %c4_i32_119 : i32 to index
    %c0_122 = arith.constant 0 : index
    %c0_123 = arith.constant 0 : index
    %250 = vector.load %arg10[%249, %c0_122, %c0_123] : memref<12x8x128xf32, #tpu.memory_space<vmem>>, vector<8x8x128xf32>
    %251 = vector.shape_cast %248 : vector<128xf32> to vector<1x1x128xf32>
    %252 = vector.broadcast %251 : vector<1x1x128xf32> to vector<8x8x128xf32>
    %253 = arith.mulf %250, %252 : vector<8x8x128xf32>
    %254 = arith.addf %243, %253 : vector<8x8x128xf32>
    %c4_i32_124 = arith.constant 4 : i32
    %c7_i32 = arith.constant 7 : i32
    %255 = tpu.dynamic_rotate %254 by %c7_i32 dim 1 : vector<8x8x128xf32>, i32 -> vector<8x8x128xf32>
    %c1_i32_125 = arith.constant 1 : i32
    %256 = vector.broadcast %c1_i32_125 : i32 to vector<1x8x1xi32>
    %257 = arith.addi %16, %256 : vector<1x8x1xi32>
    %c0_i32_126 = arith.constant 0 : i32
    %258 = vector.broadcast %c0_i32_126 : i32 to vector<1x8x1xi32>
    %259 = arith.cmpi sge, %257, %258 : vector<1x8x1xi32>
    %c1_i32_127 = arith.constant 1 : i32
    %260 = vector.broadcast %c1_i32_127 : i32 to vector<1x8x1xi32>
    %261 = arith.addi %16, %260 : vector<1x8x1xi32>
    %c8_i32_128 = arith.constant 8 : i32
    %262 = vector.broadcast %c8_i32_128 : i32 to vector<1x8x1xi32>
    %263 = arith.cmpi slt, %261, %262 : vector<1x8x1xi32>
    %264 = arith.andi %259, %263 : vector<1x8x1xi1>
    %cst_129 = arith.constant 0.000000e+00 : f32
    %265 = vector.shape_cast %264 : vector<1x8x1xi1> to vector<1x8x1xi1>
    %266 = vector.broadcast %265 : vector<1x8x1xi1> to vector<8x8x128xi1>
    %267 = vector.broadcast %cst_129 : f32 to vector<8x8x128xf32>
    %268 = arith.select %266, %255, %267 : vector<8x8x128xi1>, vector<8x8x128xf32>
    %269 = arith.addf %202, %268 : vector<8x8x128xf32>
    %c0_130 = arith.constant 0 : index
    %c0_131 = arith.constant 0 : index
    %c0_132 = arith.constant 0 : index
    %270 = vector.load %arg10[%c0_130, %c0_131, %c0_132] : memref<12x8x128xf32, #tpu.memory_space<vmem>>, vector<8x8x128xf32>
    %c0_133 = arith.constant 0 : index
    %c0_134 = arith.constant 0 : index
    %c0_135 = arith.constant 0 : index
    %271 = vector.load %arg5[%c0_133, %c0_134, %c0_135] : memref<5x5x128xf32, #tpu.memory_space<vmem>>, vector<1x5x128xf32>
    %272 = vector.shape_cast %271 : vector<1x5x128xf32> to vector<5x128xf32>
    %273 = vector.extract_strided_slice %272 {offsets = [4, 0], sizes = [1, 128], strides = [1, 1]} : vector<5x128xf32> to vector<1x128xf32>
    %274 = vector.shape_cast %273 : vector<1x128xf32> to vector<128xf32>
    %275 = vector.shape_cast %274 : vector<128xf32> to vector<1x1x128xf32>
    %276 = vector.broadcast %275 : vector<1x1x128xf32> to vector<8x8x128xf32>
    %277 = arith.mulf %270, %276 : vector<8x8x128xf32>
    %c1_i32_136 = arith.constant 1 : i32
    %278 = arith.index_cast %c1_i32_136 : i32 to index
    %c0_137 = arith.constant 0 : index
    %c0_138 = arith.constant 0 : index
    %279 = vector.load %arg5[%278, %c0_137, %c0_138] : memref<5x5x128xf32, #tpu.memory_space<vmem>>, vector<1x5x128xf32>
    %280 = vector.shape_cast %279 : vector<1x5x128xf32> to vector<5x128xf32>
    %281 = vector.extract_strided_slice %280 {offsets = [4, 0], sizes = [1, 128], strides = [1, 1]} : vector<5x128xf32> to vector<1x128xf32>
    %282 = vector.shape_cast %281 : vector<1x128xf32> to vector<128xf32>
    %283 = arith.index_cast %c1_i32_136 : i32 to index
    %c0_139 = arith.constant 0 : index
    %c0_140 = arith.constant 0 : index
    %284 = vector.load %arg10[%283, %c0_139, %c0_140] : memref<12x8x128xf32, #tpu.memory_space<vmem>>, vector<8x8x128xf32>
    %285 = vector.shape_cast %282 : vector<128xf32> to vector<1x1x128xf32>
    %286 = vector.broadcast %285 : vector<1x1x128xf32> to vector<8x8x128xf32>
    %287 = arith.mulf %284, %286 : vector<8x8x128xf32>
    %288 = arith.addf %277, %287 : vector<8x8x128xf32>
    %c2_i32_141 = arith.constant 2 : i32
    %289 = arith.index_cast %c2_i32_141 : i32 to index
    %c0_142 = arith.constant 0 : index
    %c0_143 = arith.constant 0 : index
    %290 = vector.load %arg5[%289, %c0_142, %c0_143] : memref<5x5x128xf32, #tpu.memory_space<vmem>>, vector<1x5x128xf32>
    %291 = vector.shape_cast %290 : vector<1x5x128xf32> to vector<5x128xf32>
    %292 = vector.extract_strided_slice %291 {offsets = [4, 0], sizes = [1, 128], strides = [1, 1]} : vector<5x128xf32> to vector<1x128xf32>
    %293 = vector.shape_cast %292 : vector<1x128xf32> to vector<128xf32>
    %294 = arith.index_cast %c2_i32_141 : i32 to index
    %c0_144 = arith.constant 0 : index
    %c0_145 = arith.constant 0 : index
    %295 = vector.load %arg10[%294, %c0_144, %c0_145] : memref<12x8x128xf32, #tpu.memory_space<vmem>>, vector<8x8x128xf32>
    %296 = vector.shape_cast %293 : vector<128xf32> to vector<1x1x128xf32>
    %297 = vector.broadcast %296 : vector<1x1x128xf32> to vector<8x8x128xf32>
    %298 = arith.mulf %295, %297 : vector<8x8x128xf32>
    %299 = arith.addf %288, %298 : vector<8x8x128xf32>
    %c3_i32_146 = arith.constant 3 : i32
    %300 = arith.index_cast %c3_i32_146 : i32 to index
    %c0_147 = arith.constant 0 : index
    %c0_148 = arith.constant 0 : index
    %301 = vector.load %arg5[%300, %c0_147, %c0_148] : memref<5x5x128xf32, #tpu.memory_space<vmem>>, vector<1x5x128xf32>
    %302 = vector.shape_cast %301 : vector<1x5x128xf32> to vector<5x128xf32>
    %303 = vector.extract_strided_slice %302 {offsets = [4, 0], sizes = [1, 128], strides = [1, 1]} : vector<5x128xf32> to vector<1x128xf32>
    %304 = vector.shape_cast %303 : vector<1x128xf32> to vector<128xf32>
    %305 = arith.index_cast %c3_i32_146 : i32 to index
    %c0_149 = arith.constant 0 : index
    %c0_150 = arith.constant 0 : index
    %306 = vector.load %arg10[%305, %c0_149, %c0_150] : memref<12x8x128xf32, #tpu.memory_space<vmem>>, vector<8x8x128xf32>
    %307 = vector.shape_cast %304 : vector<128xf32> to vector<1x1x128xf32>
    %308 = vector.broadcast %307 : vector<1x1x128xf32> to vector<8x8x128xf32>
    %309 = arith.mulf %306, %308 : vector<8x8x128xf32>
    %310 = arith.addf %299, %309 : vector<8x8x128xf32>
    %c4_i32_151 = arith.constant 4 : i32
    %311 = arith.index_cast %c4_i32_151 : i32 to index
    %c0_152 = arith.constant 0 : index
    %c0_153 = arith.constant 0 : index
    %312 = vector.load %arg5[%311, %c0_152, %c0_153] : memref<5x5x128xf32, #tpu.memory_space<vmem>>, vector<1x5x128xf32>
    %313 = vector.shape_cast %312 : vector<1x5x128xf32> to vector<5x128xf32>
    %314 = vector.extract_strided_slice %313 {offsets = [4, 0], sizes = [1, 128], strides = [1, 1]} : vector<5x128xf32> to vector<1x128xf32>
    %315 = vector.shape_cast %314 : vector<1x128xf32> to vector<128xf32>
    %316 = arith.index_cast %c4_i32_151 : i32 to index
    %c0_154 = arith.constant 0 : index
    %c0_155 = arith.constant 0 : index
    %317 = vector.load %arg10[%316, %c0_154, %c0_155] : memref<12x8x128xf32, #tpu.memory_space<vmem>>, vector<8x8x128xf32>
    %318 = vector.shape_cast %315 : vector<128xf32> to vector<1x1x128xf32>
    %319 = vector.broadcast %318 : vector<1x1x128xf32> to vector<8x8x128xf32>
    %320 = arith.mulf %317, %319 : vector<8x8x128xf32>
    %321 = arith.addf %310, %320 : vector<8x8x128xf32>
    %c4_i32_156 = arith.constant 4 : i32
    %c6_i32 = arith.constant 6 : i32
    %322 = tpu.dynamic_rotate %321 by %c6_i32 dim 1 : vector<8x8x128xf32>, i32 -> vector<8x8x128xf32>
    %c2_i32_157 = arith.constant 2 : i32
    %323 = vector.broadcast %c2_i32_157 : i32 to vector<1x8x1xi32>
    %324 = arith.addi %16, %323 : vector<1x8x1xi32>
    %c0_i32_158 = arith.constant 0 : i32
    %325 = vector.broadcast %c0_i32_158 : i32 to vector<1x8x1xi32>
    %326 = arith.cmpi sge, %324, %325 : vector<1x8x1xi32>
    %c2_i32_159 = arith.constant 2 : i32
    %327 = vector.broadcast %c2_i32_159 : i32 to vector<1x8x1xi32>
    %328 = arith.addi %16, %327 : vector<1x8x1xi32>
    %c8_i32_160 = arith.constant 8 : i32
    %329 = vector.broadcast %c8_i32_160 : i32 to vector<1x8x1xi32>
    %330 = arith.cmpi slt, %328, %329 : vector<1x8x1xi32>
    %331 = arith.andi %326, %330 : vector<1x8x1xi1>
    %cst_161 = arith.constant 0.000000e+00 : f32
    %332 = vector.shape_cast %331 : vector<1x8x1xi1> to vector<1x8x1xi1>
    %333 = vector.broadcast %332 : vector<1x8x1xi1> to vector<8x8x128xi1>
    %334 = vector.broadcast %cst_161 : f32 to vector<8x8x128xf32>
    %335 = arith.select %333, %322, %334 : vector<8x8x128xi1>, vector<8x8x128xf32>
    %336 = arith.addf %269, %335 : vector<8x8x128xf32>
    %c0_162 = arith.constant 0 : index
    %c0_163 = arith.constant 0 : index
    %337 = vector.load %arg6[%c0_162, %c0_163] : memref<3x128xf32, #tpu.memory_space<vmem>>, vector<1x128xf32>
    %338 = vector.shape_cast %337 : vector<1x128xf32> to vector<128xf32>
    %339 = vector.shape_cast %338 : vector<128xf32> to vector<1x1x128xf32>
    %340 = vector.broadcast %339 : vector<1x1x128xf32> to vector<8x8x128xf32>
    %341 = arith.addf %336, %340 : vector<8x8x128xf32>
    %cst_164 = arith.constant 5.000000e-01 : f32
    %342 = vector.broadcast %cst_164 : f32 to vector<8x8x128xf32>
    %343 = arith.mulf %342, %341 : vector<8x8x128xf32>
    %cst_165 = arith.constant 0.707106769 : f32
    %344 = vector.broadcast %cst_165 : f32 to vector<8x8x128xf32>
    %345 = arith.mulf %341, %344 : vector<8x8x128xf32>
    %cst_166 = arith.constant 0.000000e+00 : f32
    %346 = vector.broadcast %cst_166 : f32 to vector<8x8x128xf32>
    %347 = arith.cmpf olt, %345, %346 : vector<8x8x128xf32>
    %cst_167 = arith.constant -1.000000e+00 : f32
    %cst_168 = arith.constant 1.000000e+00 : f32
    %348 = vector.broadcast %cst_167 : f32 to vector<8x8x128xf32>
    %349 = vector.broadcast %cst_168 : f32 to vector<8x8x128xf32>
    %350 = arith.select %347, %348, %349 : vector<8x8x128xi1>, vector<8x8x128xf32>
    %351 = math.absf %345 : vector<8x8x128xf32>
    %cst_169 = arith.constant 0.327591091 : f32
    %352 = vector.broadcast %cst_169 : f32 to vector<8x8x128xf32>
    %353 = arith.mulf %352, %351 : vector<8x8x128xf32>
    %cst_170 = arith.constant 1.000000e+00 : f32
    %354 = vector.broadcast %cst_170 : f32 to vector<8x8x128xf32>
    %355 = arith.addf %354, %353 : vector<8x8x128xf32>
    %356 = tpu.reciprocal %355 {approx = true} : vector<8x8x128xf32> -> vector<8x8x128xf32>
    %357 = arith.mulf %355, %356 : vector<8x8x128xf32>
    %cst_171 = arith.constant 2.000000e+00 : f32
    %358 = vector.broadcast %cst_171 : f32 to vector<8x8x128xf32>
    %359 = arith.subf %358, %357 : vector<8x8x128xf32>
    %360 = arith.mulf %356, %359 : vector<8x8x128xf32>
    %cst_172 = arith.constant 1.06140542 : f32
    %361 = vector.broadcast %cst_172 : f32 to vector<8x8x128xf32>
    %362 = arith.mulf %361, %360 : vector<8x8x128xf32>
    %cst_173 = arith.constant -1.45315206 : f32
    %363 = vector.broadcast %cst_173 : f32 to vector<8x8x128xf32>
    %364 = arith.addf %362, %363 : vector<8x8x128xf32>
    %365 = arith.mulf %364, %360 : vector<8x8x128xf32>
    %cst_174 = arith.constant 1.42141378 : f32
    %366 = vector.broadcast %cst_174 : f32 to vector<8x8x128xf32>
    %367 = arith.addf %365, %366 : vector<8x8x128xf32>
    %368 = arith.mulf %367, %360 : vector<8x8x128xf32>
    %cst_175 = arith.constant -0.284496725 : f32
    %369 = vector.broadcast %cst_175 : f32 to vector<8x8x128xf32>
    %370 = arith.addf %368, %369 : vector<8x8x128xf32>
    %371 = arith.mulf %370, %360 : vector<8x8x128xf32>
    %cst_176 = arith.constant 0.254829586 : f32
    %372 = vector.broadcast %cst_176 : f32 to vector<8x8x128xf32>
    %373 = arith.addf %371, %372 : vector<8x8x128xf32>
    %374 = arith.mulf %373, %360 : vector<8x8x128xf32>
    %cst_177 = arith.constant 0.000000e+00 : f32
    %375 = vector.broadcast %cst_177 : f32 to vector<8x8x128xf32>
    %376 = arith.subf %375, %351 : vector<8x8x128xf32>
    %377 = arith.mulf %376, %351 : vector<8x8x128xf32>
    %378 = math.exp %377 : vector<8x8x128xf32>
    %379 = arith.mulf %374, %378 : vector<8x8x128xf32>
    %cst_178 = arith.constant 1.000000e+00 : f32
    %380 = vector.broadcast %cst_178 : f32 to vector<8x8x128xf32>
    %381 = arith.subf %380, %379 : vector<8x8x128xf32>
    %382 = arith.mulf %350, %381 : vector<8x8x128xf32>
    %cst_179 = arith.constant 1.000000e+00 : f32
    %383 = vector.broadcast %cst_179 : f32 to vector<8x8x128xf32>
    %384 = arith.addf %383, %382 : vector<8x8x128xf32>
    %385 = arith.mulf %343, %384 : vector<8x8x128xf32>
    %c1 = arith.constant 1 : index
    %c0_180 = arith.constant 0 : index
    %386 = vector.load %arg6[%c1, %c0_180] : memref<3x128xf32, #tpu.memory_space<vmem>>, vector<1x128xf32>
    %387 = vector.shape_cast %386 : vector<1x128xf32> to vector<128xf32>
    %388 = vector.shape_cast %387 : vector<128xf32> to vector<1x1x128xf32>
    %389 = vector.broadcast %388 : vector<1x1x128xf32> to vector<8x8x128xf32>
    %390 = arith.mulf %385, %389 : vector<8x8x128xf32>
    %c2_181 = arith.constant 2 : index
    %c0_182 = arith.constant 0 : index
    %391 = vector.load %arg6[%c2_181, %c0_182] : memref<3x128xf32, #tpu.memory_space<vmem>>, vector<1x128xf32>
    %392 = vector.shape_cast %391 : vector<1x128xf32> to vector<128xf32>
    %393 = vector.shape_cast %392 : vector<128xf32> to vector<1x1x128xf32>
    %394 = vector.broadcast %393 : vector<1x1x128xf32> to vector<8x8x128xf32>
    %395 = arith.addf %390, %394 : vector<8x8x128xf32>
    %396 = arith.addf %395, %1 : vector<8x8x128xf32>
    %c0_183 = arith.constant 0 : index
    %c0_184 = arith.constant 0 : index
    %397 = vector.load %arg7[%c0_183, %c0_184] : memref<128x128xf32, #tpu.memory_space<vmem>>, vector<128x128xf32>
    %398 = vector.shape_cast %396 : vector<8x8x128xf32> to vector<64x128xf32>
    %cst_185 = arith.constant dense<0.000000e+00> : vector<64x128xf32>
    %399 = tpu.matmul %398, %397, %cst_185 {dimension_numbers = #tpu.dot_dimension_numbers<[1], [0], [0], [1], [0, 0, 1, 1], [], []>} : vector<64x128xf32>, vector<128x128xf32>, vector<64x128xf32> -> vector<64x128xf32>
    %c0_186 = arith.constant 0 : index
    %c0_187 = arith.constant 0 : index
    %400 = vector.load %arg8[%c0_186, %c0_187] : memref<3x128xf32, #tpu.memory_space<vmem>>, vector<1x128xf32>
    %401 = vector.shape_cast %400 : vector<1x128xf32> to vector<128xf32>
    %402 = vector.shape_cast %401 : vector<128xf32> to vector<1x128xf32>
    %403 = vector.broadcast %402 : vector<1x128xf32> to vector<64x128xf32>
    %404 = arith.addf %399, %403 : vector<64x128xf32>
    %cst_188 = arith.constant 5.000000e-01 : f32
    %405 = vector.broadcast %cst_188 : f32 to vector<64x128xf32>
    %406 = arith.mulf %405, %404 : vector<64x128xf32>
    %cst_189 = arith.constant 0.707106769 : f32
    %407 = vector.broadcast %cst_189 : f32 to vector<64x128xf32>
    %408 = arith.mulf %404, %407 : vector<64x128xf32>
    %cst_190 = arith.constant 0.000000e+00 : f32
    %409 = vector.broadcast %cst_190 : f32 to vector<64x128xf32>
    %410 = arith.cmpf olt, %408, %409 : vector<64x128xf32>
    %cst_191 = arith.constant -1.000000e+00 : f32
    %cst_192 = arith.constant 1.000000e+00 : f32
    %411 = vector.broadcast %cst_191 : f32 to vector<64x128xf32>
    %412 = vector.broadcast %cst_192 : f32 to vector<64x128xf32>
    %413 = arith.select %410, %411, %412 : vector<64x128xi1>, vector<64x128xf32>
    %414 = math.absf %408 : vector<64x128xf32>
    %cst_193 = arith.constant 0.327591091 : f32
    %415 = vector.broadcast %cst_193 : f32 to vector<64x128xf32>
    %416 = arith.mulf %415, %414 : vector<64x128xf32>
    %cst_194 = arith.constant 1.000000e+00 : f32
    %417 = vector.broadcast %cst_194 : f32 to vector<64x128xf32>
    %418 = arith.addf %417, %416 : vector<64x128xf32>
    %419 = tpu.reciprocal %418 {approx = true} : vector<64x128xf32> -> vector<64x128xf32>
    %420 = arith.mulf %418, %419 : vector<64x128xf32>
    %cst_195 = arith.constant 2.000000e+00 : f32
    %421 = vector.broadcast %cst_195 : f32 to vector<64x128xf32>
    %422 = arith.subf %421, %420 : vector<64x128xf32>
    %423 = arith.mulf %419, %422 : vector<64x128xf32>
    %cst_196 = arith.constant 1.06140542 : f32
    %424 = vector.broadcast %cst_196 : f32 to vector<64x128xf32>
    %425 = arith.mulf %424, %423 : vector<64x128xf32>
    %cst_197 = arith.constant -1.45315206 : f32
    %426 = vector.broadcast %cst_197 : f32 to vector<64x128xf32>
    %427 = arith.addf %425, %426 : vector<64x128xf32>
    %428 = arith.mulf %427, %423 : vector<64x128xf32>
    %cst_198 = arith.constant 1.42141378 : f32
    %429 = vector.broadcast %cst_198 : f32 to vector<64x128xf32>
    %430 = arith.addf %428, %429 : vector<64x128xf32>
    %431 = arith.mulf %430, %423 : vector<64x128xf32>
    %cst_199 = arith.constant -0.284496725 : f32
    %432 = vector.broadcast %cst_199 : f32 to vector<64x128xf32>
    %433 = arith.addf %431, %432 : vector<64x128xf32>
    %434 = arith.mulf %433, %423 : vector<64x128xf32>
    %cst_200 = arith.constant 0.254829586 : f32
    %435 = vector.broadcast %cst_200 : f32 to vector<64x128xf32>
    %436 = arith.addf %434, %435 : vector<64x128xf32>
    %437 = arith.mulf %436, %423 : vector<64x128xf32>
    %cst_201 = arith.constant 0.000000e+00 : f32
    %438 = vector.broadcast %cst_201 : f32 to vector<64x128xf32>
    %439 = arith.subf %438, %414 : vector<64x128xf32>
    %440 = arith.mulf %439, %414 : vector<64x128xf32>
    %441 = math.exp %440 : vector<64x128xf32>
    %442 = arith.mulf %437, %441 : vector<64x128xf32>
    %cst_202 = arith.constant 1.000000e+00 : f32
    %443 = vector.broadcast %cst_202 : f32 to vector<64x128xf32>
    %444 = arith.subf %443, %442 : vector<64x128xf32>
    %445 = arith.mulf %413, %444 : vector<64x128xf32>
    %cst_203 = arith.constant 1.000000e+00 : f32
    %446 = vector.broadcast %cst_203 : f32 to vector<64x128xf32>
    %447 = arith.addf %446, %445 : vector<64x128xf32>
    %448 = arith.mulf %406, %447 : vector<64x128xf32>
    %c1_204 = arith.constant 1 : index
    %c0_205 = arith.constant 0 : index
    %449 = vector.load %arg8[%c1_204, %c0_205] : memref<3x128xf32, #tpu.memory_space<vmem>>, vector<1x128xf32>
    %450 = vector.shape_cast %449 : vector<1x128xf32> to vector<128xf32>
    %451 = vector.shape_cast %450 : vector<128xf32> to vector<1x128xf32>
    %452 = vector.broadcast %451 : vector<1x128xf32> to vector<64x128xf32>
    %453 = arith.mulf %448, %452 : vector<64x128xf32>
    %c2_206 = arith.constant 2 : index
    %c0_207 = arith.constant 0 : index
    %454 = vector.load %arg8[%c2_206, %c0_207] : memref<3x128xf32, #tpu.memory_space<vmem>>, vector<1x128xf32>
    %455 = vector.shape_cast %454 : vector<1x128xf32> to vector<128xf32>
    %456 = vector.shape_cast %455 : vector<128xf32> to vector<1x128xf32>
    %457 = vector.broadcast %456 : vector<1x128xf32> to vector<64x128xf32>
    %458 = arith.addf %453, %457 : vector<64x128xf32>
    %459 = vector.shape_cast %458 : vector<64x128xf32> to vector<8x8x128xf32>
    %c0_208 = arith.constant 0 : index
    %c0_209 = arith.constant 0 : index
    %c0_210 = arith.constant 0 : index
    %c0_211 = arith.constant 0 : index
    %460 = vector.load %arg9[%c0_208, %c0_209, %c0_210, %c0_211] : memref<1x8x8x128xf32, #tpu.memory_space<vmem>>, vector<1x8x8x128xf32>
    %461 = vector.shape_cast %460 : vector<1x8x8x128xf32> to vector<8x8x128xf32>
    %462 = vector.shape_cast %459 : vector<8x8x128xf32> to vector<1x8x8x128xf32>
    tpu.vector_store %arg9[%c0_208, %c0_209, %c0_210, %c0_211], %462 {strides = array<i32>} : memref<1x8x8x128xf32, #tpu.memory_space<vmem>>, vector<1x8x8x128xf32>,
    return
  }
  func.func @transform_0(%arg0: i32, %arg1: i32) -> (i32, i32, i32, i32) {
    %c0_i32 = arith.constant 0 : i32
    %c0_i32_0 = arith.constant 0 : i32
    %c0_i32_1 = arith.constant 0 : i32
    return %arg0, %arg1, %c0_i32, %c0_i32_0 : i32, i32, i32, i32
  }
  func.func @transform_1(%arg0: i32, %arg1: i32) -> (i32, i32, i32, i32) {
    %c4_i32 = arith.constant 4 : i32
    %0 = arith.muli %arg1, %c4_i32 : i32
    %c1_i32 = arith.constant 1 : i32
    %1 = arith.subi %0, %c1_i32 : i32
    %c0_i32 = arith.constant 0 : i32
    %2 = arith.maxsi %1, %c0_i32 : i32
    %c0_i32_0 = arith.constant 0 : i32
    %c0_i32_1 = arith.constant 0 : i32
    %c0_i32_2 = arith.constant 0 : i32
    return %arg0, %2, %c0_i32_0, %c0_i32_1 : i32, i32, i32, i32
  }
  func.func @transform_2(%arg0: i32, %arg1: i32) -> (i32, i32, i32, i32) {
    %c1_i32 = arith.constant 1 : i32
    %0 = arith.addi %arg1, %c1_i32 : i32
    %c4_i32 = arith.constant 4 : i32
    %1 = arith.muli %0, %c4_i32 : i32
    %c3_i32 = arith.constant 3 : i32
    %2 = arith.minsi %1, %c3_i32 : i32
    %c0_i32 = arith.constant 0 : i32
    %c0_i32_0 = arith.constant 0 : i32
    %c0_i32_1 = arith.constant 0 : i32
    return %arg0, %2, %c0_i32, %c0_i32_0 : i32, i32, i32, i32
  }
  func.func @transform_3(%arg0: i32, %arg1: i32) -> (i32, i32, i32) {
    %c0_i32 = arith.constant 0 : i32
    %c0_i32_0 = arith.constant 0 : i32
    %c0_i32_1 = arith.constant 0 : i32
    %c0_i32_2 = arith.constant 0 : i32
    return %c0_i32, %c0_i32_0, %c0_i32_1 : i32, i32, i32
  }
  func.func @transform_4(%arg0: i32, %arg1: i32) -> (i32, i32) {
    %c0_i32 = arith.constant 0 : i32
    %c0_i32_0 = arith.constant 0 : i32
    %c0_i32_1 = arith.constant 0 : i32
    return %c0_i32, %c0_i32_0 : i32, i32
  }
  func.func @transform_5(%arg0: i32, %arg1: i32) -> (i32, i32) {
    %c0_i32 = arith.constant 0 : i32
    %c0_i32_0 = arith.constant 0 : i32
    %c0_i32_1 = arith.constant 0 : i32
    return %c0_i32, %c0_i32_0 : i32, i32
  }
  func.func @transform_6(%arg0: i32, %arg1: i32) -> (i32, i32) {
    %c0_i32 = arith.constant 0 : i32
    %c0_i32_0 = arith.constant 0 : i32
    %c0_i32_1 = arith.constant 0 : i32
    return %c0_i32, %c0_i32_0 : i32, i32
  }
  func.func @transform_7(%arg0: i32, %arg1: i32) -> (i32, i32, i32, i32) {
    %c0_i32 = arith.constant 0 : i32
    %c0_i32_0 = arith.constant 0 : i32
    %c0_i32_1 = arith.constant 0 : i32
    return %arg0, %arg1, %c0_i32, %c0_i32_0 : i32, i32, i32, i32
  }
}

module attributes {stable_mosaic.version = 11 : i64} {
  func.func @_pool_head_kernel(%arg0: i32, %arg1: memref<2x64x128xf32, #tpu.memory_space<vmem>>, %arg2: memref<128x128xf32, #tpu.memory_space<vmem>>, %arg3: memref<1x128xf32, #tpu.memory_space<vmem>>, %arg4: memref<2x128xf32, #tpu.memory_space<vmem>>) attributes {dimension_semantics = [#tpu.dimension_semantics<parallel>], iteration_bounds = array<i64: 1>, scalar_prefetch = 0 : i64, scratch_operands = 0 : i64, tpu.core_type = #tpu.core_type<tc>, window_params = [{transform_indices = @transform_0, window_bounds = array<i64: 2, 64, 128>}, {pipeline_mode = #tpu.pipeline_mode<synchronous>, transform_indices = @transform_1, window_bounds = array<i64: 128, 128>}, {pipeline_mode = #tpu.pipeline_mode<synchronous>, transform_indices = @transform_2, window_bounds = array<i64: 1, 128>}, {transform_indices = @transform_3, window_bounds = array<i64: 2, 128>}]} {
    %c0 = arith.constant 0 : index
    %c0_0 = arith.constant 0 : index
    %c0_1 = arith.constant 0 : index
    %0 = vector.load %arg1[%c0, %c0_0, %c0_1] : memref<2x64x128xf32, #tpu.memory_space<vmem>>, vector<2x64x128xf32>
    %cst = arith.constant dense<0.000000e+00> : vector<2x128xf32>
    %1 = vector.multi_reduction <add>, %0, %cst [1] : vector<2x64x128xf32> to vector<2x128xf32>
    %cst_2 = arith.constant 1.562500e-02 : f32
    %2 = vector.broadcast %cst_2 : f32 to vector<2x128xf32>
    %3 = arith.mulf %1, %2 : vector<2x128xf32>
    %c0_3 = arith.constant 0 : index
    %c0_4 = arith.constant 0 : index
    %4 = vector.load %arg2[%c0_3, %c0_4] : memref<128x128xf32, #tpu.memory_space<vmem>>, vector<128x128xf32>
    %cst_5 = arith.constant dense<0.000000e+00> : vector<2x128xf32>
    %5 = tpu.matmul %3, %4, %cst_5 {dimension_numbers = #tpu.dot_dimension_numbers<[1], [0], [0], [1], [0, 0, 1, 1], [], []>} : vector<2x128xf32>, vector<128x128xf32>, vector<2x128xf32> -> vector<2x128xf32>
    %c0_6 = arith.constant 0 : index
    %c0_7 = arith.constant 0 : index
    %6 = vector.load %arg3[%c0_6, %c0_7] : memref<1x128xf32, #tpu.memory_space<vmem>>, vector<1x128xf32>
    %7 = vector.broadcast %6 : vector<1x128xf32> to vector<2x128xf32>
    %8 = arith.addf %5, %7 : vector<2x128xf32>
    %c0_8 = arith.constant 0 : index
    %c0_9 = arith.constant 0 : index
    %9 = vector.load %arg4[%c0_8, %c0_9] : memref<2x128xf32, #tpu.memory_space<vmem>>, vector<2x128xf32>
    tpu.vector_store %arg4[%c0_8, %c0_9], %8 {strides = array<i32>} : memref<2x128xf32, #tpu.memory_space<vmem>>, vector<2x128xf32>,
    return
  }
  func.func @transform_0(%arg0: i32) -> (i32, i32, i32) {
    %c0_i32 = arith.constant 0 : i32
    %c0_i32_0 = arith.constant 0 : i32
    %c0_i32_1 = arith.constant 0 : i32
    return %arg0, %c0_i32, %c0_i32_0 : i32, i32, i32
  }
  func.func @transform_1(%arg0: i32) -> (i32, i32) {
    %c0_i32 = arith.constant 0 : i32
    %c0_i32_0 = arith.constant 0 : i32
    %c0_i32_1 = arith.constant 0 : i32
    return %c0_i32, %c0_i32_0 : i32, i32
  }
  func.func @transform_2(%arg0: i32) -> (i32, i32) {
    %c0_i32 = arith.constant 0 : i32
    %c0_i32_0 = arith.constant 0 : i32
    %c0_i32_1 = arith.constant 0 : i32
    return %c0_i32, %c0_i32_0 : i32, i32
  }
  func.func @transform_3(%arg0: i32) -> (i32, i32) {
    %c0_i32 = arith.constant 0 : i32
    %c0_i32_0 = arith.constant 0 : i32
    return %arg0, %c0_i32 : i32, i32
  }
}

</mosaic_0001>

<llo_original>
// kernel: conv_mixer_forward.4
$region0: #{conv_mixer_forward.4}
  #allocation0 [shape = 'u32[]', space=smem, size = 0x4, offset = 0x4, fixed_abs, tag = 'smem constant byte address 0x4 - core index']
  #allocation1 [shape = 'u32[144,128]{1,0:T(1,128)}', space=vmem, size = 0x12000, scoped, tag = 'internal scratch']
  %s0 = inlined_call_operand.vmem [shape: f32[128,48], index: 0, kind: input, shape index: {}]
  %s1 = inlined_call_operand.vmem [shape: f32[48,128], index: 1, kind: input, shape index: {}]
  %s2 = inlined_call_operand.vmem [shape: f32[3,128], index: 2, kind: input, shape index: {}]
  %s3 = inlined_call_operand.vmem [shape: f32[128,128], index: 3, kind: output, shape index: {}]
  %s4 = sld [smem:[#allocation0]]
  $region22: #{conv_mixer_forward.4} parent=0
    _
  %s6 = ssub.s32 1, %s4
  %s7 = scalar_select 0, %s6, %s4
  // Predicated region
  $region2: #{conv_mixer_forward.4} parent=0 // pred_check
    _
  $region3: #{conv_mixer_forward.4} parent=0 // pred_check_branch
    %9 = sbr.rel (0) target = $region5
  $region4: #{conv_mixer_forward.4} parent=0 // pred_region
    _
  $region5: #{conv_mixer_forward.4} parent=0 // pred_fallthru
    _
  // Predicated region
  $region6: #{conv_mixer_forward.4} parent=0 // pred_check
    _
  $region7: #{conv_mixer_forward.4} parent=0 // pred_check_branch
    %11 = sbr.rel (0) target = $region9
  $region8: #{conv_mixer_forward.4} parent=0 // pred_region
    _
  $region9: #{conv_mixer_forward.4} parent=0 // pred_fallthru
    _
  // Predicated region
  $region10: #{conv_mixer_forward.4} parent=0 // pred_check
    _
  $region11: #{conv_mixer_forward.4} parent=0 // pred_check_branch
    %13 = sbr.rel (0) target = $region13
  $region12: #{conv_mixer_forward.4} parent=0 // pred_region
    _
  $region13: #{conv_mixer_forward.4} parent=0 // pred_fallthru
    _
  %v14 = vld [vmem:[%s0] sm:$0xff]
  %v15 = vld [vmem:[%s0 + $0x8] sm:$0xff]
  %v16 = vld [vmem:[%s0 + $0x10] sm:$0xff]
  %v17 = vld [vmem:[%s0 + $0x18] sm:$0xff]
  %v18 = vld [vmem:[%s0 + $0x20] sm:$0xff]
  %v19 = vld [vmem:[%s0 + $0x28] sm:$0xff]
  %v20 = vld [vmem:[%s0 + $0x30] sm:$0xff]
  %v21 = vld [vmem:[%s0 + $0x38] sm:$0xff]
  %v22 = vld [vmem:[%s0 + $0x40] sm:$0xff]
  %v23 = vld [vmem:[%s0 + $0x48] sm:$0xff]
  %v24 = vld [vmem:[%s0 + $0x50] sm:$0xff]
  %v25 = vld [vmem:[%s0 + $0x58] sm:$0xff]
  %v26 = vld [vmem:[%s0 + $0x60] sm:$0xff]
  %v27 = vld [vmem:[%s0 + $0x68] sm:$0xff]
  %v28 = vld [vmem:[%s0 + $0x70] sm:$0xff]
  %v29 = vld [vmem:[%s0 + $0x78] sm:$0xff]
  %v30 = vld [vmem:[%s1] sm:$0xff]
  %v31 = vld [vmem:[%s1 + $0x8] sm:$0xff]
  %v32 = vld [vmem:[%s1 + $0x10] sm:$0xff]
  %v33 = vld [vmem:[%s1 + $0x18] sm:$0xff]
  %v34 = vld [vmem:[%s1 + $0x20] sm:$0xff]
  %v35 = vld [vmem:[%s1 + $0x28] sm:$0xff]
  %v36 = vld [vmem:[%s2] sm:$0x1]
  %v37 = vlaneseq
  %v38 = vshrl.u32 %v37, 7
  %v39 = vsub.s32 0, %v38
  %v40 = vrot.slane %v36, %v39
  %vm41 = vcmask 392192
  %v43 = vsel %vm41, %v14, 0
  %v46 = vsel %vm41, %v15, 0
  %v49 = vsel %vm41, %v16, 0
  %v52 = vsel %vm41, %v17, 0
  %v55 = vsel %vm41, %v18, 0
  %v58 = vsel %vm41, %v19, 0
  %v61 = vsel %vm41, %v20, 0
  %v64 = vsel %vm41, %v21, 0
  %v67 = vsel %vm41, %v22, 0
  %v70 = vsel %vm41, %v23, 0
  %v73 = vsel %vm41, %v24, 0
  %v76 = vsel %vm41, %v25, 0
  %v79 = vsel %vm41, %v26, 0
  %v82 = vsel %vm41, %v27, 0
  %v85 = vsel %vm41, %v28, 0
  %v88 = vsel %vm41, %v29, 0
  %90 = vmatprep.subr.mxu0 0.0
  %91 = vmatpush1.msra.mxu0 0.0
  %92 = vmatprep.subr.mxu0 0.0
  %93 = vmatpush1.msra.mxu0 0.0
  %94 = vmatprep.subr.mxu0 0.0
  %95 = vmatpush1.msra.mxu0 0.0
  %96 = vmatprep.subr.mxu0 0.0
  %97 = vmatpush1.msra.mxu0 0.0
  %98 = vmatprep.subr.mxu0 0.0
  %99 = vmatpush1.msra.mxu0 0.0
  %100 = vmatprep.subr.mxu0 0.0
  %101 = vmatpush1.msra.mxu0 0.0
  %102 = vmatprep.subr.mxu0 0.0
  %103 = vmatpush1.msra.mxu0 0.0
  %104 = vmatprep.subr.mxu0 0.0
  %105 = vmatpush1.msra.mxu0 0.0
  %106 = vmatprep.subr.mxu0 0.0
  %107 = vmatpush1.msra.mxu0 0.0
  %108 = vmatprep.subr.mxu0 0.0
  %109 = vmatpush1.msra.mxu0 0.0
  %110 = vmatprep.subr.mxu0 0.0
  %111 = vmatpush1.msra.mxu0 %v35
  %112 = vmatprep.subr.mxu0 0.0
  %113 = vmatpush1.msra.mxu0 %v34
  %114 = vmatprep.subr.mxu0 0.0
  %115 = vmatpush1.msra.mxu0 %v33
  %116 = vmatprep.subr.mxu0 0.0
  %117 = vmatpush1.msra.mxu0 %v32
  %118 = vmatprep.subr.mxu0 0.0
  %119 = vmatpush1.msra.mxu0 %v31
  %120 = vmatprep.subr.mxu0 0.0
  %121 = vmatpush1.msra.mxu0 %v30
  %122 = vmatprep.subr.mxu0 0.0
  %123 = vmatpush2.msra.mxu0 0.0
  %124 = vmatprep.subr.mxu0 0.0
  %125 = vmatpush2.msra.mxu0 0.0
  %126 = vmatprep.subr.mxu0 0.0
  %127 = vmatpush2.msra.mxu0 0.0
  %128 = vmatprep.subr.mxu0 0.0
  %129 = vmatpush2.msra.mxu0 0.0
  %130 = vmatprep.subr.mxu0 0.0
  %131 = vmatpush2.msra.mxu0 0.0
  %132 = vmatprep.subr.mxu0 0.0
  %133 = vmatpush2.msra.mxu0 0.0
  %134 = vmatprep.subr.mxu0 0.0
  %135 = vmatpush2.msra.mxu0 0.0
  %136 = vmatprep.subr.mxu0 0.0
  %137 = vmatpush2.msra.mxu0 0.0
  %138 = vmatprep.subr.mxu0 0.0
  %139 = vmatpush2.msra.mxu0 0.0
  %140 = vmatprep.subr.mxu0 0.0
  %141 = vmatpush2.msra.mxu0 0.0
  %142 = vmatprep.subr.mxu0 0.0
  %143 = vmatpush2.msra.mxu0 0.0
  %144 = vmatprep.subr.mxu0 0.0
  %145 = vmatpush2.msra.mxu0 0.0
  %146 = vmatprep.subr.mxu0 0.0
  %147 = vmatpush2.msra.mxu0 0.0
  %148 = vmatprep.subr.mxu0 0.0
  %149 = vmatpush2.msra.mxu0 0.0
  %150 = vmatprep.subr.mxu0 0.0
  %151 = vmatpush2.msra.mxu0 0.0
  %152 = vmatprep.subr.mxu0 0.0
  %153 = vmatpush2.msra.mxu0 0.0
  %154 = vmatprep.mubr.f32.mxu0 0.0
  %155 = vmatmul.mubr.f32.gmra.mxu0 %v43
  %v156 = vpop.f32.mrf.mxu0
  %v157 = vadd.f32 %v40, %v156
  %v158 = vpop.f32.mrf.mxu0
  %159 = vmatprep.mubr.f32.mxu0 0.0
  %160 = vmatmul.mubr.f32.gmra.mxu0 %v46
  %v161 = vpop.f32.mrf.mxu0
  %v162 = vadd.f32 %v40, %v161
  %v163 = vpop.f32.mrf.mxu0
  %164 = vmatprep.mubr.f32.mxu0 0.0
  %165 = vmatmul.mubr.f32.gmra.mxu0 %v49
  %v166 = vpop.f32.mrf.mxu0
  %v167 = vadd.f32 %v40, %v166
  %v168 = vpop.f32.mrf.mxu0
  %169 = vmatprep.mubr.f32.mxu0 0.0
  %170 = vmatmul.mubr.f32.gmra.mxu0 %v52
  %v171 = vpop.f32.mrf.mxu0
  %v172 = vadd.f32 %v40, %v171
  %v173 = vpop.f32.mrf.mxu0
  %174 = vmatprep.mubr.f32.mxu0 0.0
  %175 = vmatmul.mubr.f32.gmra.mxu0 %v55
  %v176 = vpop.f32.mrf.mxu0
  %v177 = vadd.f32 %v40, %v176
  %v178 = vpop.f32.mrf.mxu0
  %179 = vmatprep.mubr.f32.mxu0 0.0
  %180 = vmatmul.mubr.f32.gmra.mxu0 %v58
  %v181 = vpop.f32.mrf.mxu0
  %v182 = vadd.f32 %v40, %v181
  %v183 = vpop.f32.mrf.mxu0
  %184 = vmatprep.mubr.f32.mxu0 0.0
  %185 = vmatmul.mubr.f32.gmra.mxu0 %v61
  %v186 = vpop.f32.mrf.mxu0
  %v187 = vadd.f32 %v40, %v186
  %v188 = vpop.f32.mrf.mxu0
  %189 = vmatprep.mubr.f32.mxu0 0.0
  %190 = vmatmul.mubr.f32.gmra.mxu0 %v64
  %v191 = vpop.f32.mrf.mxu0
  %v192 = vadd.f32 %v40, %v191
  %v193 = vpop.f32.mrf.mxu0
  %194 = vmatprep.mubr.f32.mxu0 0.0
  %195 = vmatmul.mubr.f32.gmra.mxu0 %v67
  %v196 = vpop.f32.mrf.mxu0
  %v197 = vadd.f32 %v40, %v196
  %v198 = vpop.f32.mrf.mxu0
  %199 = vmatprep.mubr.f32.mxu0 0.0
  %200 = vmatmul.mubr.f32.gmra.mxu0 %v70
  %v201 = vpop.f32.mrf.mxu0
  %v202 = vadd.f32 %v40, %v201
  %v203 = vpop.f32.mrf.mxu0
  %204 = vmatprep.mubr.f32.mxu0 0.0
  %205 = vmatmul.mubr.f32.gmra.mxu0 %v73
  %v206 = vpop.f32.mrf.mxu0
  %v207 = vadd.f32 %v40, %v206
  %v208 = vpop.f32.mrf.mxu0
  %209 = vmatprep.mubr.f32.mxu0 0.0
  %210 = vmatmul.mubr.f32.gmra.mxu0 %v76
  %v211 = vpop.f32.mrf.mxu0
  %v212 = vadd.f32 %v40, %v211
  %v213 = vpop.f32.mrf.mxu0
  %214 = vmatprep.mubr.f32.mxu0 0.0
  %215 = vmatmul.mubr.f32.gmra.mxu0 %v79
  %v216 = vpop.f32.mrf.mxu0
  %v217 = vadd.f32 %v40, %v216
  %v218 = vpop.f32.mrf.mxu0
  %219 = vmatprep.mubr.f32.mxu0 0.0
  %220 = vmatmul.mubr.f32.gmra.mxu0 %v82
  %v221 = vpop.f32.mrf.mxu0
  %v222 = vadd.f32 %v40, %v221
  %v223 = vpop.f32.mrf.mxu0
  %224 = vmatprep.mubr.f32.mxu0 0.0
  %225 = vmatmul.mubr.f32.gmra.mxu0 %v85
  %v226 = vpop.f32.mrf.mxu0
  %v227 = vadd.f32 %v40, %v226
  %v228 = vpop.f32.mrf.mxu0
  %229 = vmatprep.mubr.f32.mxu0 0.0
  %230 = vmatmul.mubr.f32.gmra.mxu0 %v88
  %v231 = vpop.f32.mrf.mxu0
  %v232 = vadd.f32 %v40, %v231
  %v233 = vpop.f32.mrf.mxu0
  %234 = vdwg.mxu0
  %v235 = vmul.f32 %v157, 0.5
  %v236 = vmul.f32 %v162, 0.5
  %v237 = vmul.f32 %v167, 0.5
  %v238 = vmul.f32 %v172, 0.5
  %v239 = vmul.f32 %v177, 0.5
  %v240 = vmul.f32 %v182, 0.5
  %v241 = vmul.f32 %v187, 0.5
  %v242 = vmul.f32 %v192, 0.5
  %v243 = vmul.f32 %v197, 0.5
  %v244 = vmul.f32 %v202, 0.5
  %v245 = vmul.f32 %v207, 0.5
  %v246 = vmul.f32 %v212, 0.5
  %v247 = vmul.f32 %v217, 0.5
  %v248 = vmul.f32 %v222, 0.5
  %v249 = vmul.f32 %v227, 0.5
  %v250 = vmul.f32 %v232, 0.5
  %v251 = vmul.f32 %v157, 0.70710677
  %v252 = vmul.f32 %v162, 0.70710677
  %v253 = vmul.f32 %v167, 0.70710677
  %v254 = vmul.f32 %v172, 0.70710677
  %v255 = vmul.f32 %v177, 0.70710677
  %v256 = vmul.f32 %v182, 0.70710677
  %v257 = vmul.f32 %v187, 0.70710677
  %v258 = vmul.f32 %v192, 0.70710677
  %v259 = vmul.f32 %v197, 0.70710677
  %v260 = vmul.f32 %v202, 0.70710677
  %v261 = vmul.f32 %v207, 0.70710677
  %v262 = vmul.f32 %v212, 0.70710677
  %v263 = vmul.f32 %v217, 0.70710677
  %v264 = vmul.f32 %v222, 0.70710677
  %v265 = vmul.f32 %v227, 0.70710677
  %v266 = vmul.f32 %v232, 0.70710677
  %vm267 = vcmp.lt.f32.partialorder %v251, 0.0
  %vm268 = vcmp.lt.f32.partialorder %v252, 0.0
  %vm269 = vcmp.lt.f32.partialorder %v253, 0.0
  %vm270 = vcmp.lt.f32.partialorder %v254, 0.0
  %vm271 = vcmp.lt.f32.partialorder %v255, 0.0
  %vm272 = vcmp.lt.f32.partialorder %v256, 0.0
  %vm273 = vcmp.lt.f32.partialorder %v257, 0.0
  %vm274 = vcmp.lt.f32.partialorder %v258, 0.0
  %vm275 = vcmp.lt.f32.partialorder %v259, 0.0
  %vm276 = vcmp.lt.f32.partialorder %v260, 0.0
  %vm277 = vcmp.lt.f32.partialorder %v261, 0.0
  %vm278 = vcmp.lt.f32.partialorder %v262, 0.0
  %vm279 = vcmp.lt.f32.partialorder %v263, 0.0
  %vm280 = vcmp.lt.f32.partialorder %v264, 0.0
  %vm281 = vcmp.lt.f32.partialorder %v265, 0.0
  %vm282 = vcmp.lt.f32.partialorder %v266, 0.0
  %v283 = vsel %vm267, -1.0, 1.0
  %v284 = vsel %vm268, -1.0, 1.0
  %v285 = vsel %vm269, -1.0, 1.0
  %v286 = vsel %vm270, -1.0, 1.0
  %v287 = vsel %vm271, -1.0, 1.0
  %v288 = vsel %vm272, -1.0, 1.0
  %v289 = vsel %vm273, -1.0, 1.0
  %v290 = vsel %vm274, -1.0, 1.0
  %v291 = vsel %vm275, -1.0, 1.0
  %v292 = vsel %vm276, -1.0, 1.0
  %v293 = vsel %vm277, -1.0, 1.0
  %v294 = vsel %vm278, -1.0, 1.0
  %v295 = vsel %vm279, -1.0, 1.0
  %v296 = vsel %vm280, -1.0, 1.0
  %v297 = vsel %vm281, -1.0, 1.0
  %v298 = vsel %vm282, -1.0, 1.0
  %v299 = vand.u32 2147483647, %v251
  %v300 = vand.u32 2147483647, %v252
  %v301 = vand.u32 2147483647, %v253
  %v302 = vand.u32 2147483647, %v254
  %v303 = vand.u32 2147483647, %v255
  %v304 = vand.u32 2147483647, %v256
  %v305 = vand.u32 2147483647, %v257
  %v306 = vand.u32 2147483647, %v258
  %v307 = vand.u32 2147483647, %v259
  %v308 = vand.u32 2147483647, %v260
  %v309 = vand.u32 2147483647, %v261
  %v310 = vand.u32 2147483647, %v262
  %v311 = vand.u32 2147483647, %v263
  %v312 = vand.u32 2147483647, %v264
  %v313 = vand.u32 2147483647, %v265
  %v314 = vand.u32 2147483647, %v266
  %v315 = vmul.f32 %v299, 0.3275911
  %v316 = vmul.f32 %v300, 0.3275911
  %v317 = vmul.f32 %v301, 0.3275911
  %v318 = vmul.f32 %v302, 0.3275911
  %v319 = vmul.f32 %v303, 0.3275911
  %v320 = vmul.f32 %v304, 0.3275911
  %v321 = vmul.f32 %v305, 0.3275911
  %v322 = vmul.f32 %v306, 0.3275911
  %v323 = vmul.f32 %v307, 0.3275911
  %v324 = vmul.f32 %v308, 0.3275911
  %v325 = vmul.f32 %v309, 0.3275911
  %v326 = vmul.f32 %v310, 0.3275911
  %v327 = vmul.f32 %v311, 0.3275911
  %v328 = vmul.f32 %v312, 0.3275911
  %v329 = vmul.f32 %v313, 0.3275911
  %v330 = vmul.f32 %v314, 0.3275911
  %v331 = vadd.f32 %v315, 1.0
  %v332 = vadd.f32 %v316, 1.0
  %v333 = vadd.f32 %v317, 1.0
  %v334 = vadd.f32 %v318, 1.0
  %v335 = vadd.f32 %v319, 1.0
  %v336 = vadd.f32 %v320, 1.0
  %v337 = vadd.f32 %v321, 1.0
  %v338 = vadd.f32 %v322, 1.0
  %v339 = vadd.f32 %v323, 1.0
  %v340 = vadd.f32 %v324, 1.0
  %v341 = vadd.f32 %v325, 1.0
  %v342 = vadd.f32 %v326, 1.0
  %v343 = vadd.f32 %v327, 1.0
  %v344 = vadd.f32 %v328, 1.0
  %v345 = vadd.f32 %v329, 1.0
  %v346 = vadd.f32 %v330, 1.0
  %v347 = vrcp.pop %v331
  %v348 = vrcp.pop %v332
  %v349 = vrcp.pop %v333
  %v350 = vrcp.pop %v334
  %v351 = vrcp.pop %v335
  %v352 = vrcp.pop %v336
  %v353 = vrcp.pop %v337
  %v354 = vrcp.pop %v338
  %v355 = vrcp.pop %v339
  %v356 = vrcp.pop %v340
  %v357 = vrcp.pop %v341
  %v358 = vrcp.pop %v342
  %v359 = vrcp.pop %v343
  %v360 = vrcp.pop %v344
  %v361 = vrcp.pop %v345
  %v362 = vrcp.pop %v346
  %v363 = vmul.f32 %v331, %v347
  %v364 = vmul.f32 %v332, %v348
  %v365 = vmul.f32 %v333, %v349
  %v366 = vmul.f32 %v334, %v350
  %v367 = vmul.f32 %v335, %v351
  %v368 = vmul.f32 %v336, %v352
  %v369 = vmul.f32 %v337, %v353
  %v370 = vmul.f32 %v338, %v354
  %v371 = vmul.f32 %v339, %v355
  %v372 = vmul.f32 %v340, %v356
  %v373 = vmul.f32 %v341, %v357
  %v374 = vmul.f32 %v342, %v358
  %v375 = vmul.f32 %v343, %v359
  %v376 = vmul.f32 %v344, %v360
  %v377 = vmul.f32 %v345, %v361
  %v378 = vmul.f32 %v346, %v362
  %v379 = vsub.f32 2.0, %v363
  %v380 = vsub.f32 2.0, %v364
  %v381 = vsub.f32 2.0, %v365
  %v382 = vsub.f32 2.0, %v366
  %v383 = vsub.f32 2.0, %v367
  %v384 = vsub.f32 2.0, %v368
  %v385 = vsub.f32 2.0, %v369
  %v386 = vsub.f32 2.0, %v370
  %v387 = vsub.f32 2.0, %v371
  %v388 = vsub.f32 2.0, %v372
  %v389 = vsub.f32 2.0, %v373
  %v390 = vsub.f32 2.0, %v374
  %v391 = vsub.f32 2.0, %v375
  %v392 = vsub.f32 2.0, %v376
  %v393 = vsub.f32 2.0, %v377
  %v394 = vsub.f32 2.0, %v378
  %v395 = vmul.f32 %v347, %v379
  %v396 = vmul.f32 %v348, %v380
  %v397 = vmul.f32 %v349, %v381
  %v398 = vmul.f32 %v350, %v382
  %v399 = vmul.f32 %v351, %v383
  %v400 = vmul.f32 %v352, %v384
  %v401 = vmul.f32 %v353, %v385
  %v402 = vmul.f32 %v354, %v386
  %v403 = vmul.f32 %v355, %v387
  %v404 = vmul.f32 %v356, %v388
  %v405 = vmul.f32 %v357, %v389
  %v406 = vmul.f32 %v358, %v390
  %v407 = vmul.f32 %v359, %v391
  %v408 = vmul.f32 %v360, %v392
  %v409 = vmul.f32 %v361, %v393
  %v410 = vmul.f32 %v362, %v394
  %v411 = vmul.f32 %v395, 1.0614054
  %v412 = vmul.f32 %v396, 1.0614054
  %v413 = vmul.f32 %v397, 1.0614054
  %v414 = vmul.f32 %v398, 1.0614054
  %v415 = vmul.f32 %v399, 1.0614054
  %v416 = vmul.f32 %v400, 1.0614054
  %v417 = vmul.f32 %v401, 1.0614054
  %v418 = vmul.f32 %v402, 1.0614054
  %v419 = vmul.f32 %v403, 1.0614054
  %v420 = vmul.f32 %v404, 1.0614054
  %v421 = vmul.f32 %v405, 1.0614054
  %v422 = vmul.f32 %v406, 1.0614054
  %v423 = vmul.f32 %v407, 1.0614054
  %v424 = vmul.f32 %v408, 1.0614054
  %v425 = vmul.f32 %v409, 1.0614054
  %v426 = vmul.f32 %v410, 1.0614054
  %v427 = vadd.f32 %v411, -1.4531521
  %v428 = vadd.f32 %v412, -1.4531521
  %v429 = vadd.f32 %v413, -1.4531521
  %v430 = vadd.f32 %v414, -1.4531521
  %v431 = vadd.f32 %v415, -1.4531521
  %v432 = vadd.f32 %v416, -1.4531521
  %v433 = vadd.f32 %v417, -1.4531521
  %v434 = vadd.f32 %v418, -1.4531521
  %v435 = vadd.f32 %v419, -1.4531521
  %v436 = vadd.f32 %v420, -1.4531521
  %v437 = vadd.f32 %v421, -1.4531521
  %v438 = vadd.f32 %v422, -1.4531521
  %v439 = vadd.f32 %v423, -1.4531521
  %v440 = vadd.f32 %v424, -1.4531521
  %v441 = vadd.f32 %v425, -1.4531521
  %v442 = vadd.f32 %v426, -1.4531521
  %v443 = vmul.f32 %v427, %v395
  %v444 = vmul.f32 %v428, %v396
  %v445 = vmul.f32 %v429, %v397
  %v446 = vmul.f32 %v430, %v398
  %v447 = vmul.f32 %v431, %v399
  %v448 = vmul.f32 %v432, %v400
  %v449 = vmul.f32 %v433, %v401
  %v450 = vmul.f32 %v434, %v402
  %v451 = vmul.f32 %v435, %v403
  %v452 = vmul.f32 %v436, %v404
  %v453 = vmul.f32 %v437, %v405
  %v454 = vmul.f32 %v438, %v406
  %v455 = vmul.f32 %v439, %v407
  %v456 = vmul.f32 %v440, %v408
  %v457 = vmul.f32 %v441, %v409
  %v458 = vmul.f32 %v442, %v410
  %v459 = vadd.f32 %v443, 1.4214138
  %v460 = vadd.f32 %v444, 1.4214138
  %v461 = vadd.f32 %v445, 1.4214138
  %v462 = vadd.f32 %v446, 1.4214138
  %v463 = vadd.f32 %v447, 1.4214138
  %v464 = vadd.f32 %v448, 1.4214138
  %v465 = vadd.f32 %v449, 1.4214138
  %v466 = vadd.f32 %v450, 1.4214138
  %v467 = vadd.f32 %v451, 1.4214138
  %v468 = vadd.f32 %v452, 1.4214138
  %v469 = vadd.f32 %v453, 1.4214138
  %v470 = vadd.f32 %v454, 1.4214138
  %v471 = vadd.f32 %v455, 1.4214138
  %v472 = vadd.f32 %v456, 1.4214138
  %v473 = vadd.f32 %v457, 1.4214138
  %v474 = vadd.f32 %v458, 1.4214138
  %v475 = vmul.f32 %v459, %v395
  %v476 = vmul.f32 %v460, %v396
  %v477 = vmul.f32 %v461, %v397
  %v478 = vmul.f32 %v462, %v398
  %v479 = vmul.f32 %v463, %v399
  %v480 = vmul.f32 %v464, %v400
  %v481 = vmul.f32 %v465, %v401
  %v482 = vmul.f32 %v466, %v402
  %v483 = vmul.f32 %v467, %v403
  %v484 = vmul.f32 %v468, %v404
  %v485 = vmul.f32 %v469, %v405
  %v486 = vmul.f32 %v470, %v406
  %v487 = vmul.f32 %v471, %v407
  %v488 = vmul.f32 %v472, %v408
  %v489 = vmul.f32 %v473, %v409
  %v490 = vmul.f32 %v474, %v410
  %v491 = vadd.f32 %v475, -0.28449672
  %v492 = vadd.f32 %v476, -0.28449672
  %v493 = vadd.f32 %v477, -0.28449672
  %v494 = vadd.f32 %v478, -0.28449672
  %v495 = vadd.f32 %v479, -0.28449672
  %v496 = vadd.f32 %v480, -0.28449672
  %v497 = vadd.f32 %v481, -0.28449672
  %v498 = vadd.f32 %v482, -0.28449672
  %v499 = vadd.f32 %v483, -0.28449672
  %v500 = vadd.f32 %v484, -0.28449672
  %v501 = vadd.f32 %v485, -0.28449672
  %v502 = vadd.f32 %v486, -0.28449672
  %v503 = vadd.f32 %v487, -0.28449672
  %v504 = vadd.f32 %v488, -0.28449672
  %v505 = vadd.f32 %v489, -0.28449672
  %v506 = vadd.f32 %v490, -0.28449672
  %v507 = vmul.f32 %v491, %v395
  %v508 = vmul.f32 %v492, %v396
  %v509 = vmul.f32 %v493, %v397
  %v510 = vmul.f32 %v494, %v398
  %v511 = vmul.f32 %v495, %v399
  %v512 = vmul.f32 %v496, %v400
  %v513 = vmul.f32 %v497, %v401
  %v514 = vmul.f32 %v498, %v402
  %v515 = vmul.f32 %v499, %v403
  %v516 = vmul.f32 %v500, %v404
  %v517 = vmul.f32 %v501, %v405
  %v518 = vmul.f32 %v502, %v406
  %v519 = vmul.f32 %v503, %v407
  %v520 = vmul.f32 %v504, %v408
  %v521 = vmul.f32 %v505, %v409
  %v522 = vmul.f32 %v506, %v410
  %v523 = vadd.f32 %v507, 0.2548296
  %v524 = vadd.f32 %v508, 0.2548296
  %v525 = vadd.f32 %v509, 0.2548296
  %v526 = vadd.f32 %v510, 0.2548296
  %v527 = vadd.f32 %v511, 0.2548296
  %v528 = vadd.f32 %v512, 0.2548296
  %v529 = vadd.f32 %v513, 0.2548296
  %v530 = vadd.f32 %v514, 0.2548296
  %v531 = vadd.f32 %v515, 0.2548296
  %v532 = vadd.f32 %v516, 0.2548296
  %v533 = vadd.f32 %v517, 0.2548296
  %v534 = vadd.f32 %v518, 0.2548296
  %v535 = vadd.f32 %v519, 0.2548296
  %v536 = vadd.f32 %v520, 0.2548296
  %v537 = vadd.f32 %v521, 0.2548296
  %v538 = vadd.f32 %v522, 0.2548296
  %v539 = vmul.f32 %v523, %v395
  %v540 = vmul.f32 %v524, %v396
  %v541 = vmul.f32 %v525, %v397
  %v542 = vmul.f32 %v526, %v398
  %v543 = vmul.f32 %v527, %v399
  %v544 = vmul.f32 %v528, %v400
  %v545 = vmul.f32 %v529, %v401
  %v546 = vmul.f32 %v530, %v402
  %v547 = vmul.f32 %v531, %v403
  %v548 = vmul.f32 %v532, %v404
  %v549 = vmul.f32 %v533, %v405
  %v550 = vmul.f32 %v534, %v406
  %v551 = vmul.f32 %v535, %v407
  %v552 = vmul.f32 %v536, %v408
  %v553 = vmul.f32 %v537, %v409
  %v554 = vmul.f32 %v538, %v410
  %v555 = vsub.f32 0.0, %v299
  %v556 = vsub.f32 0.0, %v300
  %v557 = vsub.f32 0.0, %v301
  %v558 = vsub.f32 0.0, %v302
  %v559 = vsub.f32 0.0, %v303
  %v560 = vsub.f32 0.0, %v304
  %v561 = vsub.f32 0.0, %v305
  %v562 = vsub.f32 0.0, %v306
  %v563 = vsub.f32 0.0, %v307
  %v564 = vsub.f32 0.0, %v308
  %v565 = vsub.f32 0.0, %v309
  %v566 = vsub.f32 0.0, %v310
  %v567 = vsub.f32 0.0, %v311
  %v568 = vsub.f32 0.0, %v312
  %v569 = vsub.f32 0.0, %v313
  %v570 = vsub.f32 0.0, %v314
  %v571 = vmul.f32 %v555, %v299
  %v572 = vmul.f32 %v556, %v300
  %v573 = vmul.f32 %v557, %v301
  %v574 = vmul.f32 %v558, %v302
  %v575 = vmul.f32 %v559, %v303
  %v576 = vmul.f32 %v560, %v304
  %v577 = vmul.f32 %v561, %v305
  %v578 = vmul.f32 %v562, %v306
  %v579 = vmul.f32 %v563, %v307
  %v580 = vmul.f32 %v564, %v308
  %v581 = vmul.f32 %v565, %v309
  %v582 = vmul.f32 %v566, %v310
  %v583 = vmul.f32 %v567, %v311
  %v584 = vmul.f32 %v568, %v312
  %v585 = vmul.f32 %v569, %v313
  %v586 = vmul.f32 %v570, %v314
  %v587 = vmul.f32 %v571, 1.442695
  %v588 = vpow.pop %v587
  %v589 = vmul.f32 %v572, 1.442695
  %v590 = vpow.pop %v589
  %v591 = vmul.f32 %v573, 1.442695
  %v592 = vpow.pop %v591
  %v593 = vmul.f32 %v574, 1.442695
  %v594 = vpow.pop %v593
  %v595 = vmul.f32 %v575, 1.442695
  %v596 = vpow.pop %v595
  %v597 = vmul.f32 %v576, 1.442695
  %v598 = vpow.pop %v597
  %v599 = vmul.f32 %v577, 1.442695
  %v600 = vpow.pop %v599
  %v601 = vmul.f32 %v578, 1.442695
  %v602 = vpow.pop %v601
  %v603 = vmul.f32 %v579, 1.442695
  %v604 = vpow.pop %v603
  %v605 = vmul.f32 %v580, 1.442695
  %v606 = vpow.pop %v605
  %v607 = vmul.f32 %v581, 1.442695
  %v608 = vpow.pop %v607
  %v609 = vmul.f32 %v582, 1.442695
  %v610 = vpow.pop %v609
  %v611 = vmul.f32 %v583, 1.442695
  %v612 = vpow.pop %v611
  %v613 = vmul.f32 %v584, 1.442695
  %v614 = vpow.pop %v613
  %v615 = vmul.f32 %v585, 1.442695
  %v616 = vpow.pop %v615
  %v617 = vmul.f32 %v586, 1.442695
  %v618 = vpow.pop %v617
  %v619 = vmul.f32 %v539, %v588
  %v620 = vmul.f32 %v540, %v590
  %v621 = vmul.f32 %v541, %v592
  %v622 = vmul.f32 %v542, %v594
  %v623 = vmul.f32 %v543, %v596
  %v624 = vmul.f32 %v544, %v598
  %v625 = vmul.f32 %v545, %v600
  %v626 = vmul.f32 %v546, %v602
  %v627 = vmul.f32 %v547, %v604
  %v628 = vmul.f32 %v548, %v606
  %v629 = vmul.f32 %v549, %v608
  %v630 = vmul.f32 %v550, %v610
  %v631 = vmul.f32 %v551, %v612
  %v632 = vmul.f32 %v552, %v614
  %v633 = vmul.f32 %v553, %v616
  %v634 = vmul.f32 %v554, %v618
  %v635 = vsub.f32 1.0, %v619
  %v636 = vsub.f32 1.0, %v620
  %v637 = vsub.f32 1.0, %v621
  %v638 = vsub.f32 1.0, %v622
  %v639 = vsub.f32 1.0, %v623
  %v640 = vsub.f32 1.0, %v624
  %v641 = vsub.f32 1.0, %v625
  %v642 = vsub.f32 1.0, %v626
  %v643 = vsub.f32 1.0, %v627
  %v644 = vsub.f32 1.0, %v628
  %v645 = vsub.f32 1.0, %v629
  %v646 = vsub.f32 1.0, %v630
  %v647 = vsub.f32 1.0, %v631
  %v648 = vsub.f32 1.0, %v632
  %v649 = vsub.f32 1.0, %v633
  %v650 = vsub.f32 1.0, %v634
  %v651 = vmul.f32 %v283, %v635
  %v652 = vmul.f32 %v284, %v636
  %v653 = vmul.f32 %v285, %v637
  %v654 = vmul.f32 %v286, %v638
  %v655 = vmul.f32 %v287, %v639
  %v656 = vmul.f32 %v288, %v640
  %v657 = vmul.f32 %v289, %v641
  %v658 = vmul.f32 %v290, %v642
  %v659 = vmul.f32 %v291, %v643
  %v660 = vmul.f32 %v292, %v644
  %v661 = vmul.f32 %v293, %v645
  %v662 = vmul.f32 %v294, %v646
  %v663 = vmul.f32 %v295, %v647
  %v664 = vmul.f32 %v296, %v648
  %v665 = vmul.f32 %v297, %v649
  %v666 = vmul.f32 %v298, %v650
  %v667 = vadd.f32 %v651, 1.0
  %v668 = vadd.f32 %v652, 1.0
  %v669 = vadd.f32 %v653, 1.0
  %v670 = vadd.f32 %v654, 1.0
  %v671 = vadd.f32 %v655, 1.0
  %v672 = vadd.f32 %v656, 1.0
  %v673 = vadd.f32 %v657, 1.0
  %v674 = vadd.f32 %v658, 1.0
  %v675 = vadd.f32 %v659, 1.0
  %v676 = vadd.f32 %v660, 1.0
  %v677 = vadd.f32 %v661, 1.0
  %v678 = vadd.f32 %v662, 1.0
  %v679 = vadd.f32 %v663, 1.0
  %v680 = vadd.f32 %v664, 1.0
  %v681 = vadd.f32 %v665, 1.0
  %v682 = vadd.f32 %v666, 1.0
  %v683 = vmul.f32 %v235, %v667
  %v684 = vmul.f32 %v236, %v668
  %v685 = vmul.f32 %v237, %v669
  %v686 = vmul.f32 %v238, %v670
  %v687 = vmul.f32 %v239, %v671
  %v688 = vmul.f32 %v240, %v672
  %v689 = vmul.f32 %v241, %v673
  %v690 = vmul.f32 %v242, %v674
  %v691 = vmul.f32 %v243, %v675
  %v692 = vmul.f32 %v244, %v676
  %v693 = vmul.f32 %v245, %v677
  %v694 = vmul.f32 %v246, %v678
  %v695 = vmul.f32 %v247, %v679
  %v696 = vmul.f32 %v248, %v680
  %v697 = vmul.f32 %v249, %v681
  %v698 = vmul.f32 %v250, %v682
  %v699 = vld [vmem:[%s2 + $0x1] sm:$0x1]
  %v700 = vlaneseq
  %v701 = vshrl.u32 %v700, 7
  %v702 = vsub.s32 0, %v701
  %v703 = vrot.slane %v699, %v702
  %v704 = vmul.f32 %v683, %v703
  %v705 = vmul.f32 %v684, %v703
  %v706 = vmul.f32 %v685, %v703
  %v707 = vmul.f32 %v686, %v703
  %v708 = vmul.f32 %v687, %v703
  %v709 = vmul.f32 %v688, %v703
  %v710 = vmul.f32 %v689, %v703
  %v711 = vmul.f32 %v690, %v703
  %v712 = vmul.f32 %v691, %v703
  %v713 = vmul.f32 %v692, %v703
  %v714 = vmul.f32 %v693, %v703
  %v715 = vmul.f32 %v694, %v703
  %v716 = vmul.f32 %v695, %v703
  %v717 = vmul.f32 %v696, %v703
  %v718 = vmul.f32 %v697, %v703
  %v719 = vmul.f32 %v698, %v703
  %v720 = vld [vmem:[%s2 + $0x2] sm:$0x1]
  %v721 = vlaneseq
  %v722 = vshrl.u32 %v721, 7
  %v723 = vsub.s32 0, %v722
  %v724 = vrot.slane %v720, %v723
  %v725 = vadd.f32 %v704, %v724
  %v726 = vadd.f32 %v705, %v724
  %v727 = vadd.f32 %v706, %v724
  %v728 = vadd.f32 %v707, %v724
  %v729 = vadd.f32 %v708, %v724
  %v730 = vadd.f32 %v709, %v724
  %v731 = vadd.f32 %v710, %v724
  %v732 = vadd.f32 %v711, %v724
  %v733 = vadd.f32 %v712, %v724
  %v734 = vadd.f32 %v713, %v724
  %v735 = vadd.f32 %v714, %v724
  %v736 = vadd.f32 %v715, %v724
  %v737 = vadd.f32 %v716, %v724
  %v738 = vadd.f32 %v717, %v724
  %v739 = vadd.f32 %v718, %v724
  %v740 = vadd.f32 %v719, %v724
  %741 = vst [vmem:[%s3] sm:$0xff] %v725
  %742 = vst [vmem:[%s3 + $0x8] sm:$0xff] %v726
  %743 = vst [vmem:[%s3 + $0x10] sm:$0xff] %v727
  %744 = vst [vmem:[%s3 + $0x18] sm:$0xff] %v728
  %745 = vst [vmem:[%s3 + $0x20] sm:$0xff] %v729
  %746 = vst [vmem:[%s3 + $0x28] sm:$0xff] %v730
  %747 = vst [vmem:[%s3 + $0x30] sm:$0xff] %v731
  %748 = vst [vmem:[%s3 + $0x38] sm:$0xff] %v732
  %749 = vst [vmem:[%s3 + $0x40] sm:$0xff] %v733
  %750 = vst [vmem:[%s3 + $0x48] sm:$0xff] %v734
  %751 = vst [vmem:[%s3 + $0x50] sm:$0xff] %v735
  %752 = vst [vmem:[%s3 + $0x58] sm:$0xff] %v736
  %753 = vst [vmem:[%s3 + $0x60] sm:$0xff] %v737
  %754 = vst [vmem:[%s3 + $0x68] sm:$0xff] %v738
  %755 = vst [vmem:[%s3 + $0x70] sm:$0xff] %v739
  %756 = vst [vmem:[%s3 + $0x78] sm:$0xff] %v740
  // Predicated region
  $region14: #{conv_mixer_forward.4} parent=0 // pred_check
    _
  $region15: #{conv_mixer_forward.4} parent=0 // pred_check_branch
    %758 = sbr.rel (0) target = $region17
  $region16: #{conv_mixer_forward.4} parent=0 // pred_region
    _
  $region17: #{conv_mixer_forward.4} parent=0 // pred_fallthru
    _
  // Predicated region
  $region18: #{conv_mixer_forward.4} parent=0 // pred_check
    _
  $region19: #{conv_mixer_forward.4} parent=0 // pred_check_branch
    %760 = sbr.rel (0) target = $region21
  $region20: #{conv_mixer_forward.4} parent=0 // pred_region
    _
  $region21: #{conv_mixer_forward.4} parent=0 // pred_fallthru
    _

// kernel: conv_mixer_forward.7
$region0: #{conv_mixer_forward.7}
  #allocation0 [shape = 'u32[]', space=smem, size = 0x4, offset = 0x4, fixed_abs, tag = 'smem constant byte address 0x4 - core index']
  #allocation1 [shape = 'u32[144,128]{1,0:T(1,128)}', space=vmem, size = 0x12000, scoped, tag = 'internal scratch']
  %s0 = inlined_call_operand.vmem [shape: f32[2,64,128], index: 0, kind: input, shape index: {}]
  %s1 = inlined_call_operand.vmem [shape: f32[128,128], index: 1, kind: input, shape index: {}]
  %s2 = inlined_call_operand.vmem [shape: f32[1,128], index: 2, kind: input, shape index: {}]
  %s3 = inlined_call_operand.hbm [shape: f32[2,128], index: 3, kind: output, shape index: {}]
  %s4 = sld [smem:[#allocation0]]
  $region22: #{conv_mixer_forward.7} parent=0
    _
  %s6 = ssub.s32 1, %s4
  %s7 = scalar_select 0, %s6, %s4
  $region1: #{conv_mixer_forward.7} parent=0
    #allocation2 [shape = 'u8[1024]{0}', space=vmem, size = 0x400, scoped, tag = 'output window, operand 0, single buffered']
    #allocation3 [shape = 's32[1]{0}', space=sflag, size = 0x4, scoped, tag = 'scoped memory for conv_mixer_forward.7']
    %8 = vsyncpa [#allocation3], 0
    // Predicated region
    $region2: #{conv_mixer_forward.7} parent=1 // pred_check
      _
    $region3: #{conv_mixer_forward.7} parent=1 // pred_check_branch
      %10 = sbr.rel (0) target = $region5
    $region4: #{conv_mixer_forward.7} parent=1 // pred_region
      _
    $region5: #{conv_mixer_forward.7} parent=1 // pred_fallthru
      _
    // Predicated region
    $region6: #{conv_mixer_forward.7} parent=1 // pred_check
      _
    $region7: #{conv_mixer_forward.7} parent=1 // pred_check_branch
      %12 = sbr.rel (0) target = $region9
    $region8: #{conv_mixer_forward.7} parent=1 // pred_region
      _
    $region9: #{conv_mixer_forward.7} parent=1 // pred_fallthru
      _
    // Predicated region
    $region10: #{conv_mixer_forward.7} parent=1 // pred_check
      _
    $region11: #{conv_mixer_forward.7} parent=1 // pred_check_branch
      %14 = sbr.rel (0) target = $region13
    $region12: #{conv_mixer_forward.7} parent=1 // pred_region
      _
    $region13: #{conv_mixer_forward.7} parent=1 // pred_fallthru
      _
    %v15 = vld [vmem:[%s0] sm:$0xff]
    %v16 = vld [vmem:[%s0 + $0x8] sm:$0xff]
    %v17 = vld [vmem:[%s0 + $0x10] sm:$0xff]
    %v18 = vld [vmem:[%s0 + $0x18] sm:$0xff]
    %v19 = vld [vmem:[%s0 + $0x20] sm:$0xff]
    %v20 = vld [vmem:[%s0 + $0x28] sm:$0xff]
    %v21 = vld [vmem:[%s0 + $0x30] sm:$0xff]
    %v22 = vld [vmem:[%s0 + $0x38] sm:$0xff]
    %v23 = vld [vmem:[%s0 + $0x40] sm:$0xff]
    %v24 = vld [vmem:[%s0 + $0x48] sm:$0xff]
    %v25 = vld [vmem:[%s0 + $0x50] sm:$0xff]
    %v26 = vld [vmem:[%s0 + $0x58] sm:$0xff]
    %v27 = vld [vmem:[%s0 + $0x60] sm:$0xff]
    %v28 = vld [vmem:[%s0 + $0x68] sm:$0xff]
    %v29 = vld [vmem:[%s0 + $0x70] sm:$0xff]
    %v30 = vld [vmem:[%s0 + $0x78] sm:$0xff]
    %v31 = vadd.f32 %v15, %v16
    %v32 = vadd.f32 %v31, %v17
    %v33 = vadd.f32 %v32, %v18
    %v34 = vadd.f32 %v33, %v19
    %v35 = vadd.f32 %v34, %v20
    %v36 = vadd.f32 %v35, %v21
    %v37 = vadd.f32 %v36, %v22
    %v38 = vrot.slane %v37, 4
    %v39 = vadd.f32 %v37, %v38
    %v40 = vrot.slane %v39, 2
    %v41 = vadd.f32 %v39, %v40
    %v42 = vrot.slane %v41, 1
    %v43 = vadd.f32 %v41, %v42
    %v44 = vadd.f32 %v23, %v24
    %v45 = vadd.f32 %v44, %v25
    %v46 = vadd.f32 %v45, %v26
    %v47 = vadd.f32 %v46, %v27
    %v48 = vadd.f32 %v47, %v28
    %v49 = vadd.f32 %v48, %v29
    %v50 = vadd.f32 %v49, %v30
    %v51 = vrot.slane %v50, 4
    %v52 = vadd.f32 %v50, %v51
    %v53 = vrot.slane %v52, 2
    %v54 = vadd.f32 %v52, %v53
    %v55 = vrot.slane %v54, 1
    %v56 = vadd.f32 %v54, %v55
    %v57 = vmul.f32 %v43, 0.015625
    %v58 = vmul.f32 %v56, 0.015625
    %v59 = vld [vmem:[%s1] sm:$0xff]
    %v60 = vld [vmem:[%s1 + $0x8] sm:$0xff]
    %v61 = vld [vmem:[%s1 + $0x10] sm:$0xff]
    %v62 = vld [vmem:[%s1 + $0x18] sm:$0xff]
    %v63 = vld [vmem:[%s1 + $0x20] sm:$0xff]
    %v64 = vld [vmem:[%s1 + $0x28] sm:$0xff]
    %v65 = vld [vmem:[%s1 + $0x30] sm:$0xff]
    %v66 = vld [vmem:[%s1 + $0x38] sm:$0xff]
    %v67 = vld [vmem:[%s1 + $0x40] sm:$0xff]
    %v68 = vld [vmem:[%s1 + $0x48] sm:$0xff]
    %v69 = vld [vmem:[%s1 + $0x50] sm:$0xff]
    %v70 = vld [vmem:[%s1 + $0x58] sm:$0xff]
    %v71 = vld [vmem:[%s1 + $0x60] sm:$0xff]
    %v72 = vld [vmem:[%s1 + $0x68] sm:$0xff]
    %v73 = vld [vmem:[%s1 + $0x70] sm:$0xff]
    %v74 = vld [vmem:[%s1 + $0x78] sm:$0xff]
    %v75 = vld [vmem:[%s2] sm:$0x1]
    %v77 = vlaneseq
    %v78 = vshrl.u32 %v77, 7
    %v79 = vsub.s32 0, %v78
    %v80 = vrot.slane %v75, %v79
    %vm84 = vcmask 1041409
    %v85 = vsel %vm84, %v58, %v57
    %87 = vmatprep.subr.mxu0 0.0
    %88 = vmatpush1.msra.mxu0 %v74
    %89 = vmatprep.subr.mxu0 0.0
    %90 = vmatpush1.msra.mxu0 %v73
    %91 = vmatprep.subr.mxu0 0.0
    %92 = vmatpush1.msra.mxu0 %v72
    %93 = vmatprep.subr.mxu0 0.0
    %94 = vmatpush1.msra.mxu0 %v71
    %95 = vmatprep.subr.mxu0 0.0
    %96 = vmatpush1.msra.mxu0 %v70
    %97 = vmatprep.subr.mxu0 0.0
    %98 = vmatpush1.msra.mxu0 %v69
    %99 = vmatprep.subr.mxu0 0.0
    %100 = vmatpush1.msra.mxu0 %v68
    %101 = vmatprep.subr.mxu0 0.0
    %102 = vmatpush1.msra.mxu0 %v67
    %103 = vmatprep.subr.mxu0 0.0
    %104 = vmatpush1.msra.mxu0 %v66
    %105 = vmatprep.subr.mxu0 0.0
    %106 = vmatpush1.msra.mxu0 %v65
    %107 = vmatprep.subr.mxu0 0.0
    %108 = vmatpush1.msra.mxu0 %v64
    %109 = vmatprep.subr.mxu0 0.0
    %110 = vmatpush1.msra.mxu0 %v63
    %111 = vmatprep.subr.mxu0 0.0
    %112 = vmatpush1.msra.mxu0 %v62
    %113 = vmatprep.subr.mxu0 0.0
    %114 = vmatpush1.msra.mxu0 %v61
    %115 = vmatprep.subr.mxu0 0.0
    %116 = vmatpush1.msra.mxu0 %v60
    %117 = vmatprep.subr.mxu0 0.0
    %118 = vmatpush1.msra.mxu0 %v59
    %119 = vmatprep.subr.mxu0 0.0
    %120 = vmatpush2.msra.mxu0 0.0
    %121 = vmatprep.subr.mxu0 0.0
    %122 = vmatpush2.msra.mxu0 0.0
    %123 = vmatprep.subr.mxu0 0.0
    %124 = vmatpush2.msra.mxu0 0.0
    %125 = vmatprep.subr.mxu0 0.0
    %126 = vmatpush2.msra.mxu0 0.0
    %127 = vmatprep.subr.mxu0 0.0
    %128 = vmatpush2.msra.mxu0 0.0
    %129 = vmatprep.subr.mxu0 0.0
    %130 = vmatpush2.msra.mxu0 0.0
    %131 = vmatprep.subr.mxu0 0.0
    %132 = vmatpush2.msra.mxu0 0.0
    %133 = vmatprep.subr.mxu0 0.0
    %134 = vmatpush2.msra.mxu0 0.0
    %135 = vmatprep.subr.mxu0 0.0
    %136 = vmatpush2.msra.mxu0 0.0
    %137 = vmatprep.subr.mxu0 0.0
    %138 = vmatpush2.msra.mxu0 0.0
    %139 = vmatprep.subr.mxu0 0.0
    %140 = vmatpush2.msra.mxu0 0.0
    %141 = vmatprep.subr.mxu0 0.0
    %142 = vmatpush2.msra.mxu0 0.0
    %143 = vmatprep.subr.mxu0 0.0
    %144 = vmatpush2.msra.mxu0 0.0
    %145 = vmatprep.subr.mxu0 0.0
    %146 = vmatpush2.msra.mxu0 0.0
    %147 = vmatprep.subr.mxu0 0.0
    %148 = vmatpush2.msra.mxu0 0.0
    %149 = vmatprep.subr.mxu0 0.0
    %150 = vmatpush2.msra.mxu0 0.0
    %151 = vmatprep.mubr.f32.mxu0 0.0
    %152 = vmatmul.mubr.f32.gmra.mxu0 %v85
    %v153 = vpop.f32.mrf.mxu0
    %v154 = vadd.f32 %v80, %v153
    %v155 = vpop.f32.mrf.mxu0
    %156 = vdwg.mxu0
    %157 = vst [vmem:[#allocation2] sm:$0x3] %v154
    // Predicated region
    $region14: #{conv_mixer_forward.7} parent=1 // pred_check
      _
    $region15: #{conv_mixer_forward.7} parent=1 // pred_check_branch
      %159 = sbr.rel (0) target = $region17
    $region16: #{conv_mixer_forward.7} parent=1 // pred_region
      %s161 = ssub.s32 32, 32
      %162 = vsyncadd [#allocation3], %s161
      %s164 = sshll.u32 [#allocation2], 4
      %s165 = int_to_ptr.vmem [resolvable:$true] %s164
      %167 = dma.vmem_to_hbm [thread:$0]  %s165, 32, %s3, [#allocation3]
    $region17: #{conv_mixer_forward.7} parent=1 // pred_fallthru
      _
    // Predicated region
    $region18: #{conv_mixer_forward.7} parent=1 // pred_check
      _
    $region19: #{conv_mixer_forward.7} parent=1 // pred_check_branch
      %169 = sbr.rel (0) target = $region21
    $region20: #{conv_mixer_forward.7} parent=1 // pred_region
      %170 = dma.done [#allocation3], 32
    $region21: #{conv_mixer_forward.7} parent=1 // pred_fallthru
      _
    %171 = vsyncpa [#allocation3], 1

// kernel: conv_mixer_forward.5
$region0: #{conv_mixer_forward.5}
  #allocation0 [shape = 'u32[]', space=smem, size = 0x4, offset = 0x4, fixed_abs, tag = 'smem constant byte address 0x4 - core index']
  #allocation1 [shape = 'u32[144,128]{1,0:T(1,128)}', space=vmem, size = 0x12000, scoped, tag = 'internal scratch']
  #allocation2 [shape = 'f32[12,8,128]{2,1,0:T(8,128)}', space=vmem, size = 0xc000, scoped, tag = 'scratch operand']
  %s0 = inlined_call_operand.vmem [shape: f32[2,8,8,128], index: 0, kind: input, shape index: {}, may-alias: {0,1,2}]
  %s1 = inlined_call_operand.vmem [shape: f32[2,8,8,128], index: 1, kind: input, shape index: {}, may-alias: {0,1,2}]
  %s2 = inlined_call_operand.vmem [shape: f32[2,8,8,128], index: 2, kind: input, shape index: {}, may-alias: {0,1,2}]
  %s3 = inlined_call_operand.vmem [shape: f32[5,5,128], index: 3, kind: input, shape index: {}]
  %s4 = inlined_call_operand.vmem [shape: f32[3,128], index: 4, kind: input, shape index: {}]
  %s5 = inlined_call_operand.vmem [shape: f32[128,128], index: 5, kind: input, shape index: {}]
  %s6 = inlined_call_operand.vmem [shape: f32[3,128], index: 6, kind: input, shape index: {}]
  %s7 = inlined_call_operand.vmem [shape: f32[2,8,8,128], index: 7, kind: output, shape index: {}]
  %s8 = sld [smem:[#allocation0]]
  $region77: #{conv_mixer_forward.5} parent=0
    _
  %s10 = ssub.s32 1, %s8
  %s11 = scalar_select 0, %s10, %s8
  loop: start=0, step=1, limit=4
  $region2: #{conv_mixer_forward.5} parent=0 // loop_pre_header
    _
  $region3: #{conv_mixer_forward.5} parent=0 // loop_header
    %s13 = sphi 0, %s17
    %p14 = scmp.ge.s32.totalorder %s13, 4
    %s20 = sphi 0, %s32
    %s21 = sphi 0, %s28
    %s22 = sphi 0, %s20
    %s23 = sphi 0, %s21
    %s24 = sphi 0, %s22
    %s25 = sphi 0, %s23
    %s37 = sphi 0, %s39
    %s40 = sphi 0, %s37
    %s41 = sphi 0, %s40
    %s57 = sphi 0, %s41
    %s73 = sphi 0, %s75
    %s76 = sphi 0, %s73
    %s77 = sphi 0, %s76
    %s93 = sphi 0, %s77
    %s109 = sphi 0, %s111
    %s112 = sphi 0, %s109
    %s113 = sphi 0, %s112
    %s129 = sphi 0, %s113
    %s133 = sphi 0, %s133
    %s135 = sphi 0, %s133
    %s136 = sphi 0, %s135
    %s150 = sphi 0, %s136
    %s154 = sphi 0, %s154
    %s156 = sphi 0, %s154
    %s157 = sphi 0, %s156
    %s171 = sphi 0, %s157
    %s175 = sphi 0, %s175
    %s177 = sphi 0, %s175
    %s178 = sphi 0, %s177
    %s192 = sphi 0, %s178
    %s196 = sphi 0, %s196
    %s198 = sphi 0, %s196
    %s199 = sphi 0, %s198
    %s213 = sphi 0, %s199
    %s221 = sphi 0, %s223
    %s224 = sphi 0, %s221
    %s225 = sphi 0, %s224
    %s241 = sphi 0, %s225
  $region4: #{conv_mixer_forward.5} parent=0 // loop_header_branch
    %16 = sbr.rel (%p14) target = $region8
  $region5: #{conv_mixer_forward.5} parent=0 // loop_body
    %s18 = ssub.s32 %s13, 1
    %s19 = ssub.s32 %s13, 2
    %s26 = sadd.s32 1, %s21
    %p27 = scmp.ge.s32.totalorder %s26, 1
    %s28 = scalar_select %p27, 0, %s26
    %s29 = sadd.s32 1, %s20
    %s30 = scalar_select %p27, %s29, %s20
    %p31 = scmp.ge.s32.totalorder %s30, 2
    %s32 = scalar_select %p31, 0, %s30
    %s33 = ssub.s32 %s20, %s32
    %s34 = ssub.s32 %s21, %s28
    %s35 = sor.u32 %s33, %s34
    %p36 = scmp.eq.s32.totalorder %s35, 0
    %s38 = sadd.s32 %s37, 1
    %s39 = scalar_select %p36, %s37, %s38
    %p42 = pneg %p36
    %p43 = scmp.eq.s32.totalorder %s13, 1
    %p44 = por %p42, %p43
    %p45 = scmp.ne.s32.totalorder %s37, %s40
    %p46 = scmp.eq.s32.totalorder %s13, 0
    %p47 = por %p45, %p46
    %p48 = scmp.ne.s32.totalorder %s37, %s40
    %p49 = scmp.eq.s32.totalorder %s18, 1
    %p50 = por %p48, %p49
    %p51 = scmp.ne.s32.totalorder %s40, %s41
    %p52 = scmp.eq.s32.totalorder %s18, 0
    %p53 = por %p51, %p52
    %p54 = scmp.ne.s32.totalorder %s40, %s41
    %p55 = scmp.eq.s32.totalorder %s19, 1
    %p56 = por %p54, %p55
    %p58 = scmp.ne.s32.totalorder %s41, %s57
    %p59 = scmp.eq.s32.totalorder %s19, 0
    %p60 = por %p58, %p59
    %s61 = smul.u32 %s21, 4
    %s62 = ssub.s32 %s61, 1
    %p63 = scmp.gt.s32.totalorder %s62, 0
    %s64 = scalar_select %p63, %s62, 0
    %s65 = smul.u32 %s28, 4
    %s66 = ssub.s32 %s65, 1
    %p67 = scmp.gt.s32.totalorder %s66, 0
    %s68 = scalar_select %p67, %s66, 0
    %s69 = ssub.s32 %s20, %s32
    %s70 = ssub.s32 %s64, %s68
    %s71 = sor.u32 %s69, %s70
    %p72 = scmp.eq.s32.totalorder %s71, 0
    %s74 = sadd.s32 %s73, 1
    %s75 = scalar_select %p72, %s73, %s74
    %p78 = pneg %p72
    %p79 = scmp.eq.s32.totalorder %s13, 1
    %p80 = por %p78, %p79
    %p81 = scmp.ne.s32.totalorder %s73, %s76
    %p82 = scmp.eq.s32.totalorder %s13, 0
    %p83 = por %p81, %p82
    %p84 = scmp.ne.s32.totalorder %s73, %s76
    %p85 = scmp.eq.s32.totalorder %s18, 1
    %p86 = por %p84, %p85
    %p87 = scmp.ne.s32.totalorder %s76, %s77
    %p88 = scmp.eq.s32.totalorder %s18, 0
    %p89 = por %p87, %p88
    %p90 = scmp.ne.s32.totalorder %s76, %s77
    %p91 = scmp.eq.s32.totalorder %s19, 1
    %p92 = por %p90, %p91
    %p94 = scmp.ne.s32.totalorder %s77, %s93
    %p95 = scmp.eq.s32.totalorder %s19, 0
    %p96 = por %p94, %p95
    %s97 = sadd.s32 %s21, 1
    %s98 = smul.u32 %s97, 4
    %p99 = scmp.lt.s32.totalorder %s98, 3
    %s100 = scalar_select %p99, %s98, 3
    %s101 = sadd.s32 %s28, 1
    %s102 = smul.u32 %s101, 4
    %p103 = scmp.lt.s32.totalorder %s102, 3
    %s104 = scalar_select %p103, %s102, 3
    %s105 = ssub.s32 %s20, %s32
    %s106 = ssub.s32 %s100, %s104
    %s107 = sor.u32 %s105, %s106
    %p108 = scmp.eq.s32.totalorder %s107, 0
    %s110 = sadd.s32 %s109, 1
    %s111 = scalar_select %p108, %s109, %s110
    %p114 = pneg %p108
    %p115 = scmp.eq.s32.totalorder %s13, 1
    %p116 = por %p114, %p115
    %p117 = scmp.ne.s32.totalorder %s109, %s112
    %p118 = scmp.eq.s32.totalorder %s13, 0
    %p119 = por %p117, %p118
    %p120 = scmp.ne.s32.totalorder %s109, %s112
    %p121 = scmp.eq.s32.totalorder %s18, 1
    %p122 = por %p120, %p121
    %p123 = scmp.ne.s32.totalorder %s112, %s113
    %p124 = scmp.eq.s32.totalorder %s18, 0
    %p125 = por %p123, %p124
    %p126 = scmp.ne.s32.totalorder %s112, %s113
    %p127 = scmp.eq.s32.totalorder %s19, 1
    %p128 = por %p126, %p127
    %p130 = scmp.ne.s32.totalorder %s113, %s129
    %p131 = scmp.eq.s32.totalorder %s19, 0
    %p132 = por %p130, %p131
    %s134 = sadd.s32 %s133, 1
    %p137 = scmp.eq.s32.totalorder %s13, 1
    %p138 = scmp.ne.s32.totalorder %s133, %s135
    %p139 = scmp.eq.s32.totalorder %s13, 0
    %p140 = por %p138, %p139
    %p141 = scmp.ne.s32.totalorder %s133, %s135
    %p142 = scmp.eq.s32.totalorder %s18, 1
    %p143 = por %p141, %p142
    %p144 = scmp.ne.s32.totalorder %s135, %s136
    %p145 = scmp.eq.s32.totalorder %s18, 0
    %p146 = por %p144, %p145
    %p147 = scmp.ne.s32.totalorder %s135, %s136
    %p148 = scmp.eq.s32.totalorder %s19, 1
    %p149 = por %p147, %p148
    %p151 = scmp.ne.s32.totalorder %s136, %s150
    %p152 = scmp.eq.s32.totalorder %s19, 0
    %p153 = por %p151, %p152
    %s155 = sadd.s32 %s154, 1
    %p158 = scmp.eq.s32.totalorder %s13, 1
    %p159 = scmp.ne.s32.totalorder %s154, %s156
    %p160 = scmp.eq.s32.totalorder %s13, 0
    %p161 = por %p159, %p160
    %p162 = scmp.ne.s32.totalorder %s154, %s156
    %p163 = scmp.eq.s32.totalorder %s18, 1
    %p164 = por %p162, %p163
    %p165 = scmp.ne.s32.totalorder %s156, %s157
    %p166 = scmp.eq.s32.totalorder %s18, 0
    %p167 = por %p165, %p166
    %p168 = scmp.ne.s32.totalorder %s156, %s157
    %p169 = scmp.eq.s32.totalorder %s19, 1
    %p170 = por %p168, %p169
    %p172 = scmp.ne.s32.totalorder %s157, %s171
    %p173 = scmp.eq.s32.totalorder %s19, 0
    %p174 = por %p172, %p173
    %s176 = sadd.s32 %s175, 1
    %p179 = scmp.eq.s32.totalorder %s13, 1
    %p180 = scmp.ne.s32.totalorder %s175, %s177
    %p181 = scmp.eq.s32.totalorder %s13, 0
    %p182 = por %p180, %p181
    %p183 = scmp.ne.s32.totalorder %s175, %s177
    %p184 = scmp.eq.s32.totalorder %s18, 1
    %p185 = por %p183, %p184
    %p186 = scmp.ne.s32.totalorder %s177, %s178
    %p187 = scmp.eq.s32.totalorder %s18, 0
    %p188 = por %p186, %p187
    %p189 = scmp.ne.s32.totalorder %s177, %s178
    %p190 = scmp.eq.s32.totalorder %s19, 1
    %p191 = por %p189, %p190
    %p193 = scmp.ne.s32.totalorder %s178, %s192
    %p194 = scmp.eq.s32.totalorder %s19, 0
    %p195 = por %p193, %p194
    %s197 = sadd.s32 %s196, 1
    %p200 = scmp.eq.s32.totalorder %s13, 1
    %p201 = scmp.ne.s32.totalorder %s196, %s198
    %p202 = scmp.eq.s32.totalorder %s13, 0
    %p203 = por %p201, %p202
    %p204 = scmp.ne.s32.totalorder %s196, %s198
    %p205 = scmp.eq.s32.totalorder %s18, 1
    %p206 = por %p204, %p205
    %p207 = scmp.ne.s32.totalorder %s198, %s199
    %p208 = scmp.eq.s32.totalorder %s18, 0
    %p209 = por %p207, %p208
    %p210 = scmp.ne.s32.totalorder %s198, %s199
    %p211 = scmp.eq.s32.totalorder %s19, 1
    %p212 = por %p210, %p211
    %p214 = scmp.ne.s32.totalorder %s199, %s213
    %p215 = scmp.eq.s32.totalorder %s19, 0
    %p216 = por %p214, %p215
    %s217 = ssub.s32 %s20, %s32
    %s218 = ssub.s32 %s21, %s28
    %s219 = sor.u32 %s217, %s218
    %p220 = scmp.eq.s32.totalorder %s219, 0
    %s222 = sadd.s32 %s221, 1
    %s223 = scalar_select %p220, %s221, %s222
    %p226 = pneg %p220
    %p227 = scmp.eq.s32.totalorder %s13, 1
    %p228 = por %p226, %p227
    %p229 = scmp.ne.s32.totalorder %s221, %s224
    %p230 = scmp.eq.s32.totalorder %s13, 0
    %p231 = por %p229, %p230
    %p232 = scmp.ne.s32.totalorder %s221, %s224
    %p233 = scmp.eq.s32.totalorder %s18, 1
    %p234 = por %p232, %p233
    %p235 = scmp.ne.s32.totalorder %s224, %s225
    %p236 = scmp.eq.s32.totalorder %s18, 0
    %p237 = por %p235, %p236
    %p238 = scmp.ne.s32.totalorder %s224, %s225
    %p239 = scmp.eq.s32.totalorder %s19, 1
    %p240 = por %p238, %p239
    %p242 = scmp.ne.s32.totalorder %s225, %s241
    %p243 = scmp.eq.s32.totalorder %s19, 0
    %p244 = por %p242, %p243
    %p245 = scmp.le.s32.totalorder 1, %s13
    %p246 = scmp.lt.s32.totalorder %s13, 3
    %p247 = pnand %p245, %p246
    %p248 = pneg %p247
    // Predicated region
    $region9: #{conv_mixer_forward.5} parent=5 // pred_check
      _
    $region10: #{conv_mixer_forward.5} parent=5 // pred_check_branch
      %250 = sbr.rel (%p247) target = $region12
    $region11: #{conv_mixer_forward.5} parent=5 // pred_region
      %s251 = ssub.s32 %s13, 1
      // Predicated region
      $region13: #{conv_mixer_forward.5} parent=11 // pred_check
        %p252 = pneg %p146
      $region14: #{conv_mixer_forward.5} parent=11 // pred_check_branch
        %254 = sbr.rel (%p252) target = $region16
      $region15: #{conv_mixer_forward.5} parent=11 // pred_region
        _
      $region16: #{conv_mixer_forward.5} parent=11 // pred_fallthru
        _
      // Predicated region
      $region17: #{conv_mixer_forward.5} parent=11 // pred_check
        %p255 = pneg %p167
      $region18: #{conv_mixer_forward.5} parent=11 // pred_check_branch
        %257 = sbr.rel (%p255) target = $region20
      $region19: #{conv_mixer_forward.5} parent=11 // pred_region
        _
      $region20: #{conv_mixer_forward.5} parent=11 // pred_fallthru
        _
      // Predicated region
      $region21: #{conv_mixer_forward.5} parent=11 // pred_check
        %p258 = pneg %p188
      $region22: #{conv_mixer_forward.5} parent=11 // pred_check_branch
        %260 = sbr.rel (%p258) target = $region24
      $region23: #{conv_mixer_forward.5} parent=11 // pred_region
        _
      $region24: #{conv_mixer_forward.5} parent=11 // pred_fallthru
        _
      // Predicated region
      $region25: #{conv_mixer_forward.5} parent=11 // pred_check
        %p261 = pneg %p209
      $region26: #{conv_mixer_forward.5} parent=11 // pred_check_branch
        %263 = sbr.rel (%p261) target = $region28
      $region27: #{conv_mixer_forward.5} parent=11 // pred_region
        _
      $region28: #{conv_mixer_forward.5} parent=11 // pred_fallthru
        _
    $region12: #{conv_mixer_forward.5} parent=5 // pred_fallthru
      _
    %p264 = scmp.lt.s32.totalorder %s13, 2
    // Predicated region
    $region29: #{conv_mixer_forward.5} parent=5 // pred_check
      %p265 = pneg %p264
    $region30: #{conv_mixer_forward.5} parent=5 // pred_check_branch
      %267 = sbr.rel (%p265) target = $region32
    $region31: #{conv_mixer_forward.5} parent=5 // pred_region
      // Predicated region
      $region33: #{conv_mixer_forward.5} parent=31 // pred_check
        %p268 = pneg %p47
      $region34: #{conv_mixer_forward.5} parent=31 // pred_check_branch
        %270 = sbr.rel (%p268) target = $region36
      $region35: #{conv_mixer_forward.5} parent=31 // pred_region
        %s271 = smul.u32 8, %s21
        %p272 = scmp.lt.s32.totalorder %s20, 1
        %s273 = scalar_select %p272, %s20, 1
        %p274 = scmp.lt.s32.totalorder %s271, 7
        %s275 = scalar_select %p274, %s271, 7
        %s276 = smul.addr %s273, 8
        %s277 = sadd.s32 %s275, %s276
        %s278 = smul.addr %s277, 8
        %s279 = scalar_lea.vmem %s0, %s278
        %s280 = smul.u32 8, %s21
      $region36: #{conv_mixer_forward.5} parent=31 // pred_fallthru
        _
      // Predicated region
      $region37: #{conv_mixer_forward.5} parent=31 // pred_check
        %p281 = pneg %p83
      $region38: #{conv_mixer_forward.5} parent=31 // pred_check_branch
        %283 = sbr.rel (%p281) target = $region40
      $region39: #{conv_mixer_forward.5} parent=31 // pred_region
        %s284 = smul.u32 %s21, 4
        %s285 = ssub.s32 %s284, 1
        %p286 = scmp.gt.s32.totalorder %s285, 0
        %s287 = scalar_select %p286, %s285, 0
        %s288 = smul.u32 2, %s287
        %p289 = scmp.lt.s32.totalorder %s20, 1
        %s290 = scalar_select %p289, %s20, 1
        %p291 = scmp.lt.s32.totalorder %s288, 7
        %s292 = scalar_select %p291, %s288, 7
        %s293 = smul.addr %s290, 8
        %s294 = sadd.s32 %s292, %s293
        %s295 = smul.addr %s294, 8
        %s296 = scalar_lea.vmem %s1, %s295
        %s297 = smul.u32 %s21, 4
        %s298 = ssub.s32 %s297, 1
        %p299 = scmp.gt.s32.totalorder %s298, 0
        %s300 = scalar_select %p299, %s298, 0
        %s301 = smul.u32 2, %s300
      $region40: #{conv_mixer_forward.5} parent=31 // pred_fallthru
        _
      // Predicated region
      $region41: #{conv_mixer_forward.5} parent=31 // pred_check
        %p302 = pneg %p119
      $region42: #{conv_mixer_forward.5} parent=31 // pred_check_branch
        %304 = sbr.rel (%p302) target = $region44
      $region43: #{conv_mixer_forward.5} parent=31 // pred_region
        %s305 = sadd.s32 %s21, 1
        %s306 = smul.u32 %s305, 4
        %p307 = scmp.lt.s32.totalorder %s306, 3
        %s308 = scalar_select %p307, %s306, 3
        %s309 = smul.u32 2, %s308
        %p310 = scmp.lt.s32.totalorder %s20, 1
        %s311 = scalar_select %p310, %s20, 1
        %p312 = scmp.lt.s32.totalorder %s309, 7
        %s313 = scalar_select %p312, %s309, 7
        %s314 = smul.addr %s311, 8
        %s315 = sadd.s32 %s313, %s314
        %s316 = smul.addr %s315, 8
        %s317 = scalar_lea.vmem %s2, %s316
        %s318 = sadd.s32 %s21, 1
        %s319 = smul.u32 %s318, 4
        %p320 = scmp.lt.s32.totalorder %s319, 3
        %s321 = scalar_select %p320, %s319, 3
        %s322 = smul.u32 2, %s321
      $region44: #{conv_mixer_forward.5} parent=31 // pred_fallthru
        _
    $region32: #{conv_mixer_forward.5} parent=5 // pred_fallthru
      _
    %p323 = scmp.le.s32.totalorder 1, %s13
    %p324 = scmp.lt.s32.totalorder %s13, 3
    %p325 = pnand %p323, %p324
    %p326 = pneg %p325
    // Predicated region
    $region45: #{conv_mixer_forward.5} parent=5 // pred_check
      _
    $region46: #{conv_mixer_forward.5} parent=5 // pred_check_branch
      %328 = sbr.rel (%p325) target = $region48
    $region47: #{conv_mixer_forward.5} parent=5 // pred_region
      %s329 = ssub.s32 %s13, 1
      %s330 = smul.u32 8, %s23
      %p331 = scmp.lt.s32.totalorder %s22, 1
      %s332 = scalar_select %p331, %s22, 1
      %p333 = scmp.lt.s32.totalorder %s330, 7
      %s334 = scalar_select %p333, %s330, 7
      %s335 = smul.addr %s332, 8
      %s336 = sadd.s32 %s334, %s335
      %s337 = smul.addr %s336, 8
      %s338 = scalar_lea.vmem %s0, %s337
      %p339 = pneg %p53
      %p340 = pneg %p50
      %s341 = smul.u32 %s23, 4
      %s342 = ssub.s32 %s341, 1
      %p343 = scmp.gt.s32.totalorder %s342, 0
      %s344 = scalar_select %p343, %s342, 0
      %s345 = smul.u32 2, %s344
      %p346 = scmp.lt.s32.totalorder %s22, 1
      %s347 = scalar_select %p346, %s22, 1
      %p348 = scmp.lt.s32.totalorder %s345, 7
      %s349 = scalar_select %p348, %s345, 7
      %s350 = smul.addr %s347, 8
      %s351 = sadd.s32 %s349, %s350
      %s352 = smul.addr %s351, 8
      %s353 = scalar_lea.vmem %s1, %s352
      %p354 = pneg %p89
      %p355 = pneg %p86
      %s356 = sadd.s32 %s23, 1
      %s357 = smul.u32 %s356, 4
      %p358 = scmp.lt.s32.totalorder %s357, 3
      %s359 = scalar_select %p358, %s357, 3
      %s360 = smul.u32 2, %s359
      %p361 = scmp.lt.s32.totalorder %s22, 1
      %s362 = scalar_select %p361, %s22, 1
      %p363 = scmp.lt.s32.totalorder %s360, 7
      %s364 = scalar_select %p363, %s360, 7
      %s365 = smul.addr %s362, 8
      %s366 = sadd.s32 %s364, %s365
      %s367 = smul.addr %s366, 8
      %s368 = scalar_lea.vmem %s2, %s367
      %p369 = pneg %p125
      %p370 = pneg %p122
      %p371 = pneg %p146
      %p372 = pneg %p143
      %p373 = pneg %p167
      %p374 = pneg %p164
      %p375 = pneg %p188
      %p376 = pneg %p185
      %p377 = pneg %p209
      %p378 = pneg %p206
      %p379 = pneg %p237
      %p380 = pneg %p234
      %s381 = smul.u32 8, %s23
      %p382 = scmp.lt.s32.totalorder %s22, 1
      %s383 = scalar_select %p382, %s22, 1
      %p384 = scmp.lt.s32.totalorder %s381, 7
      %s385 = scalar_select %p384, %s381, 7
      %s386 = smul.addr %s383, 8
      %s387 = sadd.s32 %s385, %s386
      %s388 = smul.addr %s387, 8
      %s389 = scalar_lea.vmem %s7, %s388
      %s390 = smul.u32 8, %s23
      %p391 = scmp.lt.s32.totalorder %s22, 1
      %s392 = scalar_select %p391, %s22, 1
      %p393 = scmp.lt.s32.totalorder %s390, 7
      %s394 = scalar_select %p393, %s390, 7
      %s395 = smul.addr %s392, 8
      %s396 = sadd.s32 %s394, %s395
      %s397 = smul.addr %s396, 8
      %s398 = scalar_lea.vmem %s0, %s397
      %s399 = smul.u32 8, %s23
      %s400 = smul.u32 %s23, 4
      %s401 = ssub.s32 %s400, 1
      %p402 = scmp.gt.s32.totalorder %s401, 0
      %s403 = scalar_select %p402, %s401, 0
      %s404 = smul.u32 2, %s403
      %p405 = scmp.lt.s32.totalorder %s22, 1
      %s406 = scalar_select %p405, %s22, 1
      %p407 = scmp.lt.s32.totalorder %s404, 7
      %s408 = scalar_select %p407, %s404, 7
      %s409 = smul.addr %s406, 8
      %s410 = sadd.s32 %s408, %s409
      %s411 = smul.addr %s410, 8
      %s412 = scalar_lea.vmem %s1, %s411
      %s413 = smul.u32 %s23, 4
      %s414 = ssub.s32 %s413, 1
      %p415 = scmp.gt.s32.totalorder %s414, 0
      %s416 = scalar_select %p415, %s414, 0
      %s417 = smul.u32 2, %s416
      %s418 = sadd.s32 %s23, 1
      %s419 = smul.u32 %s418, 4
      %p420 = scmp.lt.s32.totalorder %s419, 3
      %s421 = scalar_select %p420, %s419, 3
      %s422 = smul.u32 2, %s421
      %p423 = scmp.lt.s32.totalorder %s22, 1
      %s424 = scalar_select %p423, %s22, 1
      %p425 = scmp.lt.s32.totalorder %s422, 7
      %s426 = scalar_select %p425, %s422, 7
      %s427 = smul.addr %s424, 8
      %s428 = sadd.s32 %s426, %s427
      %s429 = smul.addr %s428, 8
      %s430 = scalar_lea.vmem %s2, %s429
      %s431 = sadd.s32 %s23, 1
      %s432 = smul.u32 %s431, 4
      %p433 = scmp.lt.s32.totalorder %s432, 3
      %s434 = scalar_select %p433, %s432, 3
      %s435 = smul.u32 2, %s434
      %s436 = smul.u32 8, %s23
      %p437 = scmp.lt.s32.totalorder %s22, 1
      %s438 = scalar_select %p437, %s22, 1
      %p439 = scmp.lt.s32.totalorder %s436, 7
      %s440 = scalar_select %p439, %s436, 7
      %s441 = smul.addr %s438, 8
      %s442 = sadd.s32 %s440, %s441
      %s443 = smul.addr %s442, 8
      %s444 = scalar_lea.vmem %s7, %s443
      %s445 = smul.u32 8, %s23
      %v446 = vld [vmem:[%s398] sm:$0xff]
      %v447 = vld [vmem:[%s398 + $0x8] sm:$0xff]
      %v448 = vld [vmem:[%s398 + $0x10] sm:$0xff]
      %v449 = vld [vmem:[%s398 + $0x18] sm:$0xff]
      %v450 = vld [vmem:[%s398 + $0x20] sm:$0xff]
      %v451 = vld [vmem:[%s398 + $0x28] sm:$0xff]
      %v452 = vld [vmem:[%s398 + $0x30] sm:$0xff]
      %v453 = vld [vmem:[%s398 + $0x38] sm:$0xff]
      %s454 = scalar_lea.vmem [#allocation2], 16
      %455 = vst [vmem:[%s454] sm:$0xff] %v446
      %456 = vst [vmem:[%s454 + $0x8] sm:$0xff] %v447
      %457 = vst [vmem:[%s454 + $0x10] sm:$0xff] %v448
      %458 = vst [vmem:[%s454 + $0x18] sm:$0xff] %v449
      %459 = vst [vmem:[%s454 + $0x20] sm:$0xff] %v450
      %460 = vst [vmem:[%s454 + $0x28] sm:$0xff] %v451
      %461 = vst [vmem:[%s454 + $0x30] sm:$0xff] %v452
      %462 = vst [vmem:[%s454 + $0x38] sm:$0xff] %v453
      %p463 = scmp.gt.s32.totalorder %s23, 0
      // Predicated region
      $region49: #{conv_mixer_forward.5} parent=47 // pred_check
        %p464 = pneg %p463
      $region50: #{conv_mixer_forward.5} parent=47 // pred_check_branch
        %466 = sbr.rel (%p464) target = $region52
      $region51: #{conv_mixer_forward.5} parent=47 // pred_region
        %v467 = vld [vmem:[%s412] sm:$0xff]
        %v468 = vld [vmem:[%s412 + $0x8] sm:$0xff]
        %469 = vst [vmem:[#allocation2] sm:$0xff] %v467
        %470 = vst [vmem:[#allocation2 + $0x8] sm:$0xff] %v468
      $region52: #{conv_mixer_forward.5} parent=47 // pred_fallthru
        _
      %p471 = scmp.eq.s32.totalorder %s23, 0
      // Predicated region
      $region53: #{conv_mixer_forward.5} parent=47 // pred_check
        %p472 = pneg %p471
      $region54: #{conv_mixer_forward.5} parent=47 // pred_check_branch
        %474 = sbr.rel (%p472) target = $region56
      $region55: #{conv_mixer_forward.5} parent=47 // pred_region
        %475 = vst [vmem:[#allocation2] sm:$0xff] 0.0
        %476 = vst [vmem:[#allocation2 + $0x8] sm:$0xff] 0.0
      $region56: #{conv_mixer_forward.5} parent=47 // pred_fallthru
        _
      %p477 = scmp.lt.s32.totalorder %s23, 0
      // Predicated region
      $region57: #{conv_mixer_forward.5} parent=47 // pred_check
        %p478 = pneg %p477
      $region58: #{conv_mixer_forward.5} parent=47 // pred_check_branch
        %480 = sbr.rel (%p478) target = $region60
      $region59: #{conv_mixer_forward.5} parent=47 // pred_region
        %v481 = vld [vmem:[%s430] sm:$0xff]
        %v482 = vld [vmem:[%s430 + $0x8] sm:$0xff]
        %s483 = scalar_lea.vmem [#allocation2], 80
        %484 = vst [vmem:[%s483] sm:$0xff] %v481
        %485 = vst [vmem:[%s483 + $0x8] sm:$0xff] %v482
      $region60: #{conv_mixer_forward.5} parent=47 // pred_fallthru
        _
      // Predicated region
      $region61: #{conv_mixer_forward.5} parent=47 // pred_check
        %p486 = pneg %p471
      $region62: #{conv_mixer_forward.5} parent=47 // pred_check_branch
        %488 = sbr.rel (%p486) target = $region64
      $region63: #{conv_mixer_forward.5} parent=47 // pred_region
        %s489 = scalar_lea.vmem [#allocation2], 80
        %490 = vst [vmem:[%s489] sm:$0xff] 0.0
        %491 = vst [vmem:[%s489 + $0x8] sm:$0xff] 0.0
      $region64: #{conv_mixer_forward.5} parent=47 // pred_fallthru
        _
      %v492 = vlaneseq
      %v493 = vshrl.u32 %v492, 7
      %v494 = vld [vmem:[#allocation2] sm:$0xff]
      %v495 = vld [vmem:[#allocation2 + $0x8] sm:$0xff]
      %v496 = vld [vmem:[#allocation2 + $0x10] sm:$0xff]
      %v497 = vld [vmem:[#allocation2 + $0x18] sm:$0xff]
      %v498 = vld [vmem:[#allocation2 + $0x20] sm:$0xff]
      %v499 = vld [vmem:[#allocation2 + $0x28] sm:$0xff]
      %v500 = vld [vmem:[#allocation2 + $0x30] sm:$0xff]
      %v501 = vld [vmem:[#allocation2 + $0x38] sm:$0xff]
      %v502 = vld [vmem:[%s3] sm:$0x1f]
      %v503 = vlaneseq
      %v504 = vshrl.u32 %v503, 7
      %v505 = vsub.s32 2, %v504
      %v506 = vrot.slane %v502, %v505
      %v507 = vmul.f32 %v494, %v506
      %v508 = vmul.f32 %v495, %v506
      %v509 = vmul.f32 %v496, %v506
      %v510 = vmul.f32 %v497, %v506
      %v511 = vmul.f32 %v498, %v506
      %v512 = vmul.f32 %v499, %v506
      %v513 = vmul.f32 %v500, %v506
      %v514 = vmul.f32 %v501, %v506
      %s515 = scalar_lea.vmem %s3, 8
      %v516 = vld [vmem:[%s515] sm:$0x1f]
      %s517 = scalar_lea.vmem [#allocation2], 8
      %v518 = vld [vmem:[%s517] sm:$0xff]
      %v519 = vld [vmem:[%s517 + $0x8] sm:$0xff]
      %v520 = vld [vmem:[%s517 + $0x10] sm:$0xff]
      %v521 = vld [vmem:[%s517 + $0x18] sm:$0xff]
      %v522 = vld [vmem:[%s517 + $0x20] sm:$0xff]
      %v523 = vld [vmem:[%s517 + $0x28] sm:$0xff]
      %v524 = vld [vmem:[%s517 + $0x30] sm:$0xff]
      %v525 = vld [vmem:[%s517 + $0x38] sm:$0xff]
      %v526 = vlaneseq
      %v527 = vshrl.u32 %v526, 7
      %v528 = vsub.s32 2, %v527
      %v529 = vrot.slane %v516, %v528
      %v530 = vmul.f32 %v518, %v529
      %v531 = vmul.f32 %v519, %v529
      %v532 = vmul.f32 %v520, %v529
      %v533 = vmul.f32 %v521, %v529
      %v534 = vmul.f32 %v522, %v529
      %v535 = vmul.f32 %v523, %v529
      %v536 = vmul.f32 %v524, %v529
      %v537 = vmul.f32 %v525, %v529
      %v538 = vadd.f32 %v507, %v530
      %v539 = vadd.f32 %v508, %v531
      %v540 = vadd.f32 %v509, %v532
      %v541 = vadd.f32 %v510, %v533
      %v542 = vadd.f32 %v511, %v534
      %v543 = vadd.f32 %v512, %v535
      %v544 = vadd.f32 %v513, %v536
      %v545 = vadd.f32 %v514, %v537
      %s546 = scalar_lea.vmem %s3, 16
      %v547 = vld [vmem:[%s546] sm:$0x1f]
      %v548 = vld [vmem:[%s454] sm:$0xff]
      %v549 = vld [vmem:[%s454 + $0x8] sm:$0xff]
      %v550 = vld [vmem:[%s454 + $0x10] sm:$0xff]
      %v551 = vld [vmem:[%s454 + $0x18] sm:$0xff]
      %v552 = vld [vmem:[%s454 + $0x20] sm:$0xff]
      %v553 = vld [vmem:[%s454 + $0x28] sm:$0xff]
      %v554 = vld [vmem:[%s454 + $0x30] sm:$0xff]
      %v555 = vld [vmem:[%s454 + $0x38] sm:$0xff]
      %v556 = vlaneseq
      %v557 = vshrl.u32 %v556, 7
      %v558 = vsub.s32 2, %v557
      %v559 = vrot.slane %v547, %v558
      %v560 = vmul.f32 %v548, %v559
      %v561 = vmul.f32 %v549, %v559
      %v562 = vmul.f32 %v550, %v559
      %v563 = vmul.f32 %v551, %v559
      %v564 = vmul.f32 %v552, %v559
      %v565 = vmul.f32 %v553, %v559
      %v566 = vmul.f32 %v554, %v559
      %v567 = vmul.f32 %v555, %v559
      %v568 = vadd.f32 %v538, %v560
      %v569 = vadd.f32 %v539, %v561
      %v570 = vadd.f32 %v540, %v562
      %v571 = vadd.f32 %v541, %v563
      %v572 = vadd.f32 %v542, %v564
      %v573 = vadd.f32 %v543, %v565
      %v574 = vadd.f32 %v544, %v566
      %v575 = vadd.f32 %v545, %v567
      %s576 = scalar_lea.vmem %s3, 24
      %v577 = vld [vmem:[%s576] sm:$0x1f]
      %s578 = scalar_lea.vmem [#allocation2], 24
      %v579 = vld [vmem:[%s578] sm:$0xff]
      %v580 = vld [vmem:[%s578 + $0x8] sm:$0xff]
      %v581 = vld [vmem:[%s578 + $0x10] sm:$0xff]
      %v582 = vld [vmem:[%s578 + $0x18] sm:$0xff]
      %v583 = vld [vmem:[%s578 + $0x20] sm:$0xff]
      %v584 = vld [vmem:[%s578 + $0x28] sm:$0xff]
      %v585 = vld [vmem:[%s578 + $0x30] sm:$0xff]
      %v586 = vld [vmem:[%s578 + $0x38] sm:$0xff]
      %v587 = vlaneseq
      %v588 = vshrl.u32 %v587, 7
      %v589 = vsub.s32 2, %v588
      %v590 = vrot.slane %v577, %v589
      %v591 = vmul.f32 %v579, %v590
      %v592 = vmul.f32 %v580, %v590
      %v593 = vmul.f32 %v581, %v590
      %v594 = vmul.f32 %v582, %v590
      %v595 = vmul.f32 %v583, %v590
      %v596 = vmul.f32 %v584, %v590
      %v597 = vmul.f32 %v585, %v590
      %v598 = vmul.f32 %v586, %v590
      %v599 = vadd.f32 %v568, %v591
      %v600 = vadd.f32 %v569, %v592
      %v601 = vadd.f32 %v570, %v593
      %v602 = vadd.f32 %v571, %v594
      %v603 = vadd.f32 %v572, %v595
      %v604 = vadd.f32 %v573, %v596
      %v605 = vadd.f32 %v574, %v597
      %v606 = vadd.f32 %v575, %v598
      %s607 = scalar_lea.vmem %s3, 32
      %v608 = vld [vmem:[%s607] sm:$0x1f]
      %s609 = scalar_lea.vmem [#allocation2], 32
      %v610 = vld [vmem:[%s609] sm:$0xff]
      %v611 = vld [vmem:[%s609 + $0x8] sm:$0xff]
      %v612 = vld [vmem:[%s609 + $0x10] sm:$0xff]
      %v613 = vld [vmem:[%s609 + $0x18] sm:$0xff]
      %v614 = vld [vmem:[%s609 + $0x20] sm:$0xff]
      %v615 = vld [vmem:[%s609 + $0x28] sm:$0xff]
      %v616 = vld [vmem:[%s609 + $0x30] sm:$0xff]
      %v617 = vld [vmem:[%s609 + $0x38] sm:$0xff]
      %v618 = vlaneseq
      %v619 = vshrl.u32 %v618, 7
      %v620 = vsub.s32 2, %v619
      %v621 = vrot.slane %v608, %v620
      %v622 = vmul.f32 %v610, %v621
      %v623 = vmul.f32 %v611, %v621
      %v624 = vmul.f32 %v612, %v621
      %v625 = vmul.f32 %v613, %v621
      %v626 = vmul.f32 %v614, %v621
      %v627 = vmul.f32 %v615, %v621
      %v628 = vmul.f32 %v616, %v621
      %v629 = vmul.f32 %v617, %v621
      %v630 = vadd.f32 %v599, %v622
      %v631 = vadd.f32 %v600, %v623
      %v632 = vadd.f32 %v601, %v624
      %v633 = vadd.f32 %v602, %v625
      %v634 = vadd.f32 %v603, %v626
      %v635 = vadd.f32 %v604, %v627
      %v636 = vadd.f32 %v605, %v628
      %v637 = vadd.f32 %v606, %v629
      %v638 = vlaneseq
      %v639 = vshrl.u32 %v638, 7
      %v640 = vsub.s32 0, %v639
      %v641 = vrot.slane %v502, %v640
      %v642 = vmul.f32 %v494, %v641
      %v643 = vmul.f32 %v495, %v641
      %v644 = vmul.f32 %v496, %v641
      %v645 = vmul.f32 %v497, %v641
      %v646 = vmul.f32 %v498, %v641
      %v647 = vmul.f32 %v499, %v641
      %v648 = vmul.f32 %v500, %v641
      %v649 = vmul.f32 %v501, %v641
      %v650 = vlaneseq
      %v651 = vshrl.u32 %v650, 7
      %v652 = vsub.s32 0, %v651
      %v653 = vrot.slane %v516, %v652
      %v654 = vmul.f32 %v518, %v653
      %v655 = vmul.f32 %v519, %v653
      %v656 = vmul.f32 %v520, %v653
      %v657 = vmul.f32 %v521, %v653
      %v658 = vmul.f32 %v522, %v653
      %v659 = vmul.f32 %v523, %v653
      %v660 = vmul.f32 %v524, %v653
      %v661 = vmul.f32 %v525, %v653
      %v662 = vadd.f32 %v642, %v654
      %v663 = vadd.f32 %v643, %v655
      %v664 = vadd.f32 %v644, %v656
      %v665 = vadd.f32 %v645, %v657
      %v666 = vadd.f32 %v646, %v658
      %v667 = vadd.f32 %v647, %v659
      %v668 = vadd.f32 %v648, %v660
      %v669 = vadd.f32 %v649, %v661
      %v670 = vlaneseq
      %v671 = vshrl.u32 %v670, 7
      %v672 = vsub.s32 0, %v671
      %v673 = vrot.slane %v547, %v672
      %v674 = vmul.f32 %v548, %v673
      %v675 = vmul.f32 %v549, %v673
      %v676 = vmul.f32 %v550, %v673
      %v677 = vmul.f32 %v551, %v673
      %v678 = vmul.f32 %v552, %v673
      %v679 = vmul.f32 %v553, %v673
      %v680 = vmul.f32 %v554, %v673
      %v681 = vmul.f32 %v555, %v673
      %v682 = vadd.f32 %v662, %v674
      %v683 = vadd.f32 %v663, %v675
      %v684 = vadd.f32 %v664, %v676
      %v685 = vadd.f32 %v665, %v677
      %v686 = vadd.f32 %v666, %v678
      %v687 = vadd.f32 %v667, %v679
      %v688 = vadd.f32 %v668, %v680
      %v689 = vadd.f32 %v669, %v681
      %v690 = vlaneseq
      %v691 = vshrl.u32 %v690, 7
      %v692 = vsub.s32 0, %v691
      %v693 = vrot.slane %v577, %v692
      %v694 = vmul.f32 %v579, %v693
      %v695 = vmul.f32 %v580, %v693
      %v696 = vmul.f32 %v581, %v693
      %v697 = vmul.f32 %v582, %v693
      %v698 = vmul.f32 %v583, %v693
      %v699 = vmul.f32 %v584, %v693
      %v700 = vmul.f32 %v585, %v693
      %v701 = vmul.f32 %v586, %v693
      %v702 = vadd.f32 %v682, %v694
      %v703 = vadd.f32 %v683, %v695
      %v704 = vadd.f32 %v684, %v696
      %v705 = vadd.f32 %v685, %v697
      %v706 = vadd.f32 %v686, %v698
      %v707 = vadd.f32 %v687, %v699
      %v708 = vadd.f32 %v688, %v700
      %v709 = vadd.f32 %v689, %v701
      %v710 = vlaneseq
      %v711 = vshrl.u32 %v710, 7
      %v712 = vsub.s32 0, %v711
      %v713 = vrot.slane %v608, %v712
      %v714 = vmul.f32 %v610, %v713
      %v715 = vmul.f32 %v611, %v713
      %v716 = vmul.f32 %v612, %v713
      %v717 = vmul.f32 %v613, %v713
      %v718 = vmul.f32 %v614, %v713
      %v719 = vmul.f32 %v615, %v713
      %v720 = vmul.f32 %v616, %v713
      %v721 = vmul.f32 %v617, %v713
      %v722 = vadd.f32 %v702, %v714
      %v723 = vadd.f32 %v703, %v715
      %v724 = vadd.f32 %v704, %v716
      %v725 = vadd.f32 %v705, %v717
      %v726 = vadd.f32 %v706, %v718
      %v727 = vadd.f32 %v707, %v719
      %v728 = vadd.f32 %v708, %v720
      %v729 = vadd.f32 %v709, %v721
      %v730 = vrot.slane %v722, 6
      %v731 = vrot.slane %v723, 6
      %v732 = vrot.slane %v724, 6
      %v733 = vrot.slane %v725, 6
      %v734 = vrot.slane %v726, 6
      %v735 = vrot.slane %v727, 6
      %v736 = vrot.slane %v728, 6
      %v737 = vrot.slane %v729, 6
      %v738 = vadd.s32 %v493, 4294967294
      %vm739 = vcmp.ge.s32.totalorder %v738, 0
      %vm740 = vcmp.lt.s32.totalorder %v738, 8
      %vm741 = vmand %vm739, %vm740
      %v742 = vsel %vm741, 1, 0
      %vm743 = vcmp.eq.s32.totalorder %v742, 1
      %v744 = vsel %vm743, %v730, 0.0
      %v745 = vsel %vm743, %v731, 0.0
      %v746 = vsel %vm743, %v732, 0.0
      %v747 = vsel %vm743, %v733, 0.0
      %v748 = vsel %vm743, %v734, 0.0
      %v749 = vsel %vm743, %v735, 0.0
      %v750 = vsel %vm743, %v736, 0.0
      %v751 = vsel %vm743, %v737, 0.0
      %v752 = vadd.f32 %v630, %v744
      %v753 = vadd.f32 %v631, %v745
      %v754 = vadd.f32 %v632, %v746
      %v755 = vadd.f32 %v633, %v747
      %v756 = vadd.f32 %v634, %v748
      %v757 = vadd.f32 %v635, %v749
      %v758 = vadd.f32 %v636, %v750
      %v759 = vadd.f32 %v637, %v751
      %v760 = vlaneseq
      %v761 = vshrl.u32 %v760, 7
      %v762 = vsub.s32 1, %v761
      %v763 = vrot.slane %v502, %v762
      %v764 = vmul.f32 %v494, %v763
      %v765 = vmul.f32 %v495, %v763
      %v766 = vmul.f32 %v496, %v763
      %v767 = vmul.f32 %v497, %v763
      %v768 = vmul.f32 %v498, %v763
      %v769 = vmul.f32 %v499, %v763
      %v770 = vmul.f32 %v500, %v763
      %v771 = vmul.f32 %v501, %v763
      %v772 = vlaneseq
      %v773 = vshrl.u32 %v772, 7
      %v774 = vsub.s32 1, %v773
      %v775 = vrot.slane %v516, %v774
      %v776 = vmul.f32 %v518, %v775
      %v777 = vmul.f32 %v519, %v775
      %v778 = vmul.f32 %v520, %v775
      %v779 = vmul.f32 %v521, %v775
      %v780 = vmul.f32 %v522, %v775
      %v781 = vmul.f32 %v523, %v775
      %v782 = vmul.f32 %v524, %v775
      %v783 = vmul.f32 %v525, %v775
      %v784 = vadd.f32 %v764, %v776
      %v785 = vadd.f32 %v765, %v777
      %v786 = vadd.f32 %v766, %v778
      %v787 = vadd.f32 %v767, %v779
      %v788 = vadd.f32 %v768, %v780
      %v789 = vadd.f32 %v769, %v781
      %v790 = vadd.f32 %v770, %v782
      %v791 = vadd.f32 %v771, %v783
      %v792 = vlaneseq
      %v793 = vshrl.u32 %v792, 7
      %v794 = vsub.s32 1, %v793
      %v795 = vrot.slane %v547, %v794
      %v796 = vmul.f32 %v548, %v795
      %v797 = vmul.f32 %v549, %v795
      %v798 = vmul.f32 %v550, %v795
      %v799 = vmul.f32 %v551, %v795
      %v800 = vmul.f32 %v552, %v795
      %v801 = vmul.f32 %v553, %v795
      %v802 = vmul.f32 %v554, %v795
      %v803 = vmul.f32 %v555, %v795
      %v804 = vadd.f32 %v784, %v796
      %v805 = vadd.f32 %v785, %v797
      %v806 = vadd.f32 %v786, %v798
      %v807 = vadd.f32 %v787, %v799
      %v808 = vadd.f32 %v788, %v800
      %v809 = vadd.f32 %v789, %v801
      %v810 = vadd.f32 %v790, %v802
      %v811 = vadd.f32 %v791, %v803
      %v812 = vlaneseq
      %v813 = vshrl.u32 %v812, 7
      %v814 = vsub.s32 1, %v813
      %v815 = vrot.slane %v577, %v814
      %v816 = vmul.f32 %v579, %v815
      %v817 = vmul.f32 %v580, %v815
      %v818 = vmul.f32 %v581, %v815
      %v819 = vmul.f32 %v582, %v815
      %v820 = vmul.f32 %v583, %v815
      %v821 = vmul.f32 %v584, %v815
      %v822 = vmul.f32 %v585, %v815
      %v823 = vmul.f32 %v586, %v815
      %v824 = vadd.f32 %v804, %v816
      %v825 = vadd.f32 %v805, %v817
      %v826 = vadd.f32 %v806, %v818
      %v827 = vadd.f32 %v807, %v819
      %v828 = vadd.f32 %v808, %v820
      %v829 = vadd.f32 %v809, %v821
      %v830 = vadd.f32 %v810, %v822
      %v831 = vadd.f32 %v811, %v823
      %v832 = vlaneseq
      %v833 = vshrl.u32 %v832, 7
      %v834 = vsub.s32 1, %v833
      %v835 = vrot.slane %v608, %v834
      %v836 = vmul.f32 %v610, %v835
      %v837 = vmul.f32 %v611, %v835
      %v838 = vmul.f32 %v612, %v835
      %v839 = vmul.f32 %v613, %v835
      %v840 = vmul.f32 %v614, %v835
      %v841 = vmul.f32 %v615, %v835
      %v842 = vmul.f32 %v616, %v835
      %v843 = vmul.f32 %v617, %v835
      %v844 = vadd.f32 %v824, %v836
      %v845 = vadd.f32 %v825, %v837
      %v846 = vadd.f32 %v826, %v838
      %v847 = vadd.f32 %v827, %v839
      %v848 = vadd.f32 %v828, %v840
      %v849 = vadd.f32 %v829, %v841
      %v850 = vadd.f32 %v830, %v842
      %v851 = vadd.f32 %v831, %v843
      %v852 = vrot.slane %v844, 7
      %v853 = vrot.slane %v845, 7
      %v854 = vrot.slane %v846, 7
      %v855 = vrot.slane %v847, 7
      %v856 = vrot.slane %v848, 7
      %v857 = vrot.slane %v849, 7
      %v858 = vrot.slane %v850, 7
      %v859 = vrot.slane %v851, 7
      %v860 = vadd.s32 %v493, 4294967295
      %vm861 = vcmp.ge.s32.totalorder %v860, 0
      %vm862 = vcmp.lt.s32.totalorder %v860, 8
      %vm863 = vmand %vm861, %vm862
      %v864 = vsel %vm863, 1, 0
      %vm865 = vcmp.eq.s32.totalorder %v864, 1
      %v866 = vsel %vm865, %v852, 0.0
      %v867 = vsel %vm865, %v853, 0.0
      %v868 = vsel %vm865, %v854, 0.0
      %v869 = vsel %vm865, %v855, 0.0
      %v870 = vsel %vm865, %v856, 0.0
      %v871 = vsel %vm865, %v857, 0.0
      %v872 = vsel %vm865, %v858, 0.0
      %v873 = vsel %vm865, %v859, 0.0
      %v874 = vadd.f32 %v752, %v866
      %v875 = vadd.f32 %v753, %v867
      %v876 = vadd.f32 %v754, %v868
      %v877 = vadd.f32 %v755, %v869
      %v878 = vadd.f32 %v756, %v870
      %v879 = vadd.f32 %v757, %v871
      %v880 = vadd.f32 %v758, %v872
      %v881 = vadd.f32 %v759, %v873
      %v882 = vlaneseq
      %v883 = vshrl.u32 %v882, 7
      %v884 = vsub.s32 3, %v883
      %v885 = vrot.slane %v502, %v884
      %v886 = vmul.f32 %v494, %v885
      %v887 = vmul.f32 %v495, %v885
      %v888 = vmul.f32 %v496, %v885
      %v889 = vmul.f32 %v497, %v885
      %v890 = vmul.f32 %v498, %v885
      %v891 = vmul.f32 %v499, %v885
      %v892 = vmul.f32 %v500, %v885
      %v893 = vmul.f32 %v501, %v885
      %v894 = vlaneseq
      %v895 = vshrl.u32 %v894, 7
      %v896 = vsub.s32 3, %v895
      %v897 = vrot.slane %v516, %v896
      %v898 = vmul.f32 %v518, %v897
      %v899 = vmul.f32 %v519, %v897
      %v900 = vmul.f32 %v520, %v897
      %v901 = vmul.f32 %v521, %v897
      %v902 = vmul.f32 %v522, %v897
      %v903 = vmul.f32 %v523, %v897
      %v904 = vmul.f32 %v524, %v897
      %v905 = vmul.f32 %v525, %v897
      %v906 = vadd.f32 %v886, %v898
      %v907 = vadd.f32 %v887, %v899
      %v908 = vadd.f32 %v888, %v900
      %v909 = vadd.f32 %v889, %v901
      %v910 = vadd.f32 %v890, %v902
      %v911 = vadd.f32 %v891, %v903
      %v912 = vadd.f32 %v892, %v904
      %v913 = vadd.f32 %v893, %v905
      %v914 = vlaneseq
      %v915 = vshrl.u32 %v914, 7
      %v916 = vsub.s32 3, %v915
      %v917 = vrot.slane %v547, %v916
      %v918 = vmul.f32 %v548, %v917
      %v919 = vmul.f32 %v549, %v917
      %v920 = vmul.f32 %v550, %v917
      %v921 = vmul.f32 %v551, %v917
      %v922 = vmul.f32 %v552, %v917
      %v923 = vmul.f32 %v553, %v917
      %v924 = vmul.f32 %v554, %v917
      %v925 = vmul.f32 %v555, %v917
      %v926 = vadd.f32 %v906, %v918
      %v927 = vadd.f32 %v907, %v919
      %v928 = vadd.f32 %v908, %v920
      %v929 = vadd.f32 %v909, %v921
      %v930 = vadd.f32 %v910, %v922
      %v931 = vadd.f32 %v911, %v923
      %v932 = vadd.f32 %v912, %v924
      %v933 = vadd.f32 %v913, %v925
      %v934 = vlaneseq
      %v935 = vshrl.u32 %v934, 7
      %v936 = vsub.s32 3, %v935
      %v937 = vrot.slane %v577, %v936
      %v938 = vmul.f32 %v579, %v937
      %v939 = vmul.f32 %v580, %v937
      %v940 = vmul.f32 %v581, %v937
      %v941 = vmul.f32 %v582, %v937
      %v942 = vmul.f32 %v583, %v937
      %v943 = vmul.f32 %v584, %v937
      %v944 = vmul.f32 %v585, %v937
      %v945 = vmul.f32 %v586, %v937
      %v946 = vadd.f32 %v926, %v938
      %v947 = vadd.f32 %v927, %v939
      %v948 = vadd.f32 %v928, %v940
      %v949 = vadd.f32 %v929, %v941
      %v950 = vadd.f32 %v930, %v942
      %v951 = vadd.f32 %v931, %v943
      %v952 = vadd.f32 %v932, %v944
      %v953 = vadd.f32 %v933, %v945
      %v954 = vlaneseq
      %v955 = vshrl.u32 %v954, 7
      %v956 = vsub.s32 3, %v955
      %v957 = vrot.slane %v608, %v956
      %v958 = vmul.f32 %v610, %v957
      %v959 = vmul.f32 %v611, %v957
      %v960 = vmul.f32 %v612, %v957
      %v961 = vmul.f32 %v613, %v957
      %v962 = vmul.f32 %v614, %v957
      %v963 = vmul.f32 %v615, %v957
      %v964 = vmul.f32 %v616, %v957
      %v965 = vmul.f32 %v617, %v957
      %v966 = vadd.f32 %v946, %v958
      %v967 = vadd.f32 %v947, %v959
      %v968 = vadd.f32 %v948, %v960
      %v969 = vadd.f32 %v949, %v961
      %v970 = vadd.f32 %v950, %v962
      %v971 = vadd.f32 %v951, %v963
      %v972 = vadd.f32 %v952, %v964
      %v973 = vadd.f32 %v953, %v965
      %v974 = vrot.slane %v966, 1
      %v975 = vrot.slane %v967, 1
      %v976 = vrot.slane %v968, 1
      %v977 = vrot.slane %v969, 1
      %v978 = vrot.slane %v970, 1
      %v979 = vrot.slane %v971, 1
      %v980 = vrot.slane %v972, 1
      %v981 = vrot.slane %v973, 1
      %v982 = vadd.s32 %v493, 1
      %vm983 = vcmp.ge.s32.totalorder %v982, 0
      %vm984 = vcmp.lt.s32.totalorder %v982, 8
      %vm985 = vmand %vm983, %vm984
      %v986 = vsel %vm985, 1, 0
      %vm987 = vcmp.eq.s32.totalorder %v986, 1
      %v988 = vsel %vm987, %v974, 0.0
      %v989 = vsel %vm987, %v975, 0.0
      %v990 = vsel %vm987, %v976, 0.0
      %v991 = vsel %vm987, %v977, 0.0
      %v992 = vsel %vm987, %v978, 0.0
      %v993 = vsel %vm987, %v979, 0.0
      %v994 = vsel %vm987, %v980, 0.0
      %v995 = vsel %vm987, %v981, 0.0
      %v996 = vadd.f32 %v874, %v988
      %v997 = vadd.f32 %v875, %v989
      %v998 = vadd.f32 %v876, %v990
      %v999 = vadd.f32 %v877, %v991
      %v1000 = vadd.f32 %v878, %v992
      %v1001 = vadd.f32 %v879, %v993
      %v1002 = vadd.f32 %v880, %v994
      %v1003 = vadd.f32 %v881, %v995
      %v1004 = vlaneseq
      %v1005 = vshrl.u32 %v1004, 7
      %v1006 = vsub.s32 4, %v1005
      %v1007 = vrot.slane %v502, %v1006
      %v1008 = vmul.f32 %v494, %v1007
      %v1009 = vmul.f32 %v495, %v1007
      %v1010 = vmul.f32 %v496, %v1007
      %v1011 = vmul.f32 %v497, %v1007
      %v1012 = vmul.f32 %v498, %v1007
      %v1013 = vmul.f32 %v499, %v1007
      %v1014 = vmul.f32 %v500, %v1007
      %v1015 = vmul.f32 %v501, %v1007
      %v1016 = vlaneseq
      %v1017 = vshrl.u32 %v1016, 7
      %v1018 = vsub.s32 4, %v1017
      %v1019 = vrot.slane %v516, %v1018
      %v1020 = vmul.f32 %v518, %v1019
      %v1021 = vmul.f32 %v519, %v1019
      %v1022 = vmul.f32 %v520, %v1019
      %v1023 = vmul.f32 %v521, %v1019
      %v1024 = vmul.f32 %v522, %v1019
      %v1025 = vmul.f32 %v523, %v1019
      %v1026 = vmul.f32 %v524, %v1019
      %v1027 = vmul.f32 %v525, %v1019
      %v1028 = vadd.f32 %v1008, %v1020
      %v1029 = vadd.f32 %v1009, %v1021
      %v1030 = vadd.f32 %v1010, %v1022
      %v1031 = vadd.f32 %v1011, %v1023
      %v1032 = vadd.f32 %v1012, %v1024
      %v1033 = vadd.f32 %v1013, %v1025
      %v1034 = vadd.f32 %v1014, %v1026
      %v1035 = vadd.f32 %v1015, %v1027
      %v1036 = vlaneseq
      %v1037 = vshrl.u32 %v1036, 7
      %v1038 = vsub.s32 4, %v1037
      %v1039 = vrot.slane %v547, %v1038
      %v1040 = vmul.f32 %v548, %v1039
      %v1041 = vmul.f32 %v549, %v1039
      %v1042 = vmul.f32 %v550, %v1039
      %v1043 = vmul.f32 %v551, %v1039
      %v1044 = vmul.f32 %v552, %v1039
      %v1045 = vmul.f32 %v553, %v1039
      %v1046 = vmul.f32 %v554, %v1039
      %v1047 = vmul.f32 %v555, %v1039
      %v1048 = vadd.f32 %v1028, %v1040
      %v1049 = vadd.f32 %v1029, %v1041
      %v1050 = vadd.f32 %v1030, %v1042
      %v1051 = vadd.f32 %v1031, %v1043
      %v1052 = vadd.f32 %v1032, %v1044
      %v1053 = vadd.f32 %v1033, %v1045
      %v1054 = vadd.f32 %v1034, %v1046
      %v1055 = vadd.f32 %v1035, %v1047
      %v1056 = vlaneseq
      %v1057 = vshrl.u32 %v1056, 7
      %v1058 = vsub.s32 4, %v1057
      %v1059 = vrot.slane %v577, %v1058
      %v1060 = vmul.f32 %v579, %v1059
      %v1061 = vmul.f32 %v580, %v1059
      %v1062 = vmul.f32 %v581, %v1059
      %v1063 = vmul.f32 %v582, %v1059
      %v1064 = vmul.f32 %v583, %v1059
      %v1065 = vmul.f32 %v584, %v1059
      %v1066 = vmul.f32 %v585, %v1059
      %v1067 = vmul.f32 %v586, %v1059
      %v1068 = vadd.f32 %v1048, %v1060
      %v1069 = vadd.f32 %v1049, %v1061
      %v1070 = vadd.f32 %v1050, %v1062
      %v1071 = vadd.f32 %v1051, %v1063
      %v1072 = vadd.f32 %v1052, %v1064
      %v1073 = vadd.f32 %v1053, %v1065
      %v1074 = vadd.f32 %v1054, %v1066
      %v1075 = vadd.f32 %v1055, %v1067
      %v1076 = vlaneseq
      %v1077 = vshrl.u32 %v1076, 7
      %v1078 = vsub.s32 4, %v1077
      %v1079 = vrot.slane %v608, %v1078
      %v1080 = vmul.f32 %v610, %v1079
      %v1081 = vmul.f32 %v611, %v1079
      %v1082 = vmul.f32 %v612, %v1079
      %v1083 = vmul.f32 %v613, %v1079
      %v1084 = vmul.f32 %v614, %v1079
      %v1085 = vmul.f32 %v615, %v1079
      %v1086 = vmul.f32 %v616, %v1079
      %v1087 = vmul.f32 %v617, %v1079
      %v1088 = vadd.f32 %v1068, %v1080
      %v1089 = vadd.f32 %v1069, %v1081
      %v1090 = vadd.f32 %v1070, %v1082
      %v1091 = vadd.f32 %v1071, %v1083
      %v1092 = vadd.f32 %v1072, %v1084
      %v1093 = vadd.f32 %v1073, %v1085
      %v1094 = vadd.f32 %v1074, %v1086
      %v1095 = vadd.f32 %v1075, %v1087
      %v1096 = vrot.slane %v1088, 2
      %v1097 = vrot.slane %v1089, 2
      %v1098 = vrot.slane %v1090, 2
      %v1099 = vrot.slane %v1091, 2
      %v1100 = vrot.slane %v1092, 2
      %v1101 = vrot.slane %v1093, 2
      %v1102 = vrot.slane %v1094, 2
      %v1103 = vrot.slane %v1095, 2
      %v1104 = vadd.s32 %v493, 2
      %vm1105 = vcmp.ge.s32.totalorder %v1104, 0
      %vm1106 = vcmp.lt.s32.totalorder %v1104, 8
      %vm1107 = vmand %vm1105, %vm1106
      %v1108 = vsel %vm1107, 1, 0
      %vm1109 = vcmp.eq.s32.totalorder %v1108, 1
      %v1110 = vsel %vm1109, %v1096, 0.0
      %v1111 = vsel %vm1109, %v1097, 0.0
      %v1112 = vsel %vm1109, %v1098, 0.0
      %v1113 = vsel %vm1109, %v1099, 0.0
      %v1114 = vsel %vm1109, %v1100, 0.0
      %v1115 = vsel %vm1109, %v1101, 0.0
      %v1116 = vsel %vm1109, %v1102, 0.0
      %v1117 = vsel %vm1109, %v1103, 0.0
      %v1118 = vadd.f32 %v996, %v1110
      %v1119 = vadd.f32 %v997, %v1111
      %v1120 = vadd.f32 %v998, %v1112
      %v1121 = vadd.f32 %v999, %v1113
      %v1122 = vadd.f32 %v1000, %v1114
      %v1123 = vadd.f32 %v1001, %v1115
      %v1124 = vadd.f32 %v1002, %v1116
      %v1125 = vadd.f32 %v1003, %v1117
      %v1126 = vld [vmem:[%s4] sm:$0x1]
      %v1127 = vlaneseq
      %v1128 = vshrl.u32 %v1127, 7
      %v1129 = vsub.s32 0, %v1128
      %v1130 = vrot.slane %v1126, %v1129
      %v1131 = vadd.f32 %v1118, %v1130
      %v1132 = vadd.f32 %v1119, %v1130
      %v1133 = vadd.f32 %v1120, %v1130
      %v1134 = vadd.f32 %v1121, %v1130
      %v1135 = vadd.f32 %v1122, %v1130
      %v1136 = vadd.f32 %v1123, %v1130
      %v1137 = vadd.f32 %v1124, %v1130
      %v1138 = vadd.f32 %v1125, %v1130
      %v1139 = vmul.f32 %v1131, 0.5
      %v1140 = vmul.f32 %v1132, 0.5
      %v1141 = vmul.f32 %v1133, 0.5
      %v1142 = vmul.f32 %v1134, 0.5
      %v1143 = vmul.f32 %v1135, 0.5
      %v1144 = vmul.f32 %v1136, 0.5
      %v1145 = vmul.f32 %v1137, 0.5
      %v1146 = vmul.f32 %v1138, 0.5
      %v1147 = vmul.f32 %v1131, 0.70710677
      %v1148 = vmul.f32 %v1132, 0.70710677
      %v1149 = vmul.f32 %v1133, 0.70710677
      %v1150 = vmul.f32 %v1134, 0.70710677
      %v1151 = vmul.f32 %v1135, 0.70710677
      %v1152 = vmul.f32 %v1136, 0.70710677
      %v1153 = vmul.f32 %v1137, 0.70710677
      %v1154 = vmul.f32 %v1138, 0.70710677
      %vm1155 = vcmp.lt.f32.partialorder %v1147, 0.0
      %vm1156 = vcmp.lt.f32.partialorder %v1148, 0.0
      %vm1157 = vcmp.lt.f32.partialorder %v1149, 0.0
      %vm1158 = vcmp.lt.f32.partialorder %v1150, 0.0
      %vm1159 = vcmp.lt.f32.partialorder %v1151, 0.0
      %vm1160 = vcmp.lt.f32.partialorder %v1152, 0.0
      %vm1161 = vcmp.lt.f32.partialorder %v1153, 0.0
      %vm1162 = vcmp.lt.f32.partialorder %v1154, 0.0
      %v1163 = vsel %vm1155, -1.0, 1.0
      %v1164 = vsel %vm1156, -1.0, 1.0
      %v1165 = vsel %vm1157, -1.0, 1.0
      %v1166 = vsel %vm1158, -1.0, 1.0
      %v1167 = vsel %vm1159, -1.0, 1.0
      %v1168 = vsel %vm1160, -1.0, 1.0
      %v1169 = vsel %vm1161, -1.0, 1.0
      %v1170 = vsel %vm1162, -1.0, 1.0
      %v1171 = vand.u32 2147483647, %v1147
      %v1172 = vand.u32 2147483647, %v1148
      %v1173 = vand.u32 2147483647, %v1149
      %v1174 = vand.u32 2147483647, %v1150
      %v1175 = vand.u32 2147483647, %v1151
      %v1176 = vand.u32 2147483647, %v1152
      %v1177 = vand.u32 2147483647, %v1153
      %v1178 = vand.u32 2147483647, %v1154
      %v1179 = vmul.f32 %v1171, 0.3275911
      %v1180 = vmul.f32 %v1172, 0.3275911
      %v1181 = vmul.f32 %v1173, 0.3275911
      %v1182 = vmul.f32 %v1174, 0.3275911
      %v1183 = vmul.f32 %v1175, 0.3275911
      %v1184 = vmul.f32 %v1176, 0.3275911
      %v1185 = vmul.f32 %v1177, 0.3275911
      %v1186 = vmul.f32 %v1178, 0.3275911
      %v1187 = vadd.f32 %v1179, 1.0
      %v1188 = vadd.f32 %v1180, 1.0
      %v1189 = vadd.f32 %v1181, 1.0
      %v1190 = vadd.f32 %v1182, 1.0
      %v1191 = vadd.f32 %v1183, 1.0
      %v1192 = vadd.f32 %v1184, 1.0
      %v1193 = vadd.f32 %v1185, 1.0
      %v1194 = vadd.f32 %v1186, 1.0
      %v1195 = vrcp.pop %v1187
      %v1196 = vrcp.pop %v1188
      %v1197 = vrcp.pop %v1189
      %v1198 = vrcp.pop %v1190
      %v1199 = vrcp.pop %v1191
      %v1200 = vrcp.pop %v1192
      %v1201 = vrcp.pop %v1193
      %v1202 = vrcp.pop %v1194
      %v1203 = vmul.f32 %v1187, %v1195
      %v1204 = vmul.f32 %v1188, %v1196
      %v1205 = vmul.f32 %v1189, %v1197
      %v1206 = vmul.f32 %v1190, %v1198
      %v1207 = vmul.f32 %v1191, %v1199
      %v1208 = vmul.f32 %v1192, %v1200
      %v1209 = vmul.f32 %v1193, %v1201
      %v1210 = vmul.f32 %v1194, %v1202
      %v1211 = vsub.f32 2.0, %v1203
      %v1212 = vsub.f32 2.0, %v1204
      %v1213 = vsub.f32 2.0, %v1205
      %v1214 = vsub.f32 2.0, %v1206
      %v1215 = vsub.f32 2.0, %v1207
      %v1216 = vsub.f32 2.0, %v1208
      %v1217 = vsub.f32 2.0, %v1209
      %v1218 = vsub.f32 2.0, %v1210
      %v1219 = vmul.f32 %v1195, %v1211
      %v1220 = vmul.f32 %v1196, %v1212
      %v1221 = vmul.f32 %v1197, %v1213
      %v1222 = vmul.f32 %v1198, %v1214
      %v1223 = vmul.f32 %v1199, %v1215
      %v1224 = vmul.f32 %v1200, %v1216
      %v1225 = vmul.f32 %v1201, %v1217
      %v1226 = vmul.f32 %v1202, %v1218
      %v1227 = vmul.f32 %v1219, 1.0614054
      %v1228 = vmul.f32 %v1220, 1.0614054
      %v1229 = vmul.f32 %v1221, 1.0614054
      %v1230 = vmul.f32 %v1222, 1.0614054
      %v1231 = vmul.f32 %v1223, 1.0614054
      %v1232 = vmul.f32 %v1224, 1.0614054
      %v1233 = vmul.f32 %v1225, 1.0614054
      %v1234 = vmul.f32 %v1226, 1.0614054
      %v1235 = vadd.f32 %v1227, -1.4531521
      %v1236 = vadd.f32 %v1228, -1.4531521
      %v1237 = vadd.f32 %v1229, -1.4531521
      %v1238 = vadd.f32 %v1230, -1.4531521
      %v1239 = vadd.f32 %v1231, -1.4531521
      %v1240 = vadd.f32 %v1232, -1.4531521
      %v1241 = vadd.f32 %v1233, -1.4531521
      %v1242 = vadd.f32 %v1234, -1.4531521
      %v1243 = vmul.f32 %v1235, %v1219
      %v1244 = vmul.f32 %v1236, %v1220
      %v1245 = vmul.f32 %v1237, %v1221
      %v1246 = vmul.f32 %v1238, %v1222
      %v1247 = vmul.f32 %v1239, %v1223
      %v1248 = vmul.f32 %v1240, %v1224
      %v1249 = vmul.f32 %v1241, %v1225
      %v1250 = vmul.f32 %v1242, %v1226
      %v1251 = vadd.f32 %v1243, 1.4214138
      %v1252 = vadd.f32 %v1244, 1.4214138
      %v1253 = vadd.f32 %v1245, 1.4214138
      %v1254 = vadd.f32 %v1246, 1.4214138
      %v1255 = vadd.f32 %v1247, 1.4214138
      %v1256 = vadd.f32 %v1248, 1.4214138
      %v1257 = vadd.f32 %v1249, 1.4214138
      %v1258 = vadd.f32 %v1250, 1.4214138
      %v1259 = vmul.f32 %v1251, %v1219
      %v1260 = vmul.f32 %v1252, %v1220
      %v1261 = vmul.f32 %v1253, %v1221
      %v1262 = vmul.f32 %v1254, %v1222
      %v1263 = vmul.f32 %v1255, %v1223
      %v1264 = vmul.f32 %v1256, %v1224
      %v1265 = vmul.f32 %v1257, %v1225
      %v1266 = vmul.f32 %v1258, %v1226
      %v1267 = vadd.f32 %v1259, -0.28449672
      %v1268 = vadd.f32 %v1260, -0.28449672
      %v1269 = vadd.f32 %v1261, -0.28449672
      %v1270 = vadd.f32 %v1262, -0.28449672
      %v1271 = vadd.f32 %v1263, -0.28449672
      %v1272 = vadd.f32 %v1264, -0.28449672
      %v1273 = vadd.f32 %v1265, -0.28449672
      %v1274 = vadd.f32 %v1266, -0.28449672
      %v1275 = vmul.f32 %v1267, %v1219
      %v1276 = vmul.f32 %v1268, %v1220
      %v1277 = vmul.f32 %v1269, %v1221
      %v1278 = vmul.f32 %v1270, %v1222
      %v1279 = vmul.f32 %v1271, %v1223
      %v1280 = vmul.f32 %v1272, %v1224
      %v1281 = vmul.f32 %v1273, %v1225
      %v1282 = vmul.f32 %v1274, %v1226
      %v1283 = vadd.f32 %v1275, 0.2548296
      %v1284 = vadd.f32 %v1276, 0.2548296
      %v1285 = vadd.f32 %v1277, 0.2548296
      %v1286 = vadd.f32 %v1278, 0.2548296
      %v1287 = vadd.f32 %v1279, 0.2548296
      %v1288 = vadd.f32 %v1280, 0.2548296
      %v1289 = vadd.f32 %v1281, 0.2548296
      %v1290 = vadd.f32 %v1282, 0.2548296
      %v1291 = vmul.f32 %v1283, %v1219
      %v1292 = vmul.f32 %v1284, %v1220
      %v1293 = vmul.f32 %v1285, %v1221
      %v1294 = vmul.f32 %v1286, %v1222
      %v1295 = vmul.f32 %v1287, %v1223
      %v1296 = vmul.f32 %v1288, %v1224
      %v1297 = vmul.f32 %v1289, %v1225
      %v1298 = vmul.f32 %v1290, %v1226
      %v1299 = vsub.f32 0.0, %v1171
      %v1300 = vsub.f32 0.0, %v1172
      %v1301 = vsub.f32 0.0, %v1173
      %v1302 = vsub.f32 0.0, %v1174
      %v1303 = vsub.f32 0.0, %v1175
      %v1304 = vsub.f32 0.0, %v1176
      %v1305 = vsub.f32 0.0, %v1177
      %v1306 = vsub.f32 0.0, %v1178
      %v1307 = vmul.f32 %v1299, %v1171
      %v1308 = vmul.f32 %v1300, %v1172
      %v1309 = vmul.f32 %v1301, %v1173
      %v1310 = vmul.f32 %v1302, %v1174
      %v1311 = vmul.f32 %v1303, %v1175
      %v1312 = vmul.f32 %v1304, %v1176
      %v1313 = vmul.f32 %v1305, %v1177
      %v1314 = vmul.f32 %v1306, %v1178
      %v1315 = vmul.f32 %v1307, 1.442695
      %v1316 = vpow.pop %v1315
      %v1317 = vmul.f32 %v1308, 1.442695
      %v1318 = vpow.pop %v1317
      %v1319 = vmul.f32 %v1309, 1.442695
      %v1320 = vpow.pop %v1319
      %v1321 = vmul.f32 %v1310, 1.442695
      %v1322 = vpow.pop %v1321
      %v1323 = vmul.f32 %v1311, 1.442695
      %v1324 = vpow.pop %v1323
      %v1325 = vmul.f32 %v1312, 1.442695
      %v1326 = vpow.pop %v1325
      %v1327 = vmul.f32 %v1313, 1.442695
      %v1328 = vpow.pop %v1327
      %v1329 = vmul.f32 %v1314, 1.442695
      %v1330 = vpow.pop %v1329
      %v1331 = vmul.f32 %v1291, %v1316
      %v1332 = vmul.f32 %v1292, %v1318
      %v1333 = vmul.f32 %v1293, %v1320
      %v1334 = vmul.f32 %v1294, %v1322
      %v1335 = vmul.f32 %v1295, %v1324
      %v1336 = vmul.f32 %v1296, %v1326
      %v1337 = vmul.f32 %v1297, %v1328
      %v1338 = vmul.f32 %v1298, %v1330
      %v1339 = vsub.f32 1.0, %v1331
      %v1340 = vsub.f32 1.0, %v1332
      %v1341 = vsub.f32 1.0, %v1333
      %v1342 = vsub.f32 1.0, %v1334
      %v1343 = vsub.f32 1.0, %v1335
      %v1344 = vsub.f32 1.0, %v1336
      %v1345 = vsub.f32 1.0, %v1337
      %v1346 = vsub.f32 1.0, %v1338
      %v1347 = vmul.f32 %v1163, %v1339
      %v1348 = vmul.f32 %v1164, %v1340
      %v1349 = vmul.f32 %v1165, %v1341
      %v1350 = vmul.f32 %v1166, %v1342
      %v1351 = vmul.f32 %v1167, %v1343
      %v1352 = vmul.f32 %v1168, %v1344
      %v1353 = vmul.f32 %v1169, %v1345
      %v1354 = vmul.f32 %v1170, %v1346
      %v1355 = vadd.f32 %v1347, 1.0
      %v1356 = vadd.f32 %v1348, 1.0
      %v1357 = vadd.f32 %v1349, 1.0
      %v1358 = vadd.f32 %v1350, 1.0
      %v1359 = vadd.f32 %v1351, 1.0
      %v1360 = vadd.f32 %v1352, 1.0
      %v1361 = vadd.f32 %v1353, 1.0
      %v1362 = vadd.f32 %v1354, 1.0
      %v1363 = vmul.f32 %v1139, %v1355
      %v1364 = vmul.f32 %v1140, %v1356
      %v1365 = vmul.f32 %v1141, %v1357
      %v1366 = vmul.f32 %v1142, %v1358
      %v1367 = vmul.f32 %v1143, %v1359
      %v1368 = vmul.f32 %v1144, %v1360
      %v1369 = vmul.f32 %v1145, %v1361
      %v1370 = vmul.f32 %v1146, %v1362
      %v1371 = vld [vmem:[%s4 + $0x1] sm:$0x1]
      %v1372 = vlaneseq
      %v1373 = vshrl.u32 %v1372, 7
      %v1374 = vsub.s32 0, %v1373
      %v1375 = vrot.slane %v1371, %v1374
      %v1376 = vmul.f32 %v1363, %v1375
      %v1377 = vmul.f32 %v1364, %v1375
      %v1378 = vmul.f32 %v1365, %v1375
      %v1379 = vmul.f32 %v1366, %v1375
      %v1380 = vmul.f32 %v1367, %v1375
      %v1381 = vmul.f32 %v1368, %v1375
      %v1382 = vmul.f32 %v1369, %v1375
      %v1383 = vmul.f32 %v1370, %v1375
      %v1384 = vld [vmem:[%s4 + $0x2] sm:$0x1]
      %v1385 = vlaneseq
      %v1386 = vshrl.u32 %v1385, 7
      %v1387 = vsub.s32 0, %v1386
      %v1388 = vrot.slane %v1384, %v1387
      %v1389 = vadd.f32 %v1376, %v1388
      %v1390 = vadd.f32 %v1377, %v1388
      %v1391 = vadd.f32 %v1378, %v1388
      %v1392 = vadd.f32 %v1379, %v1388
      %v1393 = vadd.f32 %v1380, %v1388
      %v1394 = vadd.f32 %v1381, %v1388
      %v1395 = vadd.f32 %v1382, %v1388
      %v1396 = vadd.f32 %v1383, %v1388
      %v1397 = vadd.f32 %v1389, %v446
      %v1398 = vadd.f32 %v1390, %v447
      %v1399 = vadd.f32 %v1391, %v448
      %v1400 = vadd.f32 %v1392, %v449
      %v1401 = vadd.f32 %v1393, %v450
      %v1402 = vadd.f32 %v1394, %v451
      %v1403 = vadd.f32 %v1395, %v452
      %v1404 = vadd.f32 %v1396, %v453
      %v1405 = vld [vmem:[%s5] sm:$0xff]
      %v1406 = vld [vmem:[%s5 + $0x8] sm:$0xff]
      %v1407 = vld [vmem:[%s5 + $0x10] sm:$0xff]
      %v1408 = vld [vmem:[%s5 + $0x18] sm:$0xff]
      %v1409 = vld [vmem:[%s5 + $0x20] sm:$0xff]
      %v1410 = vld [vmem:[%s5 + $0x28] sm:$0xff]
      %v1411 = vld [vmem:[%s5 + $0x30] sm:$0xff]
      %v1412 = vld [vmem:[%s5 + $0x38] sm:$0xff]
      %v1413 = vld [vmem:[%s5 + $0x40] sm:$0xff]
      %v1414 = vld [vmem:[%s5 + $0x48] sm:$0xff]
      %v1415 = vld [vmem:[%s5 + $0x50] sm:$0xff]
      %v1416 = vld [vmem:[%s5 + $0x58] sm:$0xff]
      %v1417 = vld [vmem:[%s5 + $0x60] sm:$0xff]
      %v1418 = vld [vmem:[%s5 + $0x68] sm:$0xff]
      %v1419 = vld [vmem:[%s5 + $0x70] sm:$0xff]
      %v1420 = vld [vmem:[%s5 + $0x78] sm:$0xff]
      %v1421 = vld [vmem:[%s6] sm:$0x1]
      %v1422 = vlaneseq
      %v1423 = vshrl.u32 %v1422, 7
      %v1424 = vsub.s32 0, %v1423
      %v1425 = vrot.slane %v1421, %v1424
      %1426 = vmatprep.subr.mxu0 0.0
      %1427 = vmatpush1.msra.mxu0 %v1420
      %1428 = vmatprep.subr.mxu0 0.0
      %1429 = vmatpush1.msra.mxu0 %v1419
      %1430 = vmatprep.subr.mxu0 0.0
      %1431 = vmatpush1.msra.mxu0 %v1418
      %1432 = vmatprep.subr.mxu0 0.0
      %1433 = vmatpush1.msra.mxu0 %v1417
      %1434 = vmatprep.subr.mxu0 0.0
      %1435 = vmatpush1.msra.mxu0 %v1416
      %1436 = vmatprep.subr.mxu0 0.0
      %1437 = vmatpush1.msra.mxu0 %v1415
      %1438 = vmatprep.subr.mxu0 0.0
      %1439 = vmatpush1.msra.mxu0 %v1414
      %1440 = vmatprep.subr.mxu0 0.0
      %1441 = vmatpush1.msra.mxu0 %v1413
      %1442 = vmatprep.subr.mxu0 0.0
      %1443 = vmatpush1.msra.mxu0 %v1412
      %1444 = vmatprep.subr.mxu0 0.0
      %1445 = vmatpush1.msra.mxu0 %v1411
      %1446 = vmatprep.subr.mxu0 0.0
      %1447 = vmatpush1.msra.mxu0 %v1410
      %1448 = vmatprep.subr.mxu0 0.0
      %1449 = vmatpush1.msra.mxu0 %v1409
      %1450 = vmatprep.subr.mxu0 0.0
      %1451 = vmatpush1.msra.mxu0 %v1408
      %1452 = vmatprep.subr.mxu0 0.0
      %1453 = vmatpush1.msra.mxu0 %v1407
      %1454 = vmatprep.subr.mxu0 0.0
      %1455 = vmatpush1.msra.mxu0 %v1406
      %1456 = vmatprep.subr.mxu0 0.0
      %1457 = vmatpush1.msra.mxu0 %v1405
      %1458 = vmatprep.subr.mxu0 0.0
      %1459 = vmatpush2.msra.mxu0 0.0
      %1460 = vmatprep.subr.mxu0 0.0
      %1461 = vmatpush2.msra.mxu0 0.0
      %1462 = vmatprep.subr.mxu0 0.0
      %1463 = vmatpush2.msra.mxu0 0.0
      %1464 = vmatprep.subr.mxu0 0.0
      %1465 = vmatpush2.msra.mxu0 0.0
      %1466 = vmatprep.subr.mxu0 0.0
      %1467 = vmatpush2.msra.mxu0 0.0
      %1468 = vmatprep.subr.mxu0 0.0
      %1469 = vmatpush2.msra.mxu0 0.0
      %1470 = vmatprep.subr.mxu0 0.0
      %1471 = vmatpush2.msra.mxu0 0.0
      %1472 = vmatprep.subr.mxu0 0.0
      %1473 = vmatpush2.msra.mxu0 0.0
      %1474 = vmatprep.subr.mxu0 0.0
      %1475 = vmatpush2.msra.mxu0 0.0
      %1476 = vmatprep.subr.mxu0 0.0
      %1477 = vmatpush2.msra.mxu0 0.0
      %1478 = vmatprep.subr.mxu0 0.0
      %1479 = vmatpush2.msra.mxu0 0.0
      %1480 = vmatprep.subr.mxu0 0.0
      %1481 = vmatpush2.msra.mxu0 0.0
      %1482 = vmatprep.subr.mxu0 0.0
      %1483 = vmatpush2.msra.mxu0 0.0
      %1484 = vmatprep.subr.mxu0 0.0
      %1485 = vmatpush2.msra.mxu0 0.0
      %1486 = vmatprep.subr.mxu0 0.0
      %1487 = vmatpush2.msra.mxu0 0.0
      %1488 = vmatprep.subr.mxu0 0.0
      %1489 = vmatpush2.msra.mxu0 0.0
      %1490 = vmatprep.mubr.f32.mxu0 0.0
      %1491 = vmatmul.mubr.f32.gmra.mxu0 %v1397
      %v1492 = vpop.f32.mrf.mxu0
      %v1493 = vadd.f32 %v1425, %v1492
      %v1494 = vpop.f32.mrf.mxu0
      %1495 = vmatprep.mubr.f32.mxu0 0.0
      %1496 = vmatmul.mubr.f32.gmra.mxu0 %v1398
      %v1497 = vpop.f32.mrf.mxu0
      %v1498 = vadd.f32 %v1425, %v1497
      %v1499 = vpop.f32.mrf.mxu0
      %1500 = vmatprep.mubr.f32.mxu0 0.0
      %1501 = vmatmul.mubr.f32.gmra.mxu0 %v1399
      %v1502 = vpop.f32.mrf.mxu0
      %v1503 = vadd.f32 %v1425, %v1502
      %v1504 = vpop.f32.mrf.mxu0
      %1505 = vmatprep.mubr.f32.mxu0 0.0
      %1506 = vmatmul.mubr.f32.gmra.mxu0 %v1400
      %v1507 = vpop.f32.mrf.mxu0
      %v1508 = vadd.f32 %v1425, %v1507
      %v1509 = vpop.f32.mrf.mxu0
      %1510 = vmatprep.mubr.f32.mxu0 0.0
      %1511 = vmatmul.mubr.f32.gmra.mxu0 %v1401
      %v1512 = vpop.f32.mrf.mxu0
      %v1513 = vadd.f32 %v1425, %v1512
      %v1514 = vpop.f32.mrf.mxu0
      %1515 = vmatprep.mubr.f32.mxu0 0.0
      %1516 = vmatmul.mubr.f32.gmra.mxu0 %v1402
      %v1517 = vpop.f32.mrf.mxu0
      %v1518 = vadd.f32 %v1425, %v1517
      %v1519 = vpop.f32.mrf.mxu0
      %1520 = vmatprep.mubr.f32.mxu0 0.0
      %1521 = vmatmul.mubr.f32.gmra.mxu0 %v1403
      %v1522 = vpop.f32.mrf.mxu0
      %v1523 = vadd.f32 %v1425, %v1522
      %v1524 = vpop.f32.mrf.mxu0
      %1525 = vmatprep.mubr.f32.mxu0 0.0
      %1526 = vmatmul.mubr.f32.gmra.mxu0 %v1404
      %v1527 = vpop.f32.mrf.mxu0
      %v1528 = vadd.f32 %v1425, %v1527
      %v1529 = vpop.f32.mrf.mxu0
      %1530 = vdwg.mxu0
      %v1531 = vmul.f32 %v1493, 0.5
      %v1532 = vmul.f32 %v1498, 0.5
      %v1533 = vmul.f32 %v1503, 0.5
      %v1534 = vmul.f32 %v1508, 0.5
      %v1535 = vmul.f32 %v1513, 0.5
      %v1536 = vmul.f32 %v1518, 0.5
      %v1537 = vmul.f32 %v1523, 0.5
      %v1538 = vmul.f32 %v1528, 0.5
      %v1539 = vmul.f32 %v1493, 0.70710677
      %v1540 = vmul.f32 %v1498, 0.70710677
      %v1541 = vmul.f32 %v1503, 0.70710677
      %v1542 = vmul.f32 %v1508, 0.70710677
      %v1543 = vmul.f32 %v1513, 0.70710677
      %v1544 = vmul.f32 %v1518, 0.70710677
      %v1545 = vmul.f32 %v1523, 0.70710677
      %v1546 = vmul.f32 %v1528, 0.70710677
      %vm1547 = vcmp.lt.f32.partialorder %v1539, 0.0
      %vm1548 = vcmp.lt.f32.partialorder %v1540, 0.0
      %vm1549 = vcmp.lt.f32.partialorder %v1541, 0.0
      %vm1550 = vcmp.lt.f32.partialorder %v1542, 0.0
      %vm1551 = vcmp.lt.f32.partialorder %v1543, 0.0
      %vm1552 = vcmp.lt.f32.partialorder %v1544, 0.0
      %vm1553 = vcmp.lt.f32.partialorder %v1545, 0.0
      %vm1554 = vcmp.lt.f32.partialorder %v1546, 0.0
      %v1555 = vsel %vm1547, -1.0, 1.0
      %v1556 = vsel %vm1548, -1.0, 1.0
      %v1557 = vsel %vm1549, -1.0, 1.0
      %v1558 = vsel %vm1550, -1.0, 1.0
      %v1559 = vsel %vm1551, -1.0, 1.0
      %v1560 = vsel %vm1552, -1.0, 1.0
      %v1561 = vsel %vm1553, -1.0, 1.0
      %v1562 = vsel %vm1554, -1.0, 1.0
      %v1563 = vand.u32 2147483647, %v1539
      %v1564 = vand.u32 2147483647, %v1540
      %v1565 = vand.u32 2147483647, %v1541
      %v1566 = vand.u32 2147483647, %v1542
      %v1567 = vand.u32 2147483647, %v1543
      %v1568 = vand.u32 2147483647, %v1544
      %v1569 = vand.u32 2147483647, %v1545
      %v1570 = vand.u32 2147483647, %v1546
      %v1571 = vmul.f32 %v1563, 0.3275911
      %v1572 = vmul.f32 %v1564, 0.3275911
      %v1573 = vmul.f32 %v1565, 0.3275911
      %v1574 = vmul.f32 %v1566, 0.3275911
      %v1575 = vmul.f32 %v1567, 0.3275911
      %v1576 = vmul.f32 %v1568, 0.3275911
      %v1577 = vmul.f32 %v1569, 0.3275911
      %v1578 = vmul.f32 %v1570, 0.3275911
      %v1579 = vadd.f32 %v1571, 1.0
      %v1580 = vadd.f32 %v1572, 1.0
      %v1581 = vadd.f32 %v1573, 1.0
      %v1582 = vadd.f32 %v1574, 1.0
      %v1583 = vadd.f32 %v1575, 1.0
      %v1584 = vadd.f32 %v1576, 1.0
      %v1585 = vadd.f32 %v1577, 1.0
      %v1586 = vadd.f32 %v1578, 1.0
      %v1587 = vrcp.pop %v1579
      %v1588 = vrcp.pop %v1580
      %v1589 = vrcp.pop %v1581
      %v1590 = vrcp.pop %v1582
      %v1591 = vrcp.pop %v1583
      %v1592 = vrcp.pop %v1584
      %v1593 = vrcp.pop %v1585
      %v1594 = vrcp.pop %v1586
      %v1595 = vmul.f32 %v1579, %v1587
      %v1596 = vmul.f32 %v1580, %v1588
      %v1597 = vmul.f32 %v1581, %v1589
      %v1598 = vmul.f32 %v1582, %v1590
      %v1599 = vmul.f32 %v1583, %v1591
      %v1600 = vmul.f32 %v1584, %v1592
      %v1601 = vmul.f32 %v1585, %v1593
      %v1602 = vmul.f32 %v1586, %v1594
      %v1603 = vsub.f32 2.0, %v1595
      %v1604 = vsub.f32 2.0, %v1596
      %v1605 = vsub.f32 2.0, %v1597
      %v1606 = vsub.f32 2.0, %v1598
      %v1607 = vsub.f32 2.0, %v1599
      %v1608 = vsub.f32 2.0, %v1600
      %v1609 = vsub.f32 2.0, %v1601
      %v1610 = vsub.f32 2.0, %v1602
      %v1611 = vmul.f32 %v1587, %v1603
      %v1612 = vmul.f32 %v1588, %v1604
      %v1613 = vmul.f32 %v1589, %v1605
      %v1614 = vmul.f32 %v1590, %v1606
      %v1615 = vmul.f32 %v1591, %v1607
      %v1616 = vmul.f32 %v1592, %v1608
      %v1617 = vmul.f32 %v1593, %v1609
      %v1618 = vmul.f32 %v1594, %v1610
      %v1619 = vmul.f32 %v1611, 1.0614054
      %v1620 = vmul.f32 %v1612, 1.0614054
      %v1621 = vmul.f32 %v1613, 1.0614054
      %v1622 = vmul.f32 %v1614, 1.0614054
      %v1623 = vmul.f32 %v1615, 1.0614054
      %v1624 = vmul.f32 %v1616, 1.0614054
      %v1625 = vmul.f32 %v1617, 1.0614054
      %v1626 = vmul.f32 %v1618, 1.0614054
      %v1627 = vadd.f32 %v1619, -1.4531521
      %v1628 = vadd.f32 %v1620, -1.4531521
      %v1629 = vadd.f32 %v1621, -1.4531521
      %v1630 = vadd.f32 %v1622, -1.4531521
      %v1631 = vadd.f32 %v1623, -1.4531521
      %v1632 = vadd.f32 %v1624, -1.4531521
      %v1633 = vadd.f32 %v1625, -1.4531521
      %v1634 = vadd.f32 %v1626, -1.4531521
      %v1635 = vmul.f32 %v1627, %v1611
      %v1636 = vmul.f32 %v1628, %v1612
      %v1637 = vmul.f32 %v1629, %v1613
      %v1638 = vmul.f32 %v1630, %v1614
      %v1639 = vmul.f32 %v1631, %v1615
      %v1640 = vmul.f32 %v1632, %v1616
      %v1641 = vmul.f32 %v1633, %v1617
      %v1642 = vmul.f32 %v1634, %v1618
      %v1643 = vadd.f32 %v1635, 1.4214138
      %v1644 = vadd.f32 %v1636, 1.4214138
      %v1645 = vadd.f32 %v1637, 1.4214138
      %v1646 = vadd.f32 %v1638, 1.4214138
      %v1647 = vadd.f32 %v1639, 1.4214138
      %v1648 = vadd.f32 %v1640, 1.4214138
      %v1649 = vadd.f32 %v1641, 1.4214138
      %v1650 = vadd.f32 %v1642, 1.4214138
      %v1651 = vmul.f32 %v1643, %v1611
      %v1652 = vmul.f32 %v1644, %v1612
      %v1653 = vmul.f32 %v1645, %v1613
      %v1654 = vmul.f32 %v1646, %v1614
      %v1655 = vmul.f32 %v1647, %v1615
      %v1656 = vmul.f32 %v1648, %v1616
      %v1657 = vmul.f32 %v1649, %v1617
      %v1658 = vmul.f32 %v1650, %v1618
      %v1659 = vadd.f32 %v1651, -0.28449672
      %v1660 = vadd.f32 %v1652, -0.28449672
      %v1661 = vadd.f32 %v1653, -0.28449672
      %v1662 = vadd.f32 %v1654, -0.28449672
      %v1663 = vadd.f32 %v1655, -0.28449672
      %v1664 = vadd.f32 %v1656, -0.28449672
      %v1665 = vadd.f32 %v1657, -0.28449672
      %v1666 = vadd.f32 %v1658, -0.28449672
      %v1667 = vmul.f32 %v1659, %v1611
      %v1668 = vmul.f32 %v1660, %v1612
      %v1669 = vmul.f32 %v1661, %v1613
      %v1670 = vmul.f32 %v1662, %v1614
      %v1671 = vmul.f32 %v1663, %v1615
      %v1672 = vmul.f32 %v1664, %v1616
      %v1673 = vmul.f32 %v1665, %v1617
      %v1674 = vmul.f32 %v1666, %v1618
      %v1675 = vadd.f32 %v1667, 0.2548296
      %v1676 = vadd.f32 %v1668, 0.2548296
      %v1677 = vadd.f32 %v1669, 0.2548296
      %v1678 = vadd.f32 %v1670, 0.2548296
      %v1679 = vadd.f32 %v1671, 0.2548296
      %v1680 = vadd.f32 %v1672, 0.2548296
      %v1681 = vadd.f32 %v1673, 0.2548296
      %v1682 = vadd.f32 %v1674, 0.2548296
      %v1683 = vmul.f32 %v1675, %v1611
      %v1684 = vmul.f32 %v1676, %v1612
      %v1685 = vmul.f32 %v1677, %v1613
      %v1686 = vmul.f32 %v1678, %v1614
      %v1687 = vmul.f32 %v1679, %v1615
      %v1688 = vmul.f32 %v1680, %v1616
      %v1689 = vmul.f32 %v1681, %v1617
      %v1690 = vmul.f32 %v1682, %v1618
      %v1691 = vsub.f32 0.0, %v1563
      %v1692 = vsub.f32 0.0, %v1564
      %v1693 = vsub.f32 0.0, %v1565
      %v1694 = vsub.f32 0.0, %v1566
      %v1695 = vsub.f32 0.0, %v1567
      %v1696 = vsub.f32 0.0, %v1568
      %v1697 = vsub.f32 0.0, %v1569
      %v1698 = vsub.f32 0.0, %v1570
      %v1699 = vmul.f32 %v1691, %v1563
      %v1700 = vmul.f32 %v1692, %v1564
      %v1701 = vmul.f32 %v1693, %v1565
      %v1702 = vmul.f32 %v1694, %v1566
      %v1703 = vmul.f32 %v1695, %v1567
      %v1704 = vmul.f32 %v1696, %v1568
      %v1705 = vmul.f32 %v1697, %v1569
      %v1706 = vmul.f32 %v1698, %v1570
      %v1707 = vmul.f32 %v1699, 1.442695
      %v1708 = vpow.pop %v1707
      %v1709 = vmul.f32 %v1700, 1.442695
      %v1710 = vpow.pop %v1709
      %v1711 = vmul.f32 %v1701, 1.442695
      %v1712 = vpow.pop %v1711
      %v1713 = vmul.f32 %v1702, 1.442695
      %v1714 = vpow.pop %v1713
      %v1715 = vmul.f32 %v1703, 1.442695
      %v1716 = vpow.pop %v1715
      %v1717 = vmul.f32 %v1704, 1.442695
      %v1718 = vpow.pop %v1717
      %v1719 = vmul.f32 %v1705, 1.442695
      %v1720 = vpow.pop %v1719
      %v1721 = vmul.f32 %v1706, 1.442695
      %v1722 = vpow.pop %v1721
      %v1723 = vmul.f32 %v1683, %v1708
      %v1724 = vmul.f32 %v1684, %v1710
      %v1725 = vmul.f32 %v1685, %v1712
      %v1726 = vmul.f32 %v1686, %v1714
      %v1727 = vmul.f32 %v1687, %v1716
      %v1728 = vmul.f32 %v1688, %v1718
      %v1729 = vmul.f32 %v1689, %v1720
      %v1730 = vmul.f32 %v1690, %v1722
      %v1731 = vsub.f32 1.0, %v1723
      %v1732 = vsub.f32 1.0, %v1724
      %v1733 = vsub.f32 1.0, %v1725
      %v1734 = vsub.f32 1.0, %v1726
      %v1735 = vsub.f32 1.0, %v1727
      %v1736 = vsub.f32 1.0, %v1728
      %v1737 = vsub.f32 1.0, %v1729
      %v1738 = vsub.f32 1.0, %v1730
      %v1739 = vmul.f32 %v1555, %v1731
      %v1740 = vmul.f32 %v1556, %v1732
      %v1741 = vmul.f32 %v1557, %v1733
      %v1742 = vmul.f32 %v1558, %v1734
      %v1743 = vmul.f32 %v1559, %v1735
      %v1744 = vmul.f32 %v1560, %v1736
      %v1745 = vmul.f32 %v1561, %v1737
      %v1746 = vmul.f32 %v1562, %v1738
      %v1747 = vadd.f32 %v1739, 1.0
      %v1748 = vadd.f32 %v1740, 1.0
      %v1749 = vadd.f32 %v1741, 1.0
      %v1750 = vadd.f32 %v1742, 1.0
      %v1751 = vadd.f32 %v1743, 1.0
      %v1752 = vadd.f32 %v1744, 1.0
      %v1753 = vadd.f32 %v1745, 1.0
      %v1754 = vadd.f32 %v1746, 1.0
      %v1755 = vmul.f32 %v1531, %v1747
      %v1756 = vmul.f32 %v1532, %v1748
      %v1757 = vmul.f32 %v1533, %v1749
      %v1758 = vmul.f32 %v1534, %v1750
      %v1759 = vmul.f32 %v1535, %v1751
      %v1760 = vmul.f32 %v1536, %v1752
      %v1761 = vmul.f32 %v1537, %v1753
      %v1762 = vmul.f32 %v1538, %v1754
      %v1763 = vld [vmem:[%s6 + $0x1] sm:$0x1]
      %v1764 = vlaneseq
      %v1765 = vshrl.u32 %v1764, 7
      %v1766 = vsub.s32 0, %v1765
      %v1767 = vrot.slane %v1763, %v1766
      %v1768 = vmul.f32 %v1755, %v1767
      %v1769 = vmul.f32 %v1756, %v1767
      %v1770 = vmul.f32 %v1757, %v1767
      %v1771 = vmul.f32 %v1758, %v1767
      %v1772 = vmul.f32 %v1759, %v1767
      %v1773 = vmul.f32 %v1760, %v1767
      %v1774 = vmul.f32 %v1761, %v1767
      %v1775 = vmul.f32 %v1762, %v1767
      %v1776 = vld [vmem:[%s6 + $0x2] sm:$0x1]
      %v1777 = vlaneseq
      %v1778 = vshrl.u32 %v1777, 7
      %v1779 = vsub.s32 0, %v1778
      %v1780 = vrot.slane %v1776, %v1779
      %v1781 = vadd.f32 %v1768, %v1780
      %v1782 = vadd.f32 %v1769, %v1780
      %v1783 = vadd.f32 %v1770, %v1780
      %v1784 = vadd.f32 %v1771, %v1780
      %v1785 = vadd.f32 %v1772, %v1780
      %v1786 = vadd.f32 %v1773, %v1780
      %v1787 = vadd.f32 %v1774, %v1780
      %v1788 = vadd.f32 %v1775, %v1780
      %1789 = vst [vmem:[%s444] sm:$0xff] %v1781
      %1790 = vst [vmem:[%s444 + $0x8] sm:$0xff] %v1782
      %1791 = vst [vmem:[%s444 + $0x10] sm:$0xff] %v1783
      %1792 = vst [vmem:[%s444 + $0x18] sm:$0xff] %v1784
      %1793 = vst [vmem:[%s444 + $0x20] sm:$0xff] %v1785
      %1794 = vst [vmem:[%s444 + $0x28] sm:$0xff] %v1786
      %1795 = vst [vmem:[%s444 + $0x30] sm:$0xff] %v1787
      %1796 = vst [vmem:[%s444 + $0x38] sm:$0xff] %v1788
      %s1797 = smul.u32 8, %s23
      %p1798 = scmp.lt.s32.totalorder %s22, 1
      %s1799 = scalar_select %p1798, %s22, 1
      %p1800 = scmp.lt.s32.totalorder %s1797, 7
      %s1801 = scalar_select %p1800, %s1797, 7
      %s1802 = smul.addr %s1799, 8
      %s1803 = sadd.s32 %s1801, %s1802
      %s1804 = smul.addr %s1803, 8
      %s1805 = scalar_lea.vmem %s7, %s1804
      // Predicated region
      $region65: #{conv_mixer_forward.5} parent=47 // pred_check
        %p1806 = pneg %p234
      $region66: #{conv_mixer_forward.5} parent=47 // pred_check_branch
        %1808 = sbr.rel (%p1806) target = $region68
      $region67: #{conv_mixer_forward.5} parent=47 // pred_region
        %s1809 = smul.u32 8, %s23
      $region68: #{conv_mixer_forward.5} parent=47 // pred_fallthru
        _
    $region48: #{conv_mixer_forward.5} parent=5 // pred_fallthru
      _
    %p1810 = scmp.le.s32.totalorder 2, %s13
    // Predicated region
    $region69: #{conv_mixer_forward.5} parent=5 // pred_check
      %p1811 = pneg %p1810
    $region70: #{conv_mixer_forward.5} parent=5 // pred_check_branch
      %1813 = sbr.rel (%p1811) target = $region72
    $region71: #{conv_mixer_forward.5} parent=5 // pred_region
      %s1814 = ssub.s32 %s13, 2
      // Predicated region
      $region73: #{conv_mixer_forward.5} parent=71 // pred_check
        %p1815 = pneg %p240
      $region74: #{conv_mixer_forward.5} parent=71 // pred_check_branch
        %1817 = sbr.rel (%p1815) target = $region76
      $region75: #{conv_mixer_forward.5} parent=71 // pred_region
        %s1818 = smul.u32 8, %s25
        %p1819 = scmp.lt.s32.totalorder %s24, 1
        %s1820 = scalar_select %p1819, %s24, 1
        %p1821 = scmp.lt.s32.totalorder %s1818, 7
        %s1822 = scalar_select %p1821, %s1818, 7
        %s1823 = smul.addr %s1820, 8
        %s1824 = sadd.s32 %s1822, %s1823
        %s1825 = smul.addr %s1824, 8
        %s1826 = scalar_lea.vmem %s7, %s1825
      $region76: #{conv_mixer_forward.5} parent=71 // pred_fallthru
        _
    $region72: #{conv_mixer_forward.5} parent=5 // pred_fallthru
      _
  $region6: #{conv_mixer_forward.5} parent=0 // loop_footer
    %s17 = sadd.s32 1, %s13
  $region7: #{conv_mixer_forward.5} parent=0 // loop_footer_branch
    %12 = sbr.rel target = $region3
  $region8: #{conv_mixer_forward.5} parent=0 // loop_exit
    _

</llo_original>
